<compile_context>
chip_gen: v5e
topology: v5e:2x2
jax: 0.10.0
libtpu: 0.0.40
codegen_flags: <defaults>
</compile_context>

<pallas_src>
import functools

import numpy as np

import jax
import jax.numpy as jnp
from jax import lax
from jax.experimental import pallas as pl
from jax.experimental.pallas import tpu as pltpu


# ----------------------------------------------------------------------------
# Pallas kernels
# ----------------------------------------------------------------------------
def _matmul_bias_relu_kernel(x_ref, w_ref, b_ref, o_ref):
    # x: (tm, K), w: (K, N), b: (1, N) -> relu(x @ w + b)
    acc = jnp.dot(x_ref[...], w_ref[...], preferred_element_type=jnp.float32)
    o_ref[...] = jnp.maximum(acc + b_ref[...], 0.0).astype(o_ref.dtype)


def _gru_fused_kernel(feat_ref, rew_ref, wihf_ref, wihr_ref, whh_ref,
                      bih_ref, bhh_ref, h_ref, *, T, B, H):
    """Single-call GRU: batched input projection + unrolled recurrence.

    feat_ref : (T*B, F)   conv features (NHWC flatten order, weights pre-permuted)
    rew_ref  : (T*B, R)   rewards
    wihf_ref : (F, 3H)    input-to-hidden weights for the feature part
    wihr_ref : (R, 3H)    input-to-hidden weights for the reward part
    whh_ref  : (H, 3H)    hidden-to-hidden weights   (gate order r|z|n)
    bih/bhh  : (1, 3H)
    h_ref    : (B, H)     final hidden state (written once)
    """
    # --- hoisted input-to-hidden projection for ALL timesteps (one MXU matmul) ---
    gx = jnp.dot(feat_ref[...], wihf_ref[...], preferred_element_type=jnp.float32)
    if rew_ref.shape[1] == 1:
        gx = gx + rew_ref[...] * wihr_ref[...]           # rank-1 reward term (VPU)
    else:
        gx = gx + jnp.dot(rew_ref[...], wihr_ref[...],
                          preferred_element_type=jnp.float32)
    gx = gx + bih_ref[...]                               # (T*B, 3H)

    whh = whh_ref[...]
    bhh = bhh_ref[...]

    # --- serial recurrence: only the tiny (B,H)@(H,3H) matmul + gates remain ---
    h = jnp.zeros((B, H), dtype=jnp.float32)
    for t in range(T):                                   # static, fully unrolled
        gx_t = gx[t * B:(t + 1) * B, :]                  # static sublane slice
        gh = jnp.dot(h, whh, preferred_element_type=jnp.float32) + bhh
        r = jax.nn.sigmoid(gx_t[:, 0:H] + gh[:, 0:H])
        z = jax.nn.sigmoid(gx_t[:, H:2 * H] + gh[:, H:2 * H])
        n = jnp.tanh(gx_t[:, 2 * H:3 * H] + r * gh[:, 2 * H:3 * H])
        h = (1.0 - z) * n + z * h

    h_ref[...] = h.astype(h_ref.dtype)                   # written once, no scratch


# ----------------------------------------------------------------------------
# Wrappers
# ----------------------------------------------------------------------------
def _largest_tile(M, cap):
    """Largest multiple-of-8 divisor of M that is <= cap (else M itself)."""
    best = None
    for t in range(8, min(M, cap) + 1, 8):
        if M % t == 0:
            best = t
    return best if best is not None else M


def _matmul_bias_relu(x, w, b, max_tile=2048):
    """relu(x @ w + b) with the M dim tiled on a 'parallel' grid axis."""
    M, K = x.shape
    Nc = w.shape[1]
    tm = _largest_tile(M, max_tile)
    grid = (M // tm,)
    cost = pl.CostEstimate(
        flops=2 * M * K * Nc, transcendentals=0,
        bytes_accessed=4 * (M * K + K * Nc + M * Nc + Nc))
    return pl.pallas_call(
        _matmul_bias_relu_kernel,
        out_shape=jax.ShapeDtypeStruct((M, Nc), jnp.float32),
        grid=grid,
        in_specs=[
            pl.BlockSpec((tm, K), lambda i: (i, 0)),
            pl.BlockSpec((K, Nc), lambda i: (0, 0)),
            pl.BlockSpec((1, Nc), lambda i: (0, 0)),
        ],
        out_specs=pl.BlockSpec((tm, Nc), lambda i: (i, 0)),
        compiler_params=pltpu.CompilerParams(dimension_semantics=("parallel",)),
        cost_estimate=cost,
    )(x, w, b.reshape(1, Nc))


def _im2col(x_nhwc, k, stride):
    """im2col glue (XLA): patch column order is (di, dj, c)."""
    N, H, W, C = x_nhwc.shape
    OH = (H - k) // stride + 1
    OW = (W - k) // stride + 1
    cols = []
    for di in range(k):
        for dj in range(k):
            cols.append(x_nhwc[:, di:di + (OH - 1) * stride + 1:stride,
                               dj:dj + (OW - 1) * stride + 1:stride, :])
    pat = jnp.concatenate(cols, axis=-1).reshape(N * OH * OW, k * k * C)
    return pat, OH, OW


def _gru_pallas(feat, rew, wih_feat, wih_r, whh, bih, bhh, T, B, H):
    F = feat.shape[1]
    R = rew.shape[1]
    kernel = functools.partial(_gru_fused_kernel, T=T, B=B, H=H)
    flops = 2 * T * B * F * 3 * H + 2 * T * B * H * 3 * H
    bytes_acc = 4 * (feat.size + rew.size + wih_feat.size + wih_r.size
                     + whh.size + bih.size + bhh.size + B * H)
    return pl.pallas_call(
        kernel,
        out_shape=jax.ShapeDtypeStruct((B, H), jnp.float32),
        in_specs=[
            pl.BlockSpec((T * B, F), lambda: (0, 0)),
            pl.BlockSpec((T * B, R), lambda: (0, 0)),
            pl.BlockSpec((F, 3 * H), lambda: (0, 0)),
            pl.BlockSpec((R, 3 * H), lambda: (0, 0)),
            pl.BlockSpec((H, 3 * H), lambda: (0, 0)),
            pl.BlockSpec((1, 3 * H), lambda: (0, 0)),
            pl.BlockSpec((1, 3 * H), lambda: (0, 0)),
        ],
        out_specs=pl.BlockSpec((B, H), lambda: (0, 0)),
        cost_estimate=pl.CostEstimate(flops=flops, transcendentals=3 * T * B * H,
                                      bytes_accessed=bytes_acc),
    )(feat, rew, wih_feat, wih_r, whh, bih, bhh)


def prepare_params(params, in_shape, hidden_size):
    """One-time parameter prep: conv weights to matmul layout, GRU input weights
    row-permuted so the GRU consumes the NHWC flatten order directly (removes the
    per-forward NHWC->NCHW transpose)."""
    C, Hin, Win = in_shape
    cout1 = params["conv1_w"].shape[0]
    cout2 = params["conv2_w"].shape[0]
    OH1, OW1 = Hin - 2, Win - 2
    OH2, OW2 = (OH1 - 3) // 2 + 1, (OW1 - 3) // 2 + 1
    feat_hw = OH2 * OW2
    feat_size = feat_hw * cout2

    # torch (Cout, Cin, kH, kW) -> matmul layout (kH*kW*Cin, Cout)
    w1 = jnp.transpose(params["conv1_w"], (2, 3, 1, 0)).reshape(-1, cout1)
    w2 = jnp.transpose(params["conv2_w"], (2, 3, 1, 0)).reshape(-1, cout2)

    # NHWC flat index j = s*Cout + c   <-  NCHW (torch .view) index c*feat_hw + s
    s = np.arange(feat_hw)
    c = np.arange(cout2)
    perm = (c[None, :] * feat_hw + s[:, None]).reshape(-1)

    wih = params["gru_wih"]                       # (feat_size + R, 3H), gates r|z|n
    return {
        "w1": w1, "b1": params["conv1_b"],
        "w2": w2, "b2": params["conv2_b"],
        "wih_feat": wih[:feat_size][perm],        # (feat_size, 3H), NHWC row order
        "wih_r": wih[feat_size:],                 # (num_rewards, 3H)
        "whh": params["gru_whh"],                 # (H, 3H)
        "bih": params["gru_bih"].reshape(1, -1),
        "bhh": params["gru_bhh"].reshape(1, -1),
    }


def rollout_encoder_forward(state, reward, prep, in_shape, hidden_size):
    """Pallas implementation of RolloutEncoder.forward.

    state : (T, B, C, H, W), reward : (T, B, num_rewards) -> hidden (B, hidden_size)
    """
    T, B = state.shape[0], state.shape[1]
    C, Hin, Win = in_shape
    N = T * B
    cout1 = prep["w1"].shape[1]
    cout2 = prep["w2"].shape[1]

    x = jnp.transpose(state.reshape(N, C, Hin, Win), (0, 2, 3, 1))  # NHWC

    pat1, OH1, OW1 = _im2col(x, k=3, stride=1)
    f1 = _matmul_bias_relu(pat1, prep["w1"], prep["b1"])            # (N*OH1*OW1, 16)
    f1 = f1.reshape(N, OH1, OW1, cout1)

    pat2, OH2, OW2 = _im2col(f1, k=3, stride=2)
    f2 = _matmul_bias_relu(pat2, prep["w2"], prep["b2"])            # (N*OH2*OW2, 16)

    # NHWC flatten falls out of the matmul row/col order for free; gru_wih rows
    # were permuted to this order in prepare_params.
    feat = f2.reshape(N, OH2 * OW2 * cout2)                         # (T*B, feat)
    rew = reward.reshape(N, -1)                                     # (T*B, R)

    return _gru_pallas(feat, rew, prep["wih_feat"], prep["wih_r"], prep["whh"],
                       prep["bih"], prep["bhh"], T, B, hidden_size)


# ----------------------------------------------------------------------------
# Pure-JAX reference (mirrors the PyTorch module) for verification
# ----------------------------------------------------------------------------
def rollout_encoder_reference(state, reward, params, in_shape, hidden_size):
    T, B = state.shape[0], state.shape[1]
    C, Hin, Win = in_shape
    x = state.reshape(T * B, C, Hin, Win)

    def conv(x, w, b, stride):
        y = lax.conv_general_dilated(
            x, w, window_strides=(stride, stride), padding="VALID",
            dimension_numbers=("NCHW", "OIHW", "NCHW"))
        return jnp.maximum(y + b.reshape(1, -1, 1, 1), 0.0)

    f = conv(x, params["conv1_w"], params["conv1_b"], 1)
    f = conv(f, params["conv2_w"], params["conv2_b"], 2)
    f = f.reshape(T, B, -1)
    rnn_in = jnp.concatenate([f, reward], axis=2)

    H = hidden_size
    wih, whh = params["gru_wih"], params["gru_whh"]
    bih, bhh = params["gru_bih"], params["gru_bhh"]

    def step(h, x_t):
        gx = x_t @ wih + bih
        gh = h @ whh + bhh
        r = jax.nn.sigmoid(gx[:, :H] + gh[:, :H])
        z = jax.nn.sigmoid(gx[:, H:2 * H] + gh[:, H:2 * H])
        n = jnp.tanh(gx[:, 2 * H:] + r * gh[:, 2 * H:])
        h_new = (1.0 - z) * n + z * h
        return h_new, None

    h0 = jnp.zeros((B, H), jnp.float32)
    h_final, _ = lax.scan(step, h0, rnn_in)
    return h_final


# ----------------------------------------------------------------------------
# Main
# ----------------------------------------------------------------------------
if __name__ == "__main__":
    T, B = 8, 2
    in_shape = (4, 16, 16)          # (C, H, W)
    num_rewards = 1
    hidden_size = 32

    C, Hin, Win = in_shape
    # feature map sizes: 16x16 -> conv k3 s1 -> 14x14 -> conv k3 s2 -> 6x6
    feat_size = 16 * 6 * 6
    D = feat_size + num_rewards     # GRU input size

    key = jax.random.PRNGKey(0)
    ks = jax.random.split(key, 10)
    scale = 0.05
    params = {
        "conv1_w": scale * jax.random.normal(ks[0], (16, C, 3, 3), jnp.float32),
        "conv1_b": scale * jax.random.normal(ks[1], (16,), jnp.float32),
        "conv2_w": scale * jax.random.normal(ks[2], (16, 16, 3, 3), jnp.float32),
        "conv2_b": scale * jax.random.normal(ks[3], (16,), jnp.float32),
        # stored as (input, 3*hidden) == torch weight_ih_l0.T, gate order r|z|n
        "gru_wih": scale * jax.random.normal(ks[4], (D, 3 * hidden_size), jnp.float32),
        "gru_whh": scale * jax.random.normal(ks[5], (hidden_size, 3 * hidden_size), jnp.float32),
        "gru_bih": scale * jax.random.normal(ks[6], (3 * hidden_size,), jnp.float32),
        "gru_bhh": scale * jax.random.normal(ks[7], (3 * hidden_size,), jnp.float32),
    }

    state = jax.random.normal(ks[8], (T, B, C, Hin, Win), jnp.float32)
    reward = jax.random.normal(ks[9], (T, B, num_rewards), jnp.float32)

    # One-time weight prep (layout conversion + GRU input-row permutation).
    prep = prepare_params(params, in_shape, hidden_size)
    prep = jax.tree_util.tree_map(jax.block_until_ready, prep)

    fwd = jax.jit(functools.partial(rollout_encoder_forward,
                                    in_shape=in_shape, hidden_size=hidden_size))
    hidden = fwd(state, reward, prep)
    hidden = jax.block_until_ready(hidden)
    assert hidden.shape == (B, hidden_size)

    ref = rollout_encoder_reference(state, reward, params, in_shape, hidden_size)
    ref = jax.block_until_ready(ref)
    assert jnp.allclose(hidden, ref, atol=1e-3, rtol=1e-3), "mismatch vs reference"

    print("KERNEL_OK")
</pallas_src>

<mosaic_0001>
module attributes {stable_mosaic.version = 11 : i64} {
  func.func @_matmul_bias_relu_kernel(%arg0: i32, %arg1: memref<1568x36xf32, #tpu.memory_space<vmem>>, %arg2: memref<36x16xf32, #tpu.memory_space<vmem>>, %arg3: memref<1x16xf32, #tpu.memory_space<vmem>>, %arg4: memref<1568x16xf32, #tpu.memory_space<vmem>>) attributes {dimension_semantics = [#tpu.dimension_semantics<parallel>], iteration_bounds = array<i64: 2>, scalar_prefetch = 0 : i64, scratch_operands = 0 : i64, tpu.core_type = #tpu.core_type<tc>, window_params = [{transform_indices = @transform_0, window_bounds = array<i64: 1568, 36>}, {pipeline_mode = #tpu.pipeline_mode<synchronous>, transform_indices = @transform_1, window_bounds = array<i64: 36, 16>}, {pipeline_mode = #tpu.pipeline_mode<synchronous>, transform_indices = @transform_2, window_bounds = array<i64: 1, 16>}, {transform_indices = @transform_3, window_bounds = array<i64: 1568, 16>}]} {
    %c0 = arith.constant 0 : index
    %c0_0 = arith.constant 0 : index
    %0 = vector.load %arg1[%c0, %c0_0] : memref<1568x36xf32, #tpu.memory_space<vmem>>, vector<1568x36xf32>
    %c0_1 = arith.constant 0 : index
    %c0_2 = arith.constant 0 : index
    %1 = vector.load %arg2[%c0_1, %c0_2] : memref<36x16xf32, #tpu.memory_space<vmem>>, vector<36x16xf32>
    %cst = arith.constant dense<0.000000e+00> : vector<1568x16xf32>
    %2 = tpu.matmul %0, %1, %cst {dimension_numbers = #tpu.dot_dimension_numbers<[1], [0], [0], [1], [0, 0, 1, 1], [], []>} : vector<1568x36xf32>, vector<36x16xf32>, vector<1568x16xf32> -> vector<1568x16xf32>
    %c0_3 = arith.constant 0 : index
    %c0_4 = arith.constant 0 : index
    %3 = vector.load %arg3[%c0_3, %c0_4] : memref<1x16xf32, #tpu.memory_space<vmem>>, vector<1x16xf32>
    %4 = vector.broadcast %3 : vector<1x16xf32> to vector<1568x16xf32>
    %5 = arith.addf %2, %4 : vector<1568x16xf32>
    %cst_5 = arith.constant 0.000000e+00 : f32
    %6 = vector.broadcast %cst_5 : f32 to vector<1568x16xf32>
    %7 = arith.maximumf %5, %6 : vector<1568x16xf32>
    %c0_6 = arith.constant 0 : index
    %c0_7 = arith.constant 0 : index
    %8 = vector.load %arg4[%c0_6, %c0_7] : memref<1568x16xf32, #tpu.memory_space<vmem>>, vector<1568x16xf32>
    tpu.vector_store %arg4[%c0_6, %c0_7], %7 {strides = array<i32>} : memref<1568x16xf32, #tpu.memory_space<vmem>>, vector<1568x16xf32>,
    return
  }
  func.func @transform_0(%arg0: i32) -> (i32, i32) {
    %c0_i32 = arith.constant 0 : i32
    %c0_i32_0 = arith.constant 0 : i32
    return %arg0, %c0_i32 : i32, i32
  }
  func.func @transform_1(%arg0: i32) -> (i32, i32) {
    %c0_i32 = arith.constant 0 : i32
    %c0_i32_0 = arith.constant 0 : i32
    %c0_i32_1 = arith.constant 0 : i32
    return %c0_i32, %c0_i32_0 : i32, i32
  }
  func.func @transform_2(%arg0: i32) -> (i32, i32) {
    %c0_i32 = arith.constant 0 : i32
    %c0_i32_0 = arith.constant 0 : i32
    %c0_i32_1 = arith.constant 0 : i32
    return %c0_i32, %c0_i32_0 : i32, i32
  }
  func.func @transform_3(%arg0: i32) -> (i32, i32) {
    %c0_i32 = arith.constant 0 : i32
    %c0_i32_0 = arith.constant 0 : i32
    return %arg0, %c0_i32 : i32, i32
  }
}

module attributes {stable_mosaic.version = 11 : i64} {
  func.func @_matmul_bias_relu_kernel(%arg0: i32, %arg1: memref<576x144xf32, #tpu.memory_space<vmem>>, %arg2: memref<144x16xf32, #tpu.memory_space<vmem>>, %arg3: memref<1x16xf32, #tpu.memory_space<vmem>>, %arg4: memref<576x16xf32, #tpu.memory_space<vmem>>) attributes {dimension_semantics = [#tpu.dimension_semantics<parallel>], iteration_bounds = array<i64: 1>, scalar_prefetch = 0 : i64, scratch_operands = 0 : i64, tpu.core_type = #tpu.core_type<tc>, window_params = [{transform_indices = @transform_0, window_bounds = array<i64: 576, 144>}, {pipeline_mode = #tpu.pipeline_mode<synchronous>, transform_indices = @transform_1, window_bounds = array<i64: 144, 16>}, {pipeline_mode = #tpu.pipeline_mode<synchronous>, transform_indices = @transform_2, window_bounds = array<i64: 1, 16>}, {transform_indices = @transform_3, window_bounds = array<i64: 576, 16>}]} {
    %c0 = arith.constant 0 : index
    %c0_0 = arith.constant 0 : index
    %0 = vector.load %arg1[%c0, %c0_0] : memref<576x144xf32, #tpu.memory_space<vmem>>, vector<576x144xf32>
    %c0_1 = arith.constant 0 : index
    %c0_2 = arith.constant 0 : index
    %1 = vector.load %arg2[%c0_1, %c0_2] : memref<144x16xf32, #tpu.memory_space<vmem>>, vector<144x16xf32>
    %cst = arith.constant dense<0.000000e+00> : vector<576x16xf32>
    %2 = tpu.matmul %0, %1, %cst {dimension_numbers = #tpu.dot_dimension_numbers<[1], [0], [0], [1], [0, 0, 1, 1], [], []>} : vector<576x144xf32>, vector<144x16xf32>, vector<576x16xf32> -> vector<576x16xf32>
    %c0_3 = arith.constant 0 : index
    %c0_4 = arith.constant 0 : index
    %3 = vector.load %arg3[%c0_3, %c0_4] : memref<1x16xf32, #tpu.memory_space<vmem>>, vector<1x16xf32>
    %4 = vector.broadcast %3 : vector<1x16xf32> to vector<576x16xf32>
    %5 = arith.addf %2, %4 : vector<576x16xf32>
    %cst_5 = arith.constant 0.000000e+00 : f32
    %6 = vector.broadcast %cst_5 : f32 to vector<576x16xf32>
    %7 = arith.maximumf %5, %6 : vector<576x16xf32>
    %c0_6 = arith.constant 0 : index
    %c0_7 = arith.constant 0 : index
    %8 = vector.load %arg4[%c0_6, %c0_7] : memref<576x16xf32, #tpu.memory_space<vmem>>, vector<576x16xf32>
    tpu.vector_store %arg4[%c0_6, %c0_7], %7 {strides = array<i32>} : memref<576x16xf32, #tpu.memory_space<vmem>>, vector<576x16xf32>,
    return
  }
  func.func @transform_0(%arg0: i32) -> (i32, i32) {
    %c0_i32 = arith.constant 0 : i32
    %c0_i32_0 = arith.constant 0 : i32
    return %arg0, %c0_i32 : i32, i32
  }
  func.func @transform_1(%arg0: i32) -> (i32, i32) {
    %c0_i32 = arith.constant 0 : i32
    %c0_i32_0 = arith.constant 0 : i32
    %c0_i32_1 = arith.constant 0 : i32
    return %c0_i32, %c0_i32_0 : i32, i32
  }
  func.func @transform_2(%arg0: i32) -> (i32, i32) {
    %c0_i32 = arith.constant 0 : i32
    %c0_i32_0 = arith.constant 0 : i32
    %c0_i32_1 = arith.constant 0 : i32
    return %c0_i32, %c0_i32_0 : i32, i32
  }
  func.func @transform_3(%arg0: i32) -> (i32, i32) {
    %c0_i32 = arith.constant 0 : i32
    %c0_i32_0 = arith.constant 0 : i32
    return %arg0, %c0_i32 : i32, i32
  }
}

module attributes {stable_mosaic.version = 11 : i64} {
  func.func @_gru_fused_kernel(%arg0: memref<16x576xf32, #tpu.memory_space<vmem>>, %arg1: memref<16x1xf32, #tpu.memory_space<vmem>>, %arg2: memref<576x96xf32, #tpu.memory_space<vmem>>, %arg3: memref<1x96xf32, #tpu.memory_space<vmem>>, %arg4: memref<32x96xf32, #tpu.memory_space<vmem>>, %arg5: memref<1x96xf32, #tpu.memory_space<vmem>>, %arg6: memref<1x96xf32, #tpu.memory_space<vmem>>, %arg7: memref<2x32xf32, #tpu.memory_space<vmem>>) attributes {dimension_semantics = [], scalar_prefetch = 0 : i64, scratch_operands = 0 : i64, tpu.core_type = #tpu.core_type<tc>} {
    %c0 = arith.constant 0 : index
    %c0_0 = arith.constant 0 : index
    %0 = vector.load %arg0[%c0, %c0_0] : memref<16x576xf32, #tpu.memory_space<vmem>>, vector<16x576xf32>
    %c0_1 = arith.constant 0 : index
    %c0_2 = arith.constant 0 : index
    %1 = vector.load %arg2[%c0_1, %c0_2] : memref<576x96xf32, #tpu.memory_space<vmem>>, vector<576x96xf32>
    %cst = arith.constant dense<0.000000e+00> : vector<16x96xf32>
    %2 = tpu.matmul %0, %1, %cst {dimension_numbers = #tpu.dot_dimension_numbers<[1], [0], [0], [1], [0, 0, 1, 1], [], []>} : vector<16x576xf32>, vector<576x96xf32>, vector<16x96xf32> -> vector<16x96xf32>
    %c0_3 = arith.constant 0 : index
    %c0_4 = arith.constant 0 : index
    %3 = vector.load %arg1[%c0_3, %c0_4] : memref<16x1xf32, #tpu.memory_space<vmem>>, vector<16x1xf32>
    %c0_5 = arith.constant 0 : index
    %c0_6 = arith.constant 0 : index
    %4 = vector.load %arg3[%c0_5, %c0_6] : memref<1x96xf32, #tpu.memory_space<vmem>>, vector<1x96xf32>
    %5 = vector.broadcast %3 : vector<16x1xf32> to vector<16x96xf32>
    %6 = vector.broadcast %4 : vector<1x96xf32> to vector<16x96xf32>
    %7 = arith.mulf %5, %6 : vector<16x96xf32>
    %8 = arith.addf %2, %7 : vector<16x96xf32>
    %c0_7 = arith.constant 0 : index
    %c0_8 = arith.constant 0 : index
    %9 = vector.load %arg5[%c0_7, %c0_8] : memref<1x96xf32, #tpu.memory_space<vmem>>, vector<1x96xf32>
    %10 = vector.broadcast %9 : vector<1x96xf32> to vector<16x96xf32>
    %11 = arith.addf %8, %10 : vector<16x96xf32>
    %c0_9 = arith.constant 0 : index
    %c0_10 = arith.constant 0 : index
    %12 = vector.load %arg4[%c0_9, %c0_10] : memref<32x96xf32, #tpu.memory_space<vmem>>, vector<32x96xf32>
    %c0_11 = arith.constant 0 : index
    %c0_12 = arith.constant 0 : index
    %13 = vector.load %arg6[%c0_11, %c0_12] : memref<1x96xf32, #tpu.memory_space<vmem>>, vector<1x96xf32>
    %cst_13 = arith.constant 0.000000e+00 : f32
    %14 = vector.broadcast %cst_13 : f32 to vector<2x32xf32>
    %15 = vector.extract_strided_slice %11 {offsets = [0, 0], sizes = [2, 96], strides = [1, 1]} : vector<16x96xf32> to vector<2x96xf32>
    %cst_14 = arith.constant dense<0.000000e+00> : vector<2x96xf32>
    %16 = tpu.matmul %14, %12, %cst_14 {dimension_numbers = #tpu.dot_dimension_numbers<[1], [0], [0], [1], [0, 0, 1, 1], [], []>} : vector<2x32xf32>, vector<32x96xf32>, vector<2x96xf32> -> vector<2x96xf32>
    %17 = vector.broadcast %13 : vector<1x96xf32> to vector<2x96xf32>
    %18 = arith.addf %16, %17 : vector<2x96xf32>
    %19 = vector.extract_strided_slice %15 {offsets = [0, 0], sizes = [2, 32], strides = [1, 1]} : vector<2x96xf32> to vector<2x32xf32>
    %20 = vector.extract_strided_slice %18 {offsets = [0, 0], sizes = [2, 32], strides = [1, 1]} : vector<2x96xf32> to vector<2x32xf32>
    %21 = arith.addf %19, %20 : vector<2x32xf32>
    %22 = arith.negf %21 : vector<2x32xf32>
    %23 = math.exp %22 : vector<2x32xf32>
    %cst_15 = arith.constant 1.000000e+00 : f32
    %24 = vector.broadcast %cst_15 : f32 to vector<2x32xf32>
    %25 = arith.addf %24, %23 : vector<2x32xf32>
    %26 = arith.divf %24, %25 : vector<2x32xf32>
    %27 = vector.extract_strided_slice %15 {offsets = [0, 32], sizes = [2, 32], strides = [1, 1]} : vector<2x96xf32> to vector<2x32xf32>
    %28 = vector.extract_strided_slice %18 {offsets = [0, 32], sizes = [2, 32], strides = [1, 1]} : vector<2x96xf32> to vector<2x32xf32>
    %29 = arith.addf %27, %28 : vector<2x32xf32>
    %30 = arith.negf %29 : vector<2x32xf32>
    %31 = math.exp %30 : vector<2x32xf32>
    %cst_16 = arith.constant 1.000000e+00 : f32
    %32 = vector.broadcast %cst_16 : f32 to vector<2x32xf32>
    %33 = arith.addf %32, %31 : vector<2x32xf32>
    %34 = arith.divf %32, %33 : vector<2x32xf32>
    %35 = vector.extract_strided_slice %15 {offsets = [0, 64], sizes = [2, 32], strides = [1, 1]} : vector<2x96xf32> to vector<2x32xf32>
    %36 = vector.extract_strided_slice %18 {offsets = [0, 64], sizes = [2, 32], strides = [1, 1]} : vector<2x96xf32> to vector<2x32xf32>
    %37 = arith.mulf %26, %36 : vector<2x32xf32>
    %38 = arith.addf %35, %37 : vector<2x32xf32>
    %39 = math.tanh %38 : vector<2x32xf32>
    %cst_17 = arith.constant 1.000000e+00 : f32
    %40 = vector.broadcast %cst_17 : f32 to vector<2x32xf32>
    %41 = arith.subf %40, %34 : vector<2x32xf32>
    %42 = arith.mulf %41, %39 : vector<2x32xf32>
    %43 = arith.mulf %34, %14 : vector<2x32xf32>
    %44 = arith.addf %42, %43 : vector<2x32xf32>
    %45 = vector.extract_strided_slice %11 {offsets = [2, 0], sizes = [2, 96], strides = [1, 1]} : vector<16x96xf32> to vector<2x96xf32>
    %cst_18 = arith.constant dense<0.000000e+00> : vector<2x96xf32>
    %46 = tpu.matmul %44, %12, %cst_18 {dimension_numbers = #tpu.dot_dimension_numbers<[1], [0], [0], [1], [0, 0, 1, 1], [], []>} : vector<2x32xf32>, vector<32x96xf32>, vector<2x96xf32> -> vector<2x96xf32>
    %47 = vector.broadcast %13 : vector<1x96xf32> to vector<2x96xf32>
    %48 = arith.addf %46, %47 : vector<2x96xf32>
    %49 = vector.extract_strided_slice %45 {offsets = [0, 0], sizes = [2, 32], strides = [1, 1]} : vector<2x96xf32> to vector<2x32xf32>
    %50 = vector.extract_strided_slice %48 {offsets = [0, 0], sizes = [2, 32], strides = [1, 1]} : vector<2x96xf32> to vector<2x32xf32>
    %51 = arith.addf %49, %50 : vector<2x32xf32>
    %52 = arith.negf %51 : vector<2x32xf32>
    %53 = math.exp %52 : vector<2x32xf32>
    %cst_19 = arith.constant 1.000000e+00 : f32
    %54 = vector.broadcast %cst_19 : f32 to vector<2x32xf32>
    %55 = arith.addf %54, %53 : vector<2x32xf32>
    %56 = arith.divf %54, %55 : vector<2x32xf32>
    %57 = vector.extract_strided_slice %45 {offsets = [0, 32], sizes = [2, 32], strides = [1, 1]} : vector<2x96xf32> to vector<2x32xf32>
    %58 = vector.extract_strided_slice %48 {offsets = [0, 32], sizes = [2, 32], strides = [1, 1]} : vector<2x96xf32> to vector<2x32xf32>
    %59 = arith.addf %57, %58 : vector<2x32xf32>
    %60 = arith.negf %59 : vector<2x32xf32>
    %61 = math.exp %60 : vector<2x32xf32>
    %cst_20 = arith.constant 1.000000e+00 : f32
    %62 = vector.broadcast %cst_20 : f32 to vector<2x32xf32>
    %63 = arith.addf %62, %61 : vector<2x32xf32>
    %64 = arith.divf %62, %63 : vector<2x32xf32>
    %65 = vector.extract_strided_slice %45 {offsets = [0, 64], sizes = [2, 32], strides = [1, 1]} : vector<2x96xf32> to vector<2x32xf32>
    %66 = vector.extract_strided_slice %48 {offsets = [0, 64], sizes = [2, 32], strides = [1, 1]} : vector<2x96xf32> to vector<2x32xf32>
    %67 = arith.mulf %56, %66 : vector<2x32xf32>
    %68 = arith.addf %65, %67 : vector<2x32xf32>
    %69 = math.tanh %68 : vector<2x32xf32>
    %cst_21 = arith.constant 1.000000e+00 : f32
    %70 = vector.broadcast %cst_21 : f32 to vector<2x32xf32>
    %71 = arith.subf %70, %64 : vector<2x32xf32>
    %72 = arith.mulf %71, %69 : vector<2x32xf32>
    %73 = arith.mulf %64, %44 : vector<2x32xf32>
    %74 = arith.addf %72, %73 : vector<2x32xf32>
    %75 = vector.extract_strided_slice %11 {offsets = [4, 0], sizes = [2, 96], strides = [1, 1]} : vector<16x96xf32> to vector<2x96xf32>
    %cst_22 = arith.constant dense<0.000000e+00> : vector<2x96xf32>
    %76 = tpu.matmul %74, %12, %cst_22 {dimension_numbers = #tpu.dot_dimension_numbers<[1], [0], [0], [1], [0, 0, 1, 1], [], []>} : vector<2x32xf32>, vector<32x96xf32>, vector<2x96xf32> -> vector<2x96xf32>
    %77 = vector.broadcast %13 : vector<1x96xf32> to vector<2x96xf32>
    %78 = arith.addf %76, %77 : vector<2x96xf32>
    %79 = vector.extract_strided_slice %75 {offsets = [0, 0], sizes = [2, 32], strides = [1, 1]} : vector<2x96xf32> to vector<2x32xf32>
    %80 = vector.extract_strided_slice %78 {offsets = [0, 0], sizes = [2, 32], strides = [1, 1]} : vector<2x96xf32> to vector<2x32xf32>
    %81 = arith.addf %79, %80 : vector<2x32xf32>
    %82 = arith.negf %81 : vector<2x32xf32>
    %83 = math.exp %82 : vector<2x32xf32>
    %cst_23 = arith.constant 1.000000e+00 : f32
    %84 = vector.broadcast %cst_23 : f32 to vector<2x32xf32>
    %85 = arith.addf %84, %83 : vector<2x32xf32>
    %86 = arith.divf %84, %85 : vector<2x32xf32>
    %87 = vector.extract_strided_slice %75 {offsets = [0, 32], sizes = [2, 32], strides = [1, 1]} : vector<2x96xf32> to vector<2x32xf32>
    %88 = vector.extract_strided_slice %78 {offsets = [0, 32], sizes = [2, 32], strides = [1, 1]} : vector<2x96xf32> to vector<2x32xf32>
    %89 = arith.addf %87, %88 : vector<2x32xf32>
    %90 = arith.negf %89 : vector<2x32xf32>
    %91 = math.exp %90 : vector<2x32xf32>
    %cst_24 = arith.constant 1.000000e+00 : f32
    %92 = vector.broadcast %cst_24 : f32 to vector<2x32xf32>
    %93 = arith.addf %92, %91 : vector<2x32xf32>
    %94 = arith.divf %92, %93 : vector<2x32xf32>
    %95 = vector.extract_strided_slice %75 {offsets = [0, 64], sizes = [2, 32], strides = [1, 1]} : vector<2x96xf32> to vector<2x32xf32>
    %96 = vector.extract_strided_slice %78 {offsets = [0, 64], sizes = [2, 32], strides = [1, 1]} : vector<2x96xf32> to vector<2x32xf32>
    %97 = arith.mulf %86, %96 : vector<2x32xf32>
    %98 = arith.addf %95, %97 : vector<2x32xf32>
    %99 = math.tanh %98 : vector<2x32xf32>
    %cst_25 = arith.constant 1.000000e+00 : f32
    %100 = vector.broadcast %cst_25 : f32 to vector<2x32xf32>
    %101 = arith.subf %100, %94 : vector<2x32xf32>
    %102 = arith.mulf %101, %99 : vector<2x32xf32>
    %103 = arith.mulf %94, %74 : vector<2x32xf32>
    %104 = arith.addf %102, %103 : vector<2x32xf32>
    %105 = vector.extract_strided_slice %11 {offsets = [6, 0], sizes = [2, 96], strides = [1, 1]} : vector<16x96xf32> to vector<2x96xf32>
    %cst_26 = arith.constant dense<0.000000e+00> : vector<2x96xf32>
    %106 = tpu.matmul %104, %12, %cst_26 {dimension_numbers = #tpu.dot_dimension_numbers<[1], [0], [0], [1], [0, 0, 1, 1], [], []>} : vector<2x32xf32>, vector<32x96xf32>, vector<2x96xf32> -> vector<2x96xf32>
    %107 = vector.broadcast %13 : vector<1x96xf32> to vector<2x96xf32>
    %108 = arith.addf %106, %107 : vector<2x96xf32>
    %109 = vector.extract_strided_slice %105 {offsets = [0, 0], sizes = [2, 32], strides = [1, 1]} : vector<2x96xf32> to vector<2x32xf32>
    %110 = vector.extract_strided_slice %108 {offsets = [0, 0], sizes = [2, 32], strides = [1, 1]} : vector<2x96xf32> to vector<2x32xf32>
    %111 = arith.addf %109, %110 : vector<2x32xf32>
    %112 = arith.negf %111 : vector<2x32xf32>
    %113 = math.exp %112 : vector<2x32xf32>
    %cst_27 = arith.constant 1.000000e+00 : f32
    %114 = vector.broadcast %cst_27 : f32 to vector<2x32xf32>
    %115 = arith.addf %114, %113 : vector<2x32xf32>
    %116 = arith.divf %114, %115 : vector<2x32xf32>
    %117 = vector.extract_strided_slice %105 {offsets = [0, 32], sizes = [2, 32], strides = [1, 1]} : vector<2x96xf32> to vector<2x32xf32>
    %118 = vector.extract_strided_slice %108 {offsets = [0, 32], sizes = [2, 32], strides = [1, 1]} : vector<2x96xf32> to vector<2x32xf32>
    %119 = arith.addf %117, %118 : vector<2x32xf32>
    %120 = arith.negf %119 : vector<2x32xf32>
    %121 = math.exp %120 : vector<2x32xf32>
    %cst_28 = arith.constant 1.000000e+00 : f32
    %122 = vector.broadcast %cst_28 : f32 to vector<2x32xf32>
    %123 = arith.addf %122, %121 : vector<2x32xf32>
    %124 = arith.divf %122, %123 : vector<2x32xf32>
    %125 = vector.extract_strided_slice %105 {offsets = [0, 64], sizes = [2, 32], strides = [1, 1]} : vector<2x96xf32> to vector<2x32xf32>
    %126 = vector.extract_strided_slice %108 {offsets = [0, 64], sizes = [2, 32], strides = [1, 1]} : vector<2x96xf32> to vector<2x32xf32>
    %127 = arith.mulf %116, %126 : vector<2x32xf32>
    %128 = arith.addf %125, %127 : vector<2x32xf32>
    %129 = math.tanh %128 : vector<2x32xf32>
    %cst_29 = arith.constant 1.000000e+00 : f32
    %130 = vector.broadcast %cst_29 : f32 to vector<2x32xf32>
    %131 = arith.subf %130, %124 : vector<2x32xf32>
    %132 = arith.mulf %131, %129 : vector<2x32xf32>
    %133 = arith.mulf %124, %104 : vector<2x32xf32>
    %134 = arith.addf %132, %133 : vector<2x32xf32>
    %135 = vector.extract_strided_slice %11 {offsets = [8, 0], sizes = [2, 96], strides = [1, 1]} : vector<16x96xf32> to vector<2x96xf32>
    %cst_30 = arith.constant dense<0.000000e+00> : vector<2x96xf32>
    %136 = tpu.matmul %134, %12, %cst_30 {dimension_numbers = #tpu.dot_dimension_numbers<[1], [0], [0], [1], [0, 0, 1, 1], [], []>} : vector<2x32xf32>, vector<32x96xf32>, vector<2x96xf32> -> vector<2x96xf32>
    %137 = vector.broadcast %13 : vector<1x96xf32> to vector<2x96xf32>
    %138 = arith.addf %136, %137 : vector<2x96xf32>
    %139 = vector.extract_strided_slice %135 {offsets = [0, 0], sizes = [2, 32], strides = [1, 1]} : vector<2x96xf32> to vector<2x32xf32>
    %140 = vector.extract_strided_slice %138 {offsets = [0, 0], sizes = [2, 32], strides = [1, 1]} : vector<2x96xf32> to vector<2x32xf32>
    %141 = arith.addf %139, %140 : vector<2x32xf32>
    %142 = arith.negf %141 : vector<2x32xf32>
    %143 = math.exp %142 : vector<2x32xf32>
    %cst_31 = arith.constant 1.000000e+00 : f32
    %144 = vector.broadcast %cst_31 : f32 to vector<2x32xf32>
    %145 = arith.addf %144, %143 : vector<2x32xf32>
    %146 = arith.divf %144, %145 : vector<2x32xf32>
    %147 = vector.extract_strided_slice %135 {offsets = [0, 32], sizes = [2, 32], strides = [1, 1]} : vector<2x96xf32> to vector<2x32xf32>
    %148 = vector.extract_strided_slice %138 {offsets = [0, 32], sizes = [2, 32], strides = [1, 1]} : vector<2x96xf32> to vector<2x32xf32>
    %149 = arith.addf %147, %148 : vector<2x32xf32>
    %150 = arith.negf %149 : vector<2x32xf32>
    %151 = math.exp %150 : vector<2x32xf32>
    %cst_32 = arith.constant 1.000000e+00 : f32
    %152 = vector.broadcast %cst_32 : f32 to vector<2x32xf32>
    %153 = arith.addf %152, %151 : vector<2x32xf32>
    %154 = arith.divf %152, %153 : vector<2x32xf32>
    %155 = vector.extract_strided_slice %135 {offsets = [0, 64], sizes = [2, 32], strides = [1, 1]} : vector<2x96xf32> to vector<2x32xf32>
    %156 = vector.extract_strided_slice %138 {offsets = [0, 64], sizes = [2, 32], strides = [1, 1]} : vector<2x96xf32> to vector<2x32xf32>
    %157 = arith.mulf %146, %156 : vector<2x32xf32>
    %158 = arith.addf %155, %157 : vector<2x32xf32>
    %159 = math.tanh %158 : vector<2x32xf32>
    %cst_33 = arith.constant 1.000000e+00 : f32
    %160 = vector.broadcast %cst_33 : f32 to vector<2x32xf32>
    %161 = arith.subf %160, %154 : vector<2x32xf32>
    %162 = arith.mulf %161, %159 : vector<2x32xf32>
    %163 = arith.mulf %154, %134 : vector<2x32xf32>
    %164 = arith.addf %162, %163 : vector<2x32xf32>
    %165 = vector.extract_strided_slice %11 {offsets = [10, 0], sizes = [2, 96], strides = [1, 1]} : vector<16x96xf32> to vector<2x96xf32>
    %cst_34 = arith.constant dense<0.000000e+00> : vector<2x96xf32>
    %166 = tpu.matmul %164, %12, %cst_34 {dimension_numbers = #tpu.dot_dimension_numbers<[1], [0], [0], [1], [0, 0, 1, 1], [], []>} : vector<2x32xf32>, vector<32x96xf32>, vector<2x96xf32> -> vector<2x96xf32>
    %167 = vector.broadcast %13 : vector<1x96xf32> to vector<2x96xf32>
    %168 = arith.addf %166, %167 : vector<2x96xf32>
    %169 = vector.extract_strided_slice %165 {offsets = [0, 0], sizes = [2, 32], strides = [1, 1]} : vector<2x96xf32> to vector<2x32xf32>
    %170 = vector.extract_strided_slice %168 {offsets = [0, 0], sizes = [2, 32], strides = [1, 1]} : vector<2x96xf32> to vector<2x32xf32>
    %171 = arith.addf %169, %170 : vector<2x32xf32>
    %172 = arith.negf %171 : vector<2x32xf32>
    %173 = math.exp %172 : vector<2x32xf32>
    %cst_35 = arith.constant 1.000000e+00 : f32
    %174 = vector.broadcast %cst_35 : f32 to vector<2x32xf32>
    %175 = arith.addf %174, %173 : vector<2x32xf32>
    %176 = arith.divf %174, %175 : vector<2x32xf32>
    %177 = vector.extract_strided_slice %165 {offsets = [0, 32], sizes = [2, 32], strides = [1, 1]} : vector<2x96xf32> to vector<2x32xf32>
    %178 = vector.extract_strided_slice %168 {offsets = [0, 32], sizes = [2, 32], strides = [1, 1]} : vector<2x96xf32> to vector<2x32xf32>
    %179 = arith.addf %177, %178 : vector<2x32xf32>
    %180 = arith.negf %179 : vector<2x32xf32>
    %181 = math.exp %180 : vector<2x32xf32>
    %cst_36 = arith.constant 1.000000e+00 : f32
    %182 = vector.broadcast %cst_36 : f32 to vector<2x32xf32>
    %183 = arith.addf %182, %181 : vector<2x32xf32>
    %184 = arith.divf %182, %183 : vector<2x32xf32>
    %185 = vector.extract_strided_slice %165 {offsets = [0, 64], sizes = [2, 32], strides = [1, 1]} : vector<2x96xf32> to vector<2x32xf32>
    %186 = vector.extract_strided_slice %168 {offsets = [0, 64], sizes = [2, 32], strides = [1, 1]} : vector<2x96xf32> to vector<2x32xf32>
    %187 = arith.mulf %176, %186 : vector<2x32xf32>
    %188 = arith.addf %185, %187 : vector<2x32xf32>
    %189 = math.tanh %188 : vector<2x32xf32>
    %cst_37 = arith.constant 1.000000e+00 : f32
    %190 = vector.broadcast %cst_37 : f32 to vector<2x32xf32>
    %191 = arith.subf %190, %184 : vector<2x32xf32>
    %192 = arith.mulf %191, %189 : vector<2x32xf32>
    %193 = arith.mulf %184, %164 : vector<2x32xf32>
    %194 = arith.addf %192, %193 : vector<2x32xf32>
    %195 = vector.extract_strided_slice %11 {offsets = [12, 0], sizes = [2, 96], strides = [1, 1]} : vector<16x96xf32> to vector<2x96xf32>
    %cst_38 = arith.constant dense<0.000000e+00> : vector<2x96xf32>
    %196 = tpu.matmul %194, %12, %cst_38 {dimension_numbers = #tpu.dot_dimension_numbers<[1], [0], [0], [1], [0, 0, 1, 1], [], []>} : vector<2x32xf32>, vector<32x96xf32>, vector<2x96xf32> -> vector<2x96xf32>
    %197 = vector.broadcast %13 : vector<1x96xf32> to vector<2x96xf32>
    %198 = arith.addf %196, %197 : vector<2x96xf32>
    %199 = vector.extract_strided_slice %195 {offsets = [0, 0], sizes = [2, 32], strides = [1, 1]} : vector<2x96xf32> to vector<2x32xf32>
    %200 = vector.extract_strided_slice %198 {offsets = [0, 0], sizes = [2, 32], strides = [1, 1]} : vector<2x96xf32> to vector<2x32xf32>
    %201 = arith.addf %199, %200 : vector<2x32xf32>
    %202 = arith.negf %201 : vector<2x32xf32>
    %203 = math.exp %202 : vector<2x32xf32>
    %cst_39 = arith.constant 1.000000e+00 : f32
    %204 = vector.broadcast %cst_39 : f32 to vector<2x32xf32>
    %205 = arith.addf %204, %203 : vector<2x32xf32>
    %206 = arith.divf %204, %205 : vector<2x32xf32>
    %207 = vector.extract_strided_slice %195 {offsets = [0, 32], sizes = [2, 32], strides = [1, 1]} : vector<2x96xf32> to vector<2x32xf32>
    %208 = vector.extract_strided_slice %198 {offsets = [0, 32], sizes = [2, 32], strides = [1, 1]} : vector<2x96xf32> to vector<2x32xf32>
    %209 = arith.addf %207, %208 : vector<2x32xf32>
    %210 = arith.negf %209 : vector<2x32xf32>
    %211 = math.exp %210 : vector<2x32xf32>
    %cst_40 = arith.constant 1.000000e+00 : f32
    %212 = vector.broadcast %cst_40 : f32 to vector<2x32xf32>
    %213 = arith.addf %212, %211 : vector<2x32xf32>
    %214 = arith.divf %212, %213 : vector<2x32xf32>
    %215 = vector.extract_strided_slice %195 {offsets = [0, 64], sizes = [2, 32], strides = [1, 1]} : vector<2x96xf32> to vector<2x32xf32>
    %216 = vector.extract_strided_slice %198 {offsets = [0, 64], sizes = [2, 32], strides = [1, 1]} : vector<2x96xf32> to vector<2x32xf32>
    %217 = arith.mulf %206, %216 : vector<2x32xf32>
    %218 = arith.addf %215, %217 : vector<2x32xf32>
    %219 = math.tanh %218 : vector<2x32xf32>
    %cst_41 = arith.constant 1.000000e+00 : f32
    %220 = vector.broadcast %cst_41 : f32 to vector<2x32xf32>
    %221 = arith.subf %220, %214 : vector<2x32xf32>
    %222 = arith.mulf %221, %219 : vector<2x32xf32>
    %223 = arith.mulf %214, %194 : vector<2x32xf32>
    %224 = arith.addf %222, %223 : vector<2x32xf32>
    %225 = vector.extract_strided_slice %11 {offsets = [14, 0], sizes = [2, 96], strides = [1, 1]} : vector<16x96xf32> to vector<2x96xf32>
    %cst_42 = arith.constant dense<0.000000e+00> : vector<2x96xf32>
    %226 = tpu.matmul %224, %12, %cst_42 {dimension_numbers = #tpu.dot_dimension_numbers<[1], [0], [0], [1], [0, 0, 1, 1], [], []>} : vector<2x32xf32>, vector<32x96xf32>, vector<2x96xf32> -> vector<2x96xf32>
    %227 = vector.broadcast %13 : vector<1x96xf32> to vector<2x96xf32>
    %228 = arith.addf %226, %227 : vector<2x96xf32>
    %229 = vector.extract_strided_slice %225 {offsets = [0, 0], sizes = [2, 32], strides = [1, 1]} : vector<2x96xf32> to vector<2x32xf32>
    %230 = vector.extract_strided_slice %228 {offsets = [0, 0], sizes = [2, 32], strides = [1, 1]} : vector<2x96xf32> to vector<2x32xf32>
    %231 = arith.addf %229, %230 : vector<2x32xf32>
    %232 = arith.negf %231 : vector<2x32xf32>
    %233 = math.exp %232 : vector<2x32xf32>
    %cst_43 = arith.constant 1.000000e+00 : f32
    %234 = vector.broadcast %cst_43 : f32 to vector<2x32xf32>
    %235 = arith.addf %234, %233 : vector<2x32xf32>
    %236 = arith.divf %234, %235 : vector<2x32xf32>
    %237 = vector.extract_strided_slice %225 {offsets = [0, 32], sizes = [2, 32], strides = [1, 1]} : vector<2x96xf32> to vector<2x32xf32>
    %238 = vector.extract_strided_slice %228 {offsets = [0, 32], sizes = [2, 32], strides = [1, 1]} : vector<2x96xf32> to vector<2x32xf32>
    %239 = arith.addf %237, %238 : vector<2x32xf32>
    %240 = arith.negf %239 : vector<2x32xf32>
    %241 = math.exp %240 : vector<2x32xf32>
    %cst_44 = arith.constant 1.000000e+00 : f32
    %242 = vector.broadcast %cst_44 : f32 to vector<2x32xf32>
    %243 = arith.addf %242, %241 : vector<2x32xf32>
    %244 = arith.divf %242, %243 : vector<2x32xf32>
    %245 = vector.extract_strided_slice %225 {offsets = [0, 64], sizes = [2, 32], strides = [1, 1]} : vector<2x96xf32> to vector<2x32xf32>
    %246 = vector.extract_strided_slice %228 {offsets = [0, 64], sizes = [2, 32], strides = [1, 1]} : vector<2x96xf32> to vector<2x32xf32>
    %247 = arith.mulf %236, %246 : vector<2x32xf32>
    %248 = arith.addf %245, %247 : vector<2x32xf32>
    %249 = math.tanh %248 : vector<2x32xf32>
    %cst_45 = arith.constant 1.000000e+00 : f32
    %250 = vector.broadcast %cst_45 : f32 to vector<2x32xf32>
    %251 = arith.subf %250, %244 : vector<2x32xf32>
    %252 = arith.mulf %251, %249 : vector<2x32xf32>
    %253 = arith.mulf %244, %224 : vector<2x32xf32>
    %254 = arith.addf %252, %253 : vector<2x32xf32>
    %c0_46 = arith.constant 0 : index
    %c0_47 = arith.constant 0 : index
    %255 = vector.load %arg7[%c0_46, %c0_47] : memref<2x32xf32, #tpu.memory_space<vmem>>, vector<2x32xf32>
    tpu.vector_store %arg7[%c0_46, %c0_47], %254 {strides = array<i32>} : memref<2x32xf32, #tpu.memory_space<vmem>>, vector<2x32xf32>,
    return
  }
}

</mosaic_0001>

<llo_original>
// kernel: rollout_encoder_forward.3
$region0: #{rollout_encoder_forward.3}
  #allocation0 [shape = 'u32[]', space=smem, size = 0x4, offset = 0x4, fixed_abs, tag = 'smem constant byte address 0x4 - core index']
  #allocation1 [shape = 'u32[72,128]{1,0:T(1,128)}', space=vmem, size = 0x9000, scoped, tag = 'internal scratch']
  %s0 = inlined_call_operand.vmem [shape: f32[3136,36], index: 0, kind: input, shape index: {}]
  %s1 = inlined_call_operand.vmem [shape: f32[36,16], index: 1, kind: input, shape index: {}]
  %s2 = inlined_call_operand.vmem [shape: f32[1,16], index: 2, kind: input, shape index: {}]
  %s3 = inlined_call_operand.vmem [shape: f32[3136,16], index: 3, kind: output, shape index: {}]
  %s4 = sld [smem:[#allocation0]]
  $region45: #{rollout_encoder_forward.3} parent=0
    _
  %s6 = ssub.s32 1, %s4
  %s7 = scalar_select 0, %s6, %s4
  loop: start=0, step=1, limit=4
  $region2: #{rollout_encoder_forward.3} parent=0 // loop_pre_header
    _
  $region3: #{rollout_encoder_forward.3} parent=0 // loop_header
    %s9 = sphi 0, %s13
    %p10 = scmp.ge.s32.totalorder %s9, 4
    %s19 = sphi 0, %s21
    %s22 = sphi 0, %s19
    %s23 = sphi 0, %s22
    %s39 = sphi 0, %s23
    %s43 = sphi 0, %s43
    %s45 = sphi 0, %s43
    %s46 = sphi 0, %s45
    %s60 = sphi 0, %s46
    %s64 = sphi 0, %s64
    %s66 = sphi 0, %s64
    %s67 = sphi 0, %s66
    %s81 = sphi 0, %s67
    %s87 = sphi 0, %s89
    %s90 = sphi 0, %s87
    %s91 = sphi 0, %s90
    %s107 = sphi 0, %s91
  $region4: #{rollout_encoder_forward.3} parent=0 // loop_header_branch
    %12 = sbr.rel (%p10) target = $region8
  $region5: #{rollout_encoder_forward.3} parent=0 // loop_body
    %s14 = ssub.s32 %s9, 1
    %s15 = ssub.s32 %s9, 2
    %s16 = sadd.s32 %s9, 1
    %s17 = ssub.s32 %s9, %s16
    %p18 = scmp.eq.s32.totalorder %s17, 0
    %s20 = sadd.s32 %s19, 1
    %s21 = scalar_select %p18, %s19, %s20
    %p24 = pneg %p18
    %p25 = scmp.eq.s32.totalorder %s9, 1
    %p26 = por %p24, %p25
    %p27 = scmp.ne.s32.totalorder %s19, %s22
    %p28 = scmp.eq.s32.totalorder %s9, 0
    %p29 = por %p27, %p28
    %p30 = scmp.ne.s32.totalorder %s19, %s22
    %p31 = scmp.eq.s32.totalorder %s14, 1
    %p32 = por %p30, %p31
    %p33 = scmp.ne.s32.totalorder %s22, %s23
    %p34 = scmp.eq.s32.totalorder %s14, 0
    %p35 = por %p33, %p34
    %p36 = scmp.ne.s32.totalorder %s22, %s23
    %p37 = scmp.eq.s32.totalorder %s15, 1
    %p38 = por %p36, %p37
    %p40 = scmp.ne.s32.totalorder %s23, %s39
    %p41 = scmp.eq.s32.totalorder %s15, 0
    %p42 = por %p40, %p41
    %s44 = sadd.s32 %s43, 1
    %p47 = scmp.eq.s32.totalorder %s9, 1
    %p48 = scmp.ne.s32.totalorder %s43, %s45
    %p49 = scmp.eq.s32.totalorder %s9, 0
    %p50 = por %p48, %p49
    %p51 = scmp.ne.s32.totalorder %s43, %s45
    %p52 = scmp.eq.s32.totalorder %s14, 1
    %p53 = por %p51, %p52
    %p54 = scmp.ne.s32.totalorder %s45, %s46
    %p55 = scmp.eq.s32.totalorder %s14, 0
    %p56 = por %p54, %p55
    %p57 = scmp.ne.s32.totalorder %s45, %s46
    %p58 = scmp.eq.s32.totalorder %s15, 1
    %p59 = por %p57, %p58
    %p61 = scmp.ne.s32.totalorder %s46, %s60
    %p62 = scmp.eq.s32.totalorder %s15, 0
    %p63 = por %p61, %p62
    %s65 = sadd.s32 %s64, 1
    %p68 = scmp.eq.s32.totalorder %s9, 1
    %p69 = scmp.ne.s32.totalorder %s64, %s66
    %p70 = scmp.eq.s32.totalorder %s9, 0
    %p71 = por %p69, %p70
    %p72 = scmp.ne.s32.totalorder %s64, %s66
    %p73 = scmp.eq.s32.totalorder %s14, 1
    %p74 = por %p72, %p73
    %p75 = scmp.ne.s32.totalorder %s66, %s67
    %p76 = scmp.eq.s32.totalorder %s14, 0
    %p77 = por %p75, %p76
    %p78 = scmp.ne.s32.totalorder %s66, %s67
    %p79 = scmp.eq.s32.totalorder %s15, 1
    %p80 = por %p78, %p79
    %p82 = scmp.ne.s32.totalorder %s67, %s81
    %p83 = scmp.eq.s32.totalorder %s15, 0
    %p84 = por %p82, %p83
    %s85 = ssub.s32 %s9, %s16
    %p86 = scmp.eq.s32.totalorder %s85, 0
    %s88 = sadd.s32 %s87, 1
    %s89 = scalar_select %p86, %s87, %s88
    %p92 = pneg %p86
    %p93 = scmp.eq.s32.totalorder %s9, 1
    %p94 = por %p92, %p93
    %p95 = scmp.ne.s32.totalorder %s87, %s90
    %p96 = scmp.eq.s32.totalorder %s9, 0
    %p97 = por %p95, %p96
    %p98 = scmp.ne.s32.totalorder %s87, %s90
    %p99 = scmp.eq.s32.totalorder %s14, 1
    %p100 = por %p98, %p99
    %p101 = scmp.ne.s32.totalorder %s90, %s91
    %p102 = scmp.eq.s32.totalorder %s14, 0
    %p103 = por %p101, %p102
    %p104 = scmp.ne.s32.totalorder %s90, %s91
    %p105 = scmp.eq.s32.totalorder %s15, 1
    %p106 = por %p104, %p105
    %p108 = scmp.ne.s32.totalorder %s91, %s107
    %p109 = scmp.eq.s32.totalorder %s15, 0
    %p110 = por %p108, %p109
    %p111 = scmp.le.s32.totalorder 1, %s9
    %p112 = scmp.lt.s32.totalorder %s9, 3
    %p113 = pnand %p111, %p112
    %p114 = pneg %p113
    // Predicated region
    $region9: #{rollout_encoder_forward.3} parent=5 // pred_check
      _
    $region10: #{rollout_encoder_forward.3} parent=5 // pred_check_branch
      %116 = sbr.rel (%p113) target = $region12
    $region11: #{rollout_encoder_forward.3} parent=5 // pred_region
      %s117 = ssub.s32 %s9, 1
      // Predicated region
      $region13: #{rollout_encoder_forward.3} parent=11 // pred_check
        %p118 = pneg %p56
      $region14: #{rollout_encoder_forward.3} parent=11 // pred_check_branch
        %120 = sbr.rel (%p118) target = $region16
      $region15: #{rollout_encoder_forward.3} parent=11 // pred_region
        _
      $region16: #{rollout_encoder_forward.3} parent=11 // pred_fallthru
        _
      // Predicated region
      $region17: #{rollout_encoder_forward.3} parent=11 // pred_check
        %p121 = pneg %p77
      $region18: #{rollout_encoder_forward.3} parent=11 // pred_check_branch
        %123 = sbr.rel (%p121) target = $region20
      $region19: #{rollout_encoder_forward.3} parent=11 // pred_region
        _
      $region20: #{rollout_encoder_forward.3} parent=11 // pred_fallthru
        _
    $region12: #{rollout_encoder_forward.3} parent=5 // pred_fallthru
      _
    %p124 = scmp.lt.s32.totalorder %s9, 2
    // Predicated region
    $region21: #{rollout_encoder_forward.3} parent=5 // pred_check
      %p125 = pneg %p124
    $region22: #{rollout_encoder_forward.3} parent=5 // pred_check_branch
      %127 = sbr.rel (%p125) target = $region24
    $region23: #{rollout_encoder_forward.3} parent=5 // pred_region
      // Predicated region
      $region25: #{rollout_encoder_forward.3} parent=23 // pred_check
        %p128 = pneg %p29
      $region26: #{rollout_encoder_forward.3} parent=23 // pred_check_branch
        %130 = sbr.rel (%p128) target = $region28
      $region27: #{rollout_encoder_forward.3} parent=23 // pred_region
        %s131 = smul.u32 196, %s9
        %p132 = scmp.lt.s32.totalorder %s131, 391
        %s133 = scalar_select %p132, %s131, 391
        %s134 = smul.addr %s133, 8
        %s135 = scalar_lea.vmem %s0, %s134
        %s136 = smul.u32 196, %s9
      $region28: #{rollout_encoder_forward.3} parent=23 // pred_fallthru
        _
    $region24: #{rollout_encoder_forward.3} parent=5 // pred_fallthru
      _
    %p137 = scmp.le.s32.totalorder 1, %s9
    %p138 = scmp.lt.s32.totalorder %s9, 3
    %p139 = pnand %p137, %p138
    %p140 = pneg %p139
    // Predicated region
    $region29: #{rollout_encoder_forward.3} parent=5 // pred_check
      _
    $region30: #{rollout_encoder_forward.3} parent=5 // pred_check_branch
      %142 = sbr.rel (%p139) target = $region32
    $region31: #{rollout_encoder_forward.3} parent=5 // pred_region
      %s143 = ssub.s32 %s9, 1
      %s144 = smul.u32 196, %s14
      %p145 = scmp.lt.s32.totalorder %s144, 391
      %s146 = scalar_select %p145, %s144, 391
      %s147 = smul.addr %s146, 8
      %s148 = scalar_lea.vmem %s0, %s147
      %p149 = pneg %p35
      %p150 = pneg %p32
      %p151 = pneg %p56
      %p152 = pneg %p53
      %p153 = pneg %p77
      %p154 = pneg %p74
      %p155 = pneg %p103
      %p156 = pneg %p100
      %s157 = smul.u32 196, %s14
      %p158 = scmp.lt.s32.totalorder %s157, 391
      %s159 = scalar_select %p158, %s157, 391
      %s160 = smul.addr %s159, 8
      %s161 = scalar_lea.vmem %s3, %s160
      %s162 = smul.u32 196, %s14
      %p163 = scmp.lt.s32.totalorder %s162, 391
      %s164 = scalar_select %p163, %s162, 391
      %s165 = smul.addr %s164, 8
      %s166 = scalar_lea.vmem %s0, %s165
      %s167 = smul.u32 196, %s14
      %s168 = smul.u32 196, %s14
      %p169 = scmp.lt.s32.totalorder %s168, 391
      %s170 = scalar_select %p169, %s168, 391
      %s171 = smul.addr %s170, 8
      %s172 = scalar_lea.vmem %s3, %s171
      %s173 = smul.u32 196, %s14
      %v174 = vld [vmem:[%s166] sm:$0xff]
      %v175 = vld [vmem:[%s166 + $0x8] sm:$0xff]
      %v176 = vld [vmem:[%s166 + $0x10] sm:$0xff]
      %v177 = vld [vmem:[%s166 + $0x18] sm:$0xff]
      %v178 = vld [vmem:[%s166 + $0x20] sm:$0xff]
      %v179 = vld [vmem:[%s166 + $0x28] sm:$0xff]
      %v180 = vld [vmem:[%s166 + $0x30] sm:$0xff]
      %v181 = vld [vmem:[%s166 + $0x38] sm:$0xff]
      %v182 = vld [vmem:[%s166 + $0x40] sm:$0xff]
      %v183 = vld [vmem:[%s166 + $0x48] sm:$0xff]
      %v184 = vld [vmem:[%s166 + $0x50] sm:$0xff]
      %v185 = vld [vmem:[%s166 + $0x58] sm:$0xff]
      %v186 = vld [vmem:[%s166 + $0x60] sm:$0xff]
      %v187 = vld [vmem:[%s166 + $0x68] sm:$0xff]
      %v188 = vld [vmem:[%s166 + $0x70] sm:$0xff]
      %v189 = vld [vmem:[%s166 + $0x78] sm:$0xff]
      %v190 = vld [vmem:[%s166 + $0x80] sm:$0xff]
      %v191 = vld [vmem:[%s166 + $0x88] sm:$0xff]
      %v192 = vld [vmem:[%s166 + $0x90] sm:$0xff]
      %v193 = vld [vmem:[%s166 + $0x98] sm:$0xff]
      %v194 = vld [vmem:[%s166 + $0xa0] sm:$0xff]
      %v195 = vld [vmem:[%s166 + $0xa8] sm:$0xff]
      %v196 = vld [vmem:[%s166 + $0xb0] sm:$0xff]
      %v197 = vld [vmem:[%s166 + $0xb8] sm:$0xff]
      %v198 = vld [vmem:[%s166 + $0xc0] sm:$0xff]
      %v199 = vld [vmem:[%s166 + $0xc8] sm:$0xff]
      %v200 = vld [vmem:[%s166 + $0xd0] sm:$0xff]
      %v201 = vld [vmem:[%s166 + $0xd8] sm:$0xff]
      %v202 = vld [vmem:[%s166 + $0xe0] sm:$0xff]
      %v203 = vld [vmem:[%s166 + $0xe8] sm:$0xff]
      %v204 = vld [vmem:[%s166 + $0xf0] sm:$0xff]
      %v205 = vld [vmem:[%s166 + $0xf8] sm:$0xff]
      %v206 = vld [vmem:[%s166 + $0x100] sm:$0xff]
      %v207 = vld [vmem:[%s166 + $0x108] sm:$0xff]
      %v208 = vld [vmem:[%s166 + $0x110] sm:$0xff]
      %v209 = vld [vmem:[%s166 + $0x118] sm:$0xff]
      %v210 = vld [vmem:[%s166 + $0x120] sm:$0xff]
      %v211 = vld [vmem:[%s166 + $0x128] sm:$0xff]
      %v212 = vld [vmem:[%s166 + $0x130] sm:$0xff]
      %v213 = vld [vmem:[%s166 + $0x138] sm:$0xff]
      %v214 = vld [vmem:[%s166 + $0x140] sm:$0xff]
      %v215 = vld [vmem:[%s166 + $0x148] sm:$0xff]
      %v216 = vld [vmem:[%s166 + $0x150] sm:$0xff]
      %v217 = vld [vmem:[%s166 + $0x158] sm:$0xff]
      %v218 = vld [vmem:[%s166 + $0x160] sm:$0xff]
      %v219 = vld [vmem:[%s166 + $0x168] sm:$0xff]
      %v220 = vld [vmem:[%s166 + $0x170] sm:$0xff]
      %v221 = vld [vmem:[%s166 + $0x178] sm:$0xff]
      %v222 = vld [vmem:[%s166 + $0x180] sm:$0xff]
      %v223 = vld [vmem:[%s166 + $0x188] sm:$0xff]
      %v224 = vld [vmem:[%s166 + $0x190] sm:$0xff]
      %v225 = vld [vmem:[%s166 + $0x198] sm:$0xff]
      %v226 = vld [vmem:[%s166 + $0x1a0] sm:$0xff]
      %v227 = vld [vmem:[%s166 + $0x1a8] sm:$0xff]
      %v228 = vld [vmem:[%s166 + $0x1b0] sm:$0xff]
      %v229 = vld [vmem:[%s166 + $0x1b8] sm:$0xff]
      %v230 = vld [vmem:[%s166 + $0x1c0] sm:$0xff]
      %v231 = vld [vmem:[%s166 + $0x1c8] sm:$0xff]
      %v232 = vld [vmem:[%s166 + $0x1d0] sm:$0xff]
      %v233 = vld [vmem:[%s166 + $0x1d8] sm:$0xff]
      %v234 = vld [vmem:[%s166 + $0x1e0] sm:$0xff]
      %v235 = vld [vmem:[%s166 + $0x1e8] sm:$0xff]
      %v236 = vld [vmem:[%s166 + $0x1f0] sm:$0xff]
      %v237 = vld [vmem:[%s166 + $0x1f8] sm:$0xff]
      %v238 = vld [vmem:[%s166 + $0x200] sm:$0xff]
      %v239 = vld [vmem:[%s166 + $0x208] sm:$0xff]
      %v240 = vld [vmem:[%s166 + $0x210] sm:$0xff]
      %v241 = vld [vmem:[%s166 + $0x218] sm:$0xff]
      %v242 = vld [vmem:[%s166 + $0x220] sm:$0xff]
      %v243 = vld [vmem:[%s166 + $0x228] sm:$0xff]
      %v244 = vld [vmem:[%s166 + $0x230] sm:$0xff]
      %v245 = vld [vmem:[%s166 + $0x238] sm:$0xff]
      %v246 = vld [vmem:[%s166 + $0x240] sm:$0xff]
      %v247 = vld [vmem:[%s166 + $0x248] sm:$0xff]
      %v248 = vld [vmem:[%s166 + $0x250] sm:$0xff]
      %v249 = vld [vmem:[%s166 + $0x258] sm:$0xff]
      %v250 = vld [vmem:[%s166 + $0x260] sm:$0xff]
      %v251 = vld [vmem:[%s166 + $0x268] sm:$0xff]
      %v252 = vld [vmem:[%s166 + $0x270] sm:$0xff]
      %v253 = vld [vmem:[%s166 + $0x278] sm:$0xff]
      %v254 = vld [vmem:[%s166 + $0x280] sm:$0xff]
      %v255 = vld [vmem:[%s166 + $0x288] sm:$0xff]
      %v256 = vld [vmem:[%s166 + $0x290] sm:$0xff]
      %v257 = vld [vmem:[%s166 + $0x298] sm:$0xff]
      %v258 = vld [vmem:[%s166 + $0x2a0] sm:$0xff]
      %v259 = vld [vmem:[%s166 + $0x2a8] sm:$0xff]
      %v260 = vld [vmem:[%s166 + $0x2b0] sm:$0xff]
      %v261 = vld [vmem:[%s166 + $0x2b8] sm:$0xff]
      %v262 = vld [vmem:[%s166 + $0x2c0] sm:$0xff]
      %v263 = vld [vmem:[%s166 + $0x2c8] sm:$0xff]
      %v264 = vld [vmem:[%s166 + $0x2d0] sm:$0xff]
      %v265 = vld [vmem:[%s166 + $0x2d8] sm:$0xff]
      %v266 = vld [vmem:[%s166 + $0x2e0] sm:$0xff]
      %v267 = vld [vmem:[%s166 + $0x2e8] sm:$0xff]
      %v268 = vld [vmem:[%s166 + $0x2f0] sm:$0xff]
      %v269 = vld [vmem:[%s166 + $0x2f8] sm:$0xff]
      %v270 = vld [vmem:[%s166 + $0x300] sm:$0xff]
      %v271 = vld [vmem:[%s166 + $0x308] sm:$0xff]
      %v272 = vld [vmem:[%s166 + $0x310] sm:$0xff]
      %v273 = vld [vmem:[%s166 + $0x318] sm:$0xff]
      %v274 = vld [vmem:[%s166 + $0x320] sm:$0xff]
      %v275 = vld [vmem:[%s166 + $0x328] sm:$0xff]
      %v276 = vld [vmem:[%s166 + $0x330] sm:$0xff]
      %v277 = vld [vmem:[%s166 + $0x338] sm:$0xff]
      %v278 = vld [vmem:[%s166 + $0x340] sm:$0xff]
      %v279 = vld [vmem:[%s166 + $0x348] sm:$0xff]
      %v280 = vld [vmem:[%s166 + $0x350] sm:$0xff]
      %v281 = vld [vmem:[%s166 + $0x358] sm:$0xff]
      %v282 = vld [vmem:[%s166 + $0x360] sm:$0xff]
      %v283 = vld [vmem:[%s166 + $0x368] sm:$0xff]
      %v284 = vld [vmem:[%s166 + $0x370] sm:$0xff]
      %v285 = vld [vmem:[%s166 + $0x378] sm:$0xff]
      %v286 = vld [vmem:[%s166 + $0x380] sm:$0xff]
      %v287 = vld [vmem:[%s166 + $0x388] sm:$0xff]
      %v288 = vld [vmem:[%s166 + $0x390] sm:$0xff]
      %v289 = vld [vmem:[%s166 + $0x398] sm:$0xff]
      %v290 = vld [vmem:[%s166 + $0x3a0] sm:$0xff]
      %v291 = vld [vmem:[%s166 + $0x3a8] sm:$0xff]
      %v292 = vld [vmem:[%s166 + $0x3b0] sm:$0xff]
      %v293 = vld [vmem:[%s166 + $0x3b8] sm:$0xff]
      %v294 = vld [vmem:[%s166 + $0x3c0] sm:$0xff]
      %v295 = vld [vmem:[%s166 + $0x3c8] sm:$0xff]
      %v296 = vld [vmem:[%s166 + $0x3d0] sm:$0xff]
      %v297 = vld [vmem:[%s166 + $0x3d8] sm:$0xff]
      %v298 = vld [vmem:[%s166 + $0x3e0] sm:$0xff]
      %v299 = vld [vmem:[%s166 + $0x3e8] sm:$0xff]
      %v300 = vld [vmem:[%s166 + $0x3f0] sm:$0xff]
      %v301 = vld [vmem:[%s166 + $0x3f8] sm:$0xff]
      %v302 = vld [vmem:[%s166 + $0x400] sm:$0xff]
      %v303 = vld [vmem:[%s166 + $0x408] sm:$0xff]
      %v304 = vld [vmem:[%s166 + $0x410] sm:$0xff]
      %v305 = vld [vmem:[%s166 + $0x418] sm:$0xff]
      %v306 = vld [vmem:[%s166 + $0x420] sm:$0xff]
      %v307 = vld [vmem:[%s166 + $0x428] sm:$0xff]
      %v308 = vld [vmem:[%s166 + $0x430] sm:$0xff]
      %v309 = vld [vmem:[%s166 + $0x438] sm:$0xff]
      %v310 = vld [vmem:[%s166 + $0x440] sm:$0xff]
      %v311 = vld [vmem:[%s166 + $0x448] sm:$0xff]
      %v312 = vld [vmem:[%s166 + $0x450] sm:$0xff]
      %v313 = vld [vmem:[%s166 + $0x458] sm:$0xff]
      %v314 = vld [vmem:[%s166 + $0x460] sm:$0xff]
      %v315 = vld [vmem:[%s166 + $0x468] sm:$0xff]
      %v316 = vld [vmem:[%s166 + $0x470] sm:$0xff]
      %v317 = vld [vmem:[%s166 + $0x478] sm:$0xff]
      %v318 = vld [vmem:[%s166 + $0x480] sm:$0xff]
      %v319 = vld [vmem:[%s166 + $0x488] sm:$0xff]
      %v320 = vld [vmem:[%s166 + $0x490] sm:$0xff]
      %v321 = vld [vmem:[%s166 + $0x498] sm:$0xff]
      %v322 = vld [vmem:[%s166 + $0x4a0] sm:$0xff]
      %v323 = vld [vmem:[%s166 + $0x4a8] sm:$0xff]
      %v324 = vld [vmem:[%s166 + $0x4b0] sm:$0xff]
      %v325 = vld [vmem:[%s166 + $0x4b8] sm:$0xff]
      %v326 = vld [vmem:[%s166 + $0x4c0] sm:$0xff]
      %v327 = vld [vmem:[%s166 + $0x4c8] sm:$0xff]
      %v328 = vld [vmem:[%s166 + $0x4d0] sm:$0xff]
      %v329 = vld [vmem:[%s166 + $0x4d8] sm:$0xff]
      %v330 = vld [vmem:[%s166 + $0x4e0] sm:$0xff]
      %v331 = vld [vmem:[%s166 + $0x4e8] sm:$0xff]
      %v332 = vld [vmem:[%s166 + $0x4f0] sm:$0xff]
      %v333 = vld [vmem:[%s166 + $0x4f8] sm:$0xff]
      %v334 = vld [vmem:[%s166 + $0x500] sm:$0xff]
      %v335 = vld [vmem:[%s166 + $0x508] sm:$0xff]
      %v336 = vld [vmem:[%s166 + $0x510] sm:$0xff]
      %v337 = vld [vmem:[%s166 + $0x518] sm:$0xff]
      %v338 = vld [vmem:[%s166 + $0x520] sm:$0xff]
      %v339 = vld [vmem:[%s166 + $0x528] sm:$0xff]
      %v340 = vld [vmem:[%s166 + $0x530] sm:$0xff]
      %v341 = vld [vmem:[%s166 + $0x538] sm:$0xff]
      %v342 = vld [vmem:[%s166 + $0x540] sm:$0xff]
      %v343 = vld [vmem:[%s166 + $0x548] sm:$0xff]
      %v344 = vld [vmem:[%s166 + $0x550] sm:$0xff]
      %v345 = vld [vmem:[%s166 + $0x558] sm:$0xff]
      %v346 = vld [vmem:[%s166 + $0x560] sm:$0xff]
      %v347 = vld [vmem:[%s166 + $0x568] sm:$0xff]
      %v348 = vld [vmem:[%s166 + $0x570] sm:$0xff]
      %v349 = vld [vmem:[%s166 + $0x578] sm:$0xff]
      %v350 = vld [vmem:[%s166 + $0x580] sm:$0xff]
      %v351 = vld [vmem:[%s166 + $0x588] sm:$0xff]
      %v352 = vld [vmem:[%s166 + $0x590] sm:$0xff]
      %v353 = vld [vmem:[%s166 + $0x598] sm:$0xff]
      %v354 = vld [vmem:[%s166 + $0x5a0] sm:$0xff]
      %v355 = vld [vmem:[%s166 + $0x5a8] sm:$0xff]
      %v356 = vld [vmem:[%s166 + $0x5b0] sm:$0xff]
      %v357 = vld [vmem:[%s166 + $0x5b8] sm:$0xff]
      %v358 = vld [vmem:[%s166 + $0x5c0] sm:$0xff]
      %v359 = vld [vmem:[%s166 + $0x5c8] sm:$0xff]
      %v360 = vld [vmem:[%s166 + $0x5d0] sm:$0xff]
      %v361 = vld [vmem:[%s166 + $0x5d8] sm:$0xff]
      %v362 = vld [vmem:[%s166 + $0x5e0] sm:$0xff]
      %v363 = vld [vmem:[%s166 + $0x5e8] sm:$0xff]
      %v364 = vld [vmem:[%s166 + $0x5f0] sm:$0xff]
      %v365 = vld [vmem:[%s166 + $0x5f8] sm:$0xff]
      %v366 = vld [vmem:[%s166 + $0x600] sm:$0xff]
      %v367 = vld [vmem:[%s166 + $0x608] sm:$0xff]
      %v368 = vld [vmem:[%s166 + $0x610] sm:$0xff]
      %v369 = vld [vmem:[%s166 + $0x618] sm:$0xff]
      %v370 = vld [vmem:[%s1] sm:$0xff]
      %v371 = vld [vmem:[%s1 + $0x8] sm:$0xff]
      %v372 = vld [vmem:[%s1 + $0x10] sm:$0xff]
      %v373 = vld [vmem:[%s1 + $0x18] sm:$0xff]
      %v374 = vld [vmem:[%s1 + $0x20] sm:$0xf]
      %v375 = vld [vmem:[%s2] sm:$0x1]
      %v377 = vperm.slane %v375, 0
      %vm379 = vcmask 293888
      %v381 = vsel %vm379, %v174, 0
      %v384 = vsel %vm379, %v175, 0
      %v387 = vsel %vm379, %v176, 0
      %v390 = vsel %vm379, %v177, 0
      %v393 = vsel %vm379, %v178, 0
      %v396 = vsel %vm379, %v179, 0
      %v399 = vsel %vm379, %v180, 0
      %v402 = vsel %vm379, %v181, 0
      %v405 = vsel %vm379, %v182, 0
      %v408 = vsel %vm379, %v183, 0
      %v411 = vsel %vm379, %v184, 0
      %v414 = vsel %vm379, %v185, 0
      %v417 = vsel %vm379, %v186, 0
      %v420 = vsel %vm379, %v187, 0
      %v423 = vsel %vm379, %v188, 0
      %v426 = vsel %vm379, %v189, 0
      %v429 = vsel %vm379, %v190, 0
      %v432 = vsel %vm379, %v191, 0
      %v435 = vsel %vm379, %v192, 0
      %v438 = vsel %vm379, %v193, 0
      %v441 = vsel %vm379, %v194, 0
      %v444 = vsel %vm379, %v195, 0
      %v447 = vsel %vm379, %v196, 0
      %v450 = vsel %vm379, %v197, 0
      %v453 = vsel %vm379, %v198, 0
      %v456 = vsel %vm379, %v199, 0
      %v459 = vsel %vm379, %v200, 0
      %v462 = vsel %vm379, %v201, 0
      %v465 = vsel %vm379, %v202, 0
      %v468 = vsel %vm379, %v203, 0
      %v471 = vsel %vm379, %v204, 0
      %v474 = vsel %vm379, %v205, 0
      %v477 = vsel %vm379, %v206, 0
      %v480 = vsel %vm379, %v207, 0
      %v483 = vsel %vm379, %v208, 0
      %v486 = vsel %vm379, %v209, 0
      %v489 = vsel %vm379, %v210, 0
      %v492 = vsel %vm379, %v211, 0
      %v495 = vsel %vm379, %v212, 0
      %v498 = vsel %vm379, %v213, 0
      %v501 = vsel %vm379, %v214, 0
      %v504 = vsel %vm379, %v215, 0
      %v507 = vsel %vm379, %v216, 0
      %v510 = vsel %vm379, %v217, 0
      %v513 = vsel %vm379, %v218, 0
      %v516 = vsel %vm379, %v219, 0
      %v519 = vsel %vm379, %v220, 0
      %v522 = vsel %vm379, %v221, 0
      %v525 = vsel %vm379, %v222, 0
      %v528 = vsel %vm379, %v223, 0
      %v531 = vsel %vm379, %v224, 0
      %v534 = vsel %vm379, %v225, 0
      %v537 = vsel %vm379, %v226, 0
      %v540 = vsel %vm379, %v227, 0
      %v543 = vsel %vm379, %v228, 0
      %v546 = vsel %vm379, %v229, 0
      %v549 = vsel %vm379, %v230, 0
      %v552 = vsel %vm379, %v231, 0
      %v555 = vsel %vm379, %v232, 0
      %v558 = vsel %vm379, %v233, 0
      %v561 = vsel %vm379, %v234, 0
      %v564 = vsel %vm379, %v235, 0
      %v567 = vsel %vm379, %v236, 0
      %v570 = vsel %vm379, %v237, 0
      %v573 = vsel %vm379, %v238, 0
      %v576 = vsel %vm379, %v239, 0
      %v579 = vsel %vm379, %v240, 0
      %v582 = vsel %vm379, %v241, 0
      %v585 = vsel %vm379, %v242, 0
      %v588 = vsel %vm379, %v243, 0
      %v591 = vsel %vm379, %v244, 0
      %v594 = vsel %vm379, %v245, 0
      %v597 = vsel %vm379, %v246, 0
      %v600 = vsel %vm379, %v247, 0
      %v603 = vsel %vm379, %v248, 0
      %v606 = vsel %vm379, %v249, 0
      %v609 = vsel %vm379, %v250, 0
      %v612 = vsel %vm379, %v251, 0
      %v615 = vsel %vm379, %v252, 0
      %v618 = vsel %vm379, %v253, 0
      %v621 = vsel %vm379, %v254, 0
      %v624 = vsel %vm379, %v255, 0
      %v627 = vsel %vm379, %v256, 0
      %v630 = vsel %vm379, %v257, 0
      %v633 = vsel %vm379, %v258, 0
      %v636 = vsel %vm379, %v259, 0
      %v639 = vsel %vm379, %v260, 0
      %v642 = vsel %vm379, %v261, 0
      %v645 = vsel %vm379, %v262, 0
      %v648 = vsel %vm379, %v263, 0
      %v651 = vsel %vm379, %v264, 0
      %v654 = vsel %vm379, %v265, 0
      %v657 = vsel %vm379, %v266, 0
      %v660 = vsel %vm379, %v267, 0
      %v663 = vsel %vm379, %v268, 0
      %v666 = vsel %vm379, %v269, 0
      %v669 = vsel %vm379, %v270, 0
      %v672 = vsel %vm379, %v271, 0
      %v675 = vsel %vm379, %v272, 0
      %v678 = vsel %vm379, %v273, 0
      %v681 = vsel %vm379, %v274, 0
      %v684 = vsel %vm379, %v275, 0
      %v687 = vsel %vm379, %v276, 0
      %v690 = vsel %vm379, %v277, 0
      %v693 = vsel %vm379, %v278, 0
      %v696 = vsel %vm379, %v279, 0
      %v699 = vsel %vm379, %v280, 0
      %v702 = vsel %vm379, %v281, 0
      %v705 = vsel %vm379, %v282, 0
      %v708 = vsel %vm379, %v283, 0
      %v711 = vsel %vm379, %v284, 0
      %v714 = vsel %vm379, %v285, 0
      %v717 = vsel %vm379, %v286, 0
      %v720 = vsel %vm379, %v287, 0
      %v723 = vsel %vm379, %v288, 0
      %v726 = vsel %vm379, %v289, 0
      %v729 = vsel %vm379, %v290, 0
      %v732 = vsel %vm379, %v291, 0
      %v735 = vsel %vm379, %v292, 0
      %v738 = vsel %vm379, %v293, 0
      %v741 = vsel %vm379, %v294, 0
      %v744 = vsel %vm379, %v295, 0
      %v747 = vsel %vm379, %v296, 0
      %v750 = vsel %vm379, %v297, 0
      %v753 = vsel %vm379, %v298, 0
      %v756 = vsel %vm379, %v299, 0
      %v759 = vsel %vm379, %v300, 0
      %v762 = vsel %vm379, %v301, 0
      %v765 = vsel %vm379, %v302, 0
      %v768 = vsel %vm379, %v303, 0
      %v771 = vsel %vm379, %v304, 0
      %v774 = vsel %vm379, %v305, 0
      %v777 = vsel %vm379, %v306, 0
      %v780 = vsel %vm379, %v307, 0
      %v783 = vsel %vm379, %v308, 0
      %v786 = vsel %vm379, %v309, 0
      %v789 = vsel %vm379, %v310, 0
      %v792 = vsel %vm379, %v311, 0
      %v795 = vsel %vm379, %v312, 0
      %v798 = vsel %vm379, %v313, 0
      %v801 = vsel %vm379, %v314, 0
      %v804 = vsel %vm379, %v315, 0
      %v807 = vsel %vm379, %v316, 0
      %v810 = vsel %vm379, %v317, 0
      %v813 = vsel %vm379, %v318, 0
      %v816 = vsel %vm379, %v319, 0
      %v819 = vsel %vm379, %v320, 0
      %v822 = vsel %vm379, %v321, 0
      %v825 = vsel %vm379, %v322, 0
      %v828 = vsel %vm379, %v323, 0
      %v831 = vsel %vm379, %v324, 0
      %v834 = vsel %vm379, %v325, 0
      %v837 = vsel %vm379, %v326, 0
      %v840 = vsel %vm379, %v327, 0
      %v843 = vsel %vm379, %v328, 0
      %v846 = vsel %vm379, %v329, 0
      %v849 = vsel %vm379, %v330, 0
      %v852 = vsel %vm379, %v331, 0
      %v855 = vsel %vm379, %v332, 0
      %v858 = vsel %vm379, %v333, 0
      %v861 = vsel %vm379, %v334, 0
      %v864 = vsel %vm379, %v335, 0
      %v867 = vsel %vm379, %v336, 0
      %v870 = vsel %vm379, %v337, 0
      %v873 = vsel %vm379, %v338, 0
      %v876 = vsel %vm379, %v339, 0
      %v879 = vsel %vm379, %v340, 0
      %v882 = vsel %vm379, %v341, 0
      %v885 = vsel %vm379, %v342, 0
      %v888 = vsel %vm379, %v343, 0
      %v891 = vsel %vm379, %v344, 0
      %v894 = vsel %vm379, %v345, 0
      %v897 = vsel %vm379, %v346, 0
      %v900 = vsel %vm379, %v347, 0
      %v903 = vsel %vm379, %v348, 0
      %v906 = vsel %vm379, %v349, 0
      %v909 = vsel %vm379, %v350, 0
      %v912 = vsel %vm379, %v351, 0
      %v915 = vsel %vm379, %v352, 0
      %v918 = vsel %vm379, %v353, 0
      %v921 = vsel %vm379, %v354, 0
      %v924 = vsel %vm379, %v355, 0
      %v927 = vsel %vm379, %v356, 0
      %v930 = vsel %vm379, %v357, 0
      %v933 = vsel %vm379, %v358, 0
      %v936 = vsel %vm379, %v359, 0
      %v939 = vsel %vm379, %v360, 0
      %v942 = vsel %vm379, %v361, 0
      %v945 = vsel %vm379, %v362, 0
      %v948 = vsel %vm379, %v363, 0
      %v951 = vsel %vm379, %v364, 0
      %v954 = vsel %vm379, %v365, 0
      %v957 = vsel %vm379, %v366, 0
      %v960 = vsel %vm379, %v367, 0
      %v963 = vsel %vm379, %v368, 0
      %v966 = vsel %vm379, %v369, 0
      %vm968 = vcmask 1043456
      %v970 = vsel %vm968, %v374, 0
      %972 = vmatpush.msra.mxu0 0.0
      %973 = vmatpush.msra.mxu0 0.0
      %974 = vmatpush.msra.mxu0 0.0
      %975 = vmatpush.msra.mxu0 0.0
      %976 = vmatpush.msra.mxu0 0.0
      %977 = vmatpush.msra.mxu0 0.0
      %978 = vmatpush.msra.mxu0 0.0
      %979 = vmatpush.msra.mxu0 0.0
      %980 = vmatpush.msra.mxu0 0.0
      %981 = vmatpush.msra.mxu0 0.0
      %982 = vmatpush.msra.mxu0 0.0
      %983 = vmatpush.msra.mxu0 %v970
      %984 = vmatpush.msra.mxu0 %v373
      %985 = vmatpush.msra.mxu0 %v372
      %986 = vmatpush.msra.mxu0 %v371
      %987 = vmatpush.msra.mxu0 %v370
      %988 = vmatmul.f32.gmra.mxu0 %v381
      %v989 = vpop.f32.mrf.mxu0
      %v990 = vadd.f32 %v377, %v989
      %991 = vmatmul.f32.gmra.mxu0 %v384
      %v992 = vpop.f32.mrf.mxu0
      %v993 = vadd.f32 %v377, %v992
      %994 = vmatmul.f32.gmra.mxu0 %v387
      %v995 = vpop.f32.mrf.mxu0
      %v996 = vadd.f32 %v377, %v995
      %997 = vmatmul.f32.gmra.mxu0 %v390
      %v998 = vpop.f32.mrf.mxu0
      %v999 = vadd.f32 %v377, %v998
      %1000 = vmatmul.f32.gmra.mxu0 %v393
      %v1001 = vpop.f32.mrf.mxu0
      %v1002 = vadd.f32 %v377, %v1001
      %1003 = vmatmul.f32.gmra.mxu0 %v396
      %v1004 = vpop.f32.mrf.mxu0
      %v1005 = vadd.f32 %v377, %v1004
      %1006 = vmatmul.f32.gmra.mxu0 %v399
      %v1007 = vpop.f32.mrf.mxu0
      %v1008 = vadd.f32 %v377, %v1007
      %1009 = vmatmul.f32.gmra.mxu0 %v402
      %v1010 = vpop.f32.mrf.mxu0
      %v1011 = vadd.f32 %v377, %v1010
      %1012 = vmatmul.f32.gmra.mxu0 %v405
      %v1013 = vpop.f32.mrf.mxu0
      %v1014 = vadd.f32 %v377, %v1013
      %1015 = vmatmul.f32.gmra.mxu0 %v408
      %v1016 = vpop.f32.mrf.mxu0
      %v1017 = vadd.f32 %v377, %v1016
      %1018 = vmatmul.f32.gmra.mxu0 %v411
      %v1019 = vpop.f32.mrf.mxu0
      %v1020 = vadd.f32 %v377, %v1019
      %1021 = vmatmul.f32.gmra.mxu0 %v414
      %v1022 = vpop.f32.mrf.mxu0
      %v1023 = vadd.f32 %v377, %v1022
      %1024 = vmatmul.f32.gmra.mxu0 %v417
      %v1025 = vpop.f32.mrf.mxu0
      %v1026 = vadd.f32 %v377, %v1025
      %1027 = vmatmul.f32.gmra.mxu0 %v420
      %v1028 = vpop.f32.mrf.mxu0
      %v1029 = vadd.f32 %v377, %v1028
      %1030 = vmatmul.f32.gmra.mxu0 %v423
      %v1031 = vpop.f32.mrf.mxu0
      %v1032 = vadd.f32 %v377, %v1031
      %1033 = vmatmul.f32.gmra.mxu0 %v426
      %v1034 = vpop.f32.mrf.mxu0
      %v1035 = vadd.f32 %v377, %v1034
      %1036 = vmatmul.f32.gmra.mxu0 %v429
      %v1037 = vpop.f32.mrf.mxu0
      %v1038 = vadd.f32 %v377, %v1037
      %1039 = vmatmul.f32.gmra.mxu0 %v432
      %v1040 = vpop.f32.mrf.mxu0
      %v1041 = vadd.f32 %v377, %v1040
      %1042 = vmatmul.f32.gmra.mxu0 %v435
      %v1043 = vpop.f32.mrf.mxu0
      %v1044 = vadd.f32 %v377, %v1043
      %1045 = vmatmul.f32.gmra.mxu0 %v438
      %v1046 = vpop.f32.mrf.mxu0
      %v1047 = vadd.f32 %v377, %v1046
      %1048 = vmatmul.f32.gmra.mxu0 %v441
      %v1049 = vpop.f32.mrf.mxu0
      %v1050 = vadd.f32 %v377, %v1049
      %1051 = vmatmul.f32.gmra.mxu0 %v444
      %v1052 = vpop.f32.mrf.mxu0
      %v1053 = vadd.f32 %v377, %v1052
      %1054 = vmatmul.f32.gmra.mxu0 %v447
      %v1055 = vpop.f32.mrf.mxu0
      %v1056 = vadd.f32 %v377, %v1055
      %1057 = vmatmul.f32.gmra.mxu0 %v450
      %v1058 = vpop.f32.mrf.mxu0
      %v1059 = vadd.f32 %v377, %v1058
      %1060 = vmatmul.f32.gmra.mxu0 %v453
      %v1061 = vpop.f32.mrf.mxu0
      %v1062 = vadd.f32 %v377, %v1061
      %1063 = vmatmul.f32.gmra.mxu0 %v456
      %v1064 = vpop.f32.mrf.mxu0
      %v1065 = vadd.f32 %v377, %v1064
      %1066 = vmatmul.f32.gmra.mxu0 %v459
      %v1067 = vpop.f32.mrf.mxu0
      %v1068 = vadd.f32 %v377, %v1067
      %1069 = vmatmul.f32.gmra.mxu0 %v462
      %v1070 = vpop.f32.mrf.mxu0
      %v1071 = vadd.f32 %v377, %v1070
      %1072 = vmatmul.f32.gmra.mxu0 %v465
      %v1073 = vpop.f32.mrf.mxu0
      %v1074 = vadd.f32 %v377, %v1073
      %1075 = vmatmul.f32.gmra.mxu0 %v468
      %v1076 = vpop.f32.mrf.mxu0
      %v1077 = vadd.f32 %v377, %v1076
      %1078 = vmatmul.f32.gmra.mxu0 %v471
      %v1079 = vpop.f32.mrf.mxu0
      %v1080 = vadd.f32 %v377, %v1079
      %1081 = vmatmul.f32.gmra.mxu0 %v474
      %v1082 = vpop.f32.mrf.mxu0
      %v1083 = vadd.f32 %v377, %v1082
      %1084 = vmatmul.f32.gmra.mxu0 %v477
      %v1085 = vpop.f32.mrf.mxu0
      %v1086 = vadd.f32 %v377, %v1085
      %1087 = vmatmul.f32.gmra.mxu0 %v480
      %v1088 = vpop.f32.mrf.mxu0
      %v1089 = vadd.f32 %v377, %v1088
      %1090 = vmatmul.f32.gmra.mxu0 %v483
      %v1091 = vpop.f32.mrf.mxu0
      %v1092 = vadd.f32 %v377, %v1091
      %1093 = vmatmul.f32.gmra.mxu0 %v486
      %v1094 = vpop.f32.mrf.mxu0
      %v1095 = vadd.f32 %v377, %v1094
      %1096 = vmatmul.f32.gmra.mxu0 %v489
      %v1097 = vpop.f32.mrf.mxu0
      %v1098 = vadd.f32 %v377, %v1097
      %1099 = vmatmul.f32.gmra.mxu0 %v492
      %v1100 = vpop.f32.mrf.mxu0
      %v1101 = vadd.f32 %v377, %v1100
      %1102 = vmatmul.f32.gmra.mxu0 %v495
      %v1103 = vpop.f32.mrf.mxu0
      %v1104 = vadd.f32 %v377, %v1103
      %1105 = vmatmul.f32.gmra.mxu0 %v498
      %v1106 = vpop.f32.mrf.mxu0
      %v1107 = vadd.f32 %v377, %v1106
      %1108 = vmatmul.f32.gmra.mxu0 %v501
      %v1109 = vpop.f32.mrf.mxu0
      %v1110 = vadd.f32 %v377, %v1109
      %1111 = vmatmul.f32.gmra.mxu0 %v504
      %v1112 = vpop.f32.mrf.mxu0
      %v1113 = vadd.f32 %v377, %v1112
      %1114 = vmatmul.f32.gmra.mxu0 %v507
      %v1115 = vpop.f32.mrf.mxu0
      %v1116 = vadd.f32 %v377, %v1115
      %1117 = vmatmul.f32.gmra.mxu0 %v510
      %v1118 = vpop.f32.mrf.mxu0
      %v1119 = vadd.f32 %v377, %v1118
      %1120 = vmatmul.f32.gmra.mxu0 %v513
      %v1121 = vpop.f32.mrf.mxu0
      %v1122 = vadd.f32 %v377, %v1121
      %1123 = vmatmul.f32.gmra.mxu0 %v516
      %v1124 = vpop.f32.mrf.mxu0
      %v1125 = vadd.f32 %v377, %v1124
      %1126 = vmatmul.f32.gmra.mxu0 %v519
      %v1127 = vpop.f32.mrf.mxu0
      %v1128 = vadd.f32 %v377, %v1127
      %1129 = vmatmul.f32.gmra.mxu0 %v522
      %v1130 = vpop.f32.mrf.mxu0
      %v1131 = vadd.f32 %v377, %v1130
      %1132 = vmatmul.f32.gmra.mxu0 %v525
      %v1133 = vpop.f32.mrf.mxu0
      %v1134 = vadd.f32 %v377, %v1133
      %1135 = vmatmul.f32.gmra.mxu0 %v528
      %v1136 = vpop.f32.mrf.mxu0
      %v1137 = vadd.f32 %v377, %v1136
      %1138 = vmatmul.f32.gmra.mxu0 %v531
      %v1139 = vpop.f32.mrf.mxu0
      %v1140 = vadd.f32 %v377, %v1139
      %1141 = vmatmul.f32.gmra.mxu0 %v534
      %v1142 = vpop.f32.mrf.mxu0
      %v1143 = vadd.f32 %v377, %v1142
      %1144 = vmatmul.f32.gmra.mxu0 %v537
      %v1145 = vpop.f32.mrf.mxu0
      %v1146 = vadd.f32 %v377, %v1145
      %1147 = vmatmul.f32.gmra.mxu0 %v540
      %v1148 = vpop.f32.mrf.mxu0
      %v1149 = vadd.f32 %v377, %v1148
      %1150 = vmatmul.f32.gmra.mxu0 %v543
      %v1151 = vpop.f32.mrf.mxu0
      %v1152 = vadd.f32 %v377, %v1151
      %1153 = vmatmul.f32.gmra.mxu0 %v546
      %v1154 = vpop.f32.mrf.mxu0
      %v1155 = vadd.f32 %v377, %v1154
      %1156 = vmatmul.f32.gmra.mxu0 %v549
      %v1157 = vpop.f32.mrf.mxu0
      %v1158 = vadd.f32 %v377, %v1157
      %1159 = vmatmul.f32.gmra.mxu0 %v552
      %v1160 = vpop.f32.mrf.mxu0
      %v1161 = vadd.f32 %v377, %v1160
      %1162 = vmatmul.f32.gmra.mxu0 %v555
      %v1163 = vpop.f32.mrf.mxu0
      %v1164 = vadd.f32 %v377, %v1163
      %1165 = vmatmul.f32.gmra.mxu0 %v558
      %v1166 = vpop.f32.mrf.mxu0
      %v1167 = vadd.f32 %v377, %v1166
      %1168 = vmatmul.f32.gmra.mxu0 %v561
      %v1169 = vpop.f32.mrf.mxu0
      %v1170 = vadd.f32 %v377, %v1169
      %1171 = vmatmul.f32.gmra.mxu0 %v564
      %v1172 = vpop.f32.mrf.mxu0
      %v1173 = vadd.f32 %v377, %v1172
      %1174 = vmatmul.f32.gmra.mxu0 %v567
      %v1175 = vpop.f32.mrf.mxu0
      %v1176 = vadd.f32 %v377, %v1175
      %1177 = vmatmul.f32.gmra.mxu0 %v570
      %v1178 = vpop.f32.mrf.mxu0
      %v1179 = vadd.f32 %v377, %v1178
      %1180 = vmatmul.f32.gmra.mxu0 %v573
      %v1181 = vpop.f32.mrf.mxu0
      %v1182 = vadd.f32 %v377, %v1181
      %1183 = vmatmul.f32.gmra.mxu0 %v576
      %v1184 = vpop.f32.mrf.mxu0
      %v1185 = vadd.f32 %v377, %v1184
      %1186 = vmatmul.f32.gmra.mxu0 %v579
      %v1187 = vpop.f32.mrf.mxu0
      %v1188 = vadd.f32 %v377, %v1187
      %1189 = vmatmul.f32.gmra.mxu0 %v582
      %v1190 = vpop.f32.mrf.mxu0
      %v1191 = vadd.f32 %v377, %v1190
      %1192 = vmatmul.f32.gmra.mxu0 %v585
      %v1193 = vpop.f32.mrf.mxu0
      %v1194 = vadd.f32 %v377, %v1193
      %1195 = vmatmul.f32.gmra.mxu0 %v588
      %v1196 = vpop.f32.mrf.mxu0
      %v1197 = vadd.f32 %v377, %v1196
      %1198 = vmatmul.f32.gmra.mxu0 %v591
      %v1199 = vpop.f32.mrf.mxu0
      %v1200 = vadd.f32 %v377, %v1199
      %1201 = vmatmul.f32.gmra.mxu0 %v594
      %v1202 = vpop.f32.mrf.mxu0
      %v1203 = vadd.f32 %v377, %v1202
      %1204 = vmatmul.f32.gmra.mxu0 %v597
      %v1205 = vpop.f32.mrf.mxu0
      %v1206 = vadd.f32 %v377, %v1205
      %1207 = vmatmul.f32.gmra.mxu0 %v600
      %v1208 = vpop.f32.mrf.mxu0
      %v1209 = vadd.f32 %v377, %v1208
      %1210 = vmatmul.f32.gmra.mxu0 %v603
      %v1211 = vpop.f32.mrf.mxu0
      %v1212 = vadd.f32 %v377, %v1211
      %1213 = vmatmul.f32.gmra.mxu0 %v606
      %v1214 = vpop.f32.mrf.mxu0
      %v1215 = vadd.f32 %v377, %v1214
      %1216 = vmatmul.f32.gmra.mxu0 %v609
      %v1217 = vpop.f32.mrf.mxu0
      %v1218 = vadd.f32 %v377, %v1217
      %1219 = vmatmul.f32.gmra.mxu0 %v612
      %v1220 = vpop.f32.mrf.mxu0
      %v1221 = vadd.f32 %v377, %v1220
      %1222 = vmatmul.f32.gmra.mxu0 %v615
      %v1223 = vpop.f32.mrf.mxu0
      %v1224 = vadd.f32 %v377, %v1223
      %1225 = vmatmul.f32.gmra.mxu0 %v618
      %v1226 = vpop.f32.mrf.mxu0
      %v1227 = vadd.f32 %v377, %v1226
      %1228 = vmatmul.f32.gmra.mxu0 %v621
      %v1229 = vpop.f32.mrf.mxu0
      %v1230 = vadd.f32 %v377, %v1229
      %1231 = vmatmul.f32.gmra.mxu0 %v624
      %v1232 = vpop.f32.mrf.mxu0
      %v1233 = vadd.f32 %v377, %v1232
      %1234 = vmatmul.f32.gmra.mxu0 %v627
      %v1235 = vpop.f32.mrf.mxu0
      %v1236 = vadd.f32 %v377, %v1235
      %1237 = vmatmul.f32.gmra.mxu0 %v630
      %v1238 = vpop.f32.mrf.mxu0
      %v1239 = vadd.f32 %v377, %v1238
      %1240 = vmatmul.f32.gmra.mxu0 %v633
      %v1241 = vpop.f32.mrf.mxu0
      %v1242 = vadd.f32 %v377, %v1241
      %1243 = vmatmul.f32.gmra.mxu0 %v636
      %v1244 = vpop.f32.mrf.mxu0
      %v1245 = vadd.f32 %v377, %v1244
      %1246 = vmatmul.f32.gmra.mxu0 %v639
      %v1247 = vpop.f32.mrf.mxu0
      %v1248 = vadd.f32 %v377, %v1247
      %1249 = vmatmul.f32.gmra.mxu0 %v642
      %v1250 = vpop.f32.mrf.mxu0
      %v1251 = vadd.f32 %v377, %v1250
      %1252 = vmatmul.f32.gmra.mxu0 %v645
      %v1253 = vpop.f32.mrf.mxu0
      %v1254 = vadd.f32 %v377, %v1253
      %1255 = vmatmul.f32.gmra.mxu0 %v648
      %v1256 = vpop.f32.mrf.mxu0
      %v1257 = vadd.f32 %v377, %v1256
      %1258 = vmatmul.f32.gmra.mxu0 %v651
      %v1259 = vpop.f32.mrf.mxu0
      %v1260 = vadd.f32 %v377, %v1259
      %1261 = vmatmul.f32.gmra.mxu0 %v654
      %v1262 = vpop.f32.mrf.mxu0
      %v1263 = vadd.f32 %v377, %v1262
      %1264 = vmatmul.f32.gmra.mxu0 %v657
      %v1265 = vpop.f32.mrf.mxu0
      %v1266 = vadd.f32 %v377, %v1265
      %1267 = vmatmul.f32.gmra.mxu0 %v660
      %v1268 = vpop.f32.mrf.mxu0
      %v1269 = vadd.f32 %v377, %v1268
      %1270 = vmatmul.f32.gmra.mxu0 %v663
      %v1271 = vpop.f32.mrf.mxu0
      %v1272 = vadd.f32 %v377, %v1271
      %1273 = vmatmul.f32.gmra.mxu0 %v666
      %v1274 = vpop.f32.mrf.mxu0
      %v1275 = vadd.f32 %v377, %v1274
      %1276 = vmatmul.f32.gmra.mxu0 %v669
      %v1277 = vpop.f32.mrf.mxu0
      %v1278 = vadd.f32 %v377, %v1277
      %1279 = vmatmul.f32.gmra.mxu0 %v672
      %v1280 = vpop.f32.mrf.mxu0
      %v1281 = vadd.f32 %v377, %v1280
      %1282 = vmatmul.f32.gmra.mxu0 %v675
      %v1283 = vpop.f32.mrf.mxu0
      %v1284 = vadd.f32 %v377, %v1283
      %1285 = vmatmul.f32.gmra.mxu0 %v678
      %v1286 = vpop.f32.mrf.mxu0
      %v1287 = vadd.f32 %v377, %v1286
      %1288 = vmatmul.f32.gmra.mxu0 %v681
      %v1289 = vpop.f32.mrf.mxu0
      %v1290 = vadd.f32 %v377, %v1289
      %1291 = vmatmul.f32.gmra.mxu0 %v684
      %v1292 = vpop.f32.mrf.mxu0
      %v1293 = vadd.f32 %v377, %v1292
      %1294 = vmatmul.f32.gmra.mxu0 %v687
      %v1295 = vpop.f32.mrf.mxu0
      %v1296 = vadd.f32 %v377, %v1295
      %1297 = vmatmul.f32.gmra.mxu0 %v690
      %v1298 = vpop.f32.mrf.mxu0
      %v1299 = vadd.f32 %v377, %v1298
      %1300 = vmatmul.f32.gmra.mxu0 %v693
      %v1301 = vpop.f32.mrf.mxu0
      %v1302 = vadd.f32 %v377, %v1301
      %1303 = vmatmul.f32.gmra.mxu0 %v696
      %v1304 = vpop.f32.mrf.mxu0
      %v1305 = vadd.f32 %v377, %v1304
      %1306 = vmatmul.f32.gmra.mxu0 %v699
      %v1307 = vpop.f32.mrf.mxu0
      %v1308 = vadd.f32 %v377, %v1307
      %1309 = vmatmul.f32.gmra.mxu0 %v702
      %v1310 = vpop.f32.mrf.mxu0
      %v1311 = vadd.f32 %v377, %v1310
      %1312 = vmatmul.f32.gmra.mxu0 %v705
      %v1313 = vpop.f32.mrf.mxu0
      %v1314 = vadd.f32 %v377, %v1313
      %1315 = vmatmul.f32.gmra.mxu0 %v708
      %v1316 = vpop.f32.mrf.mxu0
      %v1317 = vadd.f32 %v377, %v1316
      %1318 = vmatmul.f32.gmra.mxu0 %v711
      %v1319 = vpop.f32.mrf.mxu0
      %v1320 = vadd.f32 %v377, %v1319
      %1321 = vmatmul.f32.gmra.mxu0 %v714
      %v1322 = vpop.f32.mrf.mxu0
      %v1323 = vadd.f32 %v377, %v1322
      %1324 = vmatmul.f32.gmra.mxu0 %v717
      %v1325 = vpop.f32.mrf.mxu0
      %v1326 = vadd.f32 %v377, %v1325
      %1327 = vmatmul.f32.gmra.mxu0 %v720
      %v1328 = vpop.f32.mrf.mxu0
      %v1329 = vadd.f32 %v377, %v1328
      %1330 = vmatmul.f32.gmra.mxu0 %v723
      %v1331 = vpop.f32.mrf.mxu0
      %v1332 = vadd.f32 %v377, %v1331
      %1333 = vmatmul.f32.gmra.mxu0 %v726
      %v1334 = vpop.f32.mrf.mxu0
      %v1335 = vadd.f32 %v377, %v1334
      %1336 = vmatmul.f32.gmra.mxu0 %v729
      %v1337 = vpop.f32.mrf.mxu0
      %v1338 = vadd.f32 %v377, %v1337
      %1339 = vmatmul.f32.gmra.mxu0 %v732
      %v1340 = vpop.f32.mrf.mxu0
      %v1341 = vadd.f32 %v377, %v1340
      %1342 = vmatmul.f32.gmra.mxu0 %v735
      %v1343 = vpop.f32.mrf.mxu0
      %v1344 = vadd.f32 %v377, %v1343
      %1345 = vmatmul.f32.gmra.mxu0 %v738
      %v1346 = vpop.f32.mrf.mxu0
      %v1347 = vadd.f32 %v377, %v1346
      %1348 = vmatmul.f32.gmra.mxu0 %v741
      %v1349 = vpop.f32.mrf.mxu0
      %v1350 = vadd.f32 %v377, %v1349
      %1351 = vmatmul.f32.gmra.mxu0 %v744
      %v1352 = vpop.f32.mrf.mxu0
      %v1353 = vadd.f32 %v377, %v1352
      %1354 = vmatmul.f32.gmra.mxu0 %v747
      %v1355 = vpop.f32.mrf.mxu0
      %v1356 = vadd.f32 %v377, %v1355
      %1357 = vmatmul.f32.gmra.mxu0 %v750
      %v1358 = vpop.f32.mrf.mxu0
      %v1359 = vadd.f32 %v377, %v1358
      %1360 = vmatmul.f32.gmra.mxu0 %v753
      %v1361 = vpop.f32.mrf.mxu0
      %v1362 = vadd.f32 %v377, %v1361
      %1363 = vmatmul.f32.gmra.mxu0 %v756
      %v1364 = vpop.f32.mrf.mxu0
      %v1365 = vadd.f32 %v377, %v1364
      %1366 = vmatmul.f32.gmra.mxu0 %v759
      %v1367 = vpop.f32.mrf.mxu0
      %v1368 = vadd.f32 %v377, %v1367
      %1369 = vmatmul.f32.gmra.mxu0 %v762
      %v1370 = vpop.f32.mrf.mxu0
      %v1371 = vadd.f32 %v377, %v1370
      %1372 = vmatmul.f32.gmra.mxu0 %v765
      %v1373 = vpop.f32.mrf.mxu0
      %v1374 = vadd.f32 %v377, %v1373
      %1375 = vmatmul.f32.gmra.mxu0 %v768
      %v1376 = vpop.f32.mrf.mxu0
      %v1377 = vadd.f32 %v377, %v1376
      %1378 = vmatmul.f32.gmra.mxu0 %v771
      %v1379 = vpop.f32.mrf.mxu0
      %v1380 = vadd.f32 %v377, %v1379
      %1381 = vmatmul.f32.gmra.mxu0 %v774
      %v1382 = vpop.f32.mrf.mxu0
      %v1383 = vadd.f32 %v377, %v1382
      %1384 = vmatmul.f32.gmra.mxu0 %v777
      %v1385 = vpop.f32.mrf.mxu0
      %v1386 = vadd.f32 %v377, %v1385
      %1387 = vmatmul.f32.gmra.mxu0 %v780
      %v1388 = vpop.f32.mrf.mxu0
      %v1389 = vadd.f32 %v377, %v1388
      %1390 = vmatmul.f32.gmra.mxu0 %v783
      %v1391 = vpop.f32.mrf.mxu0
      %v1392 = vadd.f32 %v377, %v1391
      %1393 = vmatmul.f32.gmra.mxu0 %v786
      %v1394 = vpop.f32.mrf.mxu0
      %v1395 = vadd.f32 %v377, %v1394
      %1396 = vmatmul.f32.gmra.mxu0 %v789
      %v1397 = vpop.f32.mrf.mxu0
      %v1398 = vadd.f32 %v377, %v1397
      %1399 = vmatmul.f32.gmra.mxu0 %v792
      %v1400 = vpop.f32.mrf.mxu0
      %v1401 = vadd.f32 %v377, %v1400
      %1402 = vmatmul.f32.gmra.mxu0 %v795
      %v1403 = vpop.f32.mrf.mxu0
      %v1404 = vadd.f32 %v377, %v1403
      %1405 = vmatmul.f32.gmra.mxu0 %v798
      %v1406 = vpop.f32.mrf.mxu0
      %v1407 = vadd.f32 %v377, %v1406
      %1408 = vmatmul.f32.gmra.mxu0 %v801
      %v1409 = vpop.f32.mrf.mxu0
      %v1410 = vadd.f32 %v377, %v1409
      %1411 = vmatmul.f32.gmra.mxu0 %v804
      %v1412 = vpop.f32.mrf.mxu0
      %v1413 = vadd.f32 %v377, %v1412
      %1414 = vmatmul.f32.gmra.mxu0 %v807
      %v1415 = vpop.f32.mrf.mxu0
      %v1416 = vadd.f32 %v377, %v1415
      %1417 = vmatmul.f32.gmra.mxu0 %v810
      %v1418 = vpop.f32.mrf.mxu0
      %v1419 = vadd.f32 %v377, %v1418
      %1420 = vmatmul.f32.gmra.mxu0 %v813
      %v1421 = vpop.f32.mrf.mxu0
      %v1422 = vadd.f32 %v377, %v1421
      %1423 = vmatmul.f32.gmra.mxu0 %v816
      %v1424 = vpop.f32.mrf.mxu0
      %v1425 = vadd.f32 %v377, %v1424
      %1426 = vmatmul.f32.gmra.mxu0 %v819
      %v1427 = vpop.f32.mrf.mxu0
      %v1428 = vadd.f32 %v377, %v1427
      %1429 = vmatmul.f32.gmra.mxu0 %v822
      %v1430 = vpop.f32.mrf.mxu0
      %v1431 = vadd.f32 %v377, %v1430
      %1432 = vmatmul.f32.gmra.mxu0 %v825
      %v1433 = vpop.f32.mrf.mxu0
      %v1434 = vadd.f32 %v377, %v1433
      %1435 = vmatmul.f32.gmra.mxu0 %v828
      %v1436 = vpop.f32.mrf.mxu0
      %v1437 = vadd.f32 %v377, %v1436
      %1438 = vmatmul.f32.gmra.mxu0 %v831
      %v1439 = vpop.f32.mrf.mxu0
      %v1440 = vadd.f32 %v377, %v1439
      %1441 = vmatmul.f32.gmra.mxu0 %v834
      %v1442 = vpop.f32.mrf.mxu0
      %v1443 = vadd.f32 %v377, %v1442
      %1444 = vmatmul.f32.gmra.mxu0 %v837
      %v1445 = vpop.f32.mrf.mxu0
      %v1446 = vadd.f32 %v377, %v1445
      %1447 = vmatmul.f32.gmra.mxu0 %v840
      %v1448 = vpop.f32.mrf.mxu0
      %v1449 = vadd.f32 %v377, %v1448
      %1450 = vmatmul.f32.gmra.mxu0 %v843
      %v1451 = vpop.f32.mrf.mxu0
      %v1452 = vadd.f32 %v377, %v1451
      %1453 = vmatmul.f32.gmra.mxu0 %v846
      %v1454 = vpop.f32.mrf.mxu0
      %v1455 = vadd.f32 %v377, %v1454
      %1456 = vmatmul.f32.gmra.mxu0 %v849
      %v1457 = vpop.f32.mrf.mxu0
      %v1458 = vadd.f32 %v377, %v1457
      %1459 = vmatmul.f32.gmra.mxu0 %v852
      %v1460 = vpop.f32.mrf.mxu0
      %v1461 = vadd.f32 %v377, %v1460
      %1462 = vmatmul.f32.gmra.mxu0 %v855
      %v1463 = vpop.f32.mrf.mxu0
      %v1464 = vadd.f32 %v377, %v1463
      %1465 = vmatmul.f32.gmra.mxu0 %v858
      %v1466 = vpop.f32.mrf.mxu0
      %v1467 = vadd.f32 %v377, %v1466
      %1468 = vmatmul.f32.gmra.mxu0 %v861
      %v1469 = vpop.f32.mrf.mxu0
      %v1470 = vadd.f32 %v377, %v1469
      %1471 = vmatmul.f32.gmra.mxu0 %v864
      %v1472 = vpop.f32.mrf.mxu0
      %v1473 = vadd.f32 %v377, %v1472
      %1474 = vmatmul.f32.gmra.mxu0 %v867
      %v1475 = vpop.f32.mrf.mxu0
      %v1476 = vadd.f32 %v377, %v1475
      %1477 = vmatmul.f32.gmra.mxu0 %v870
      %v1478 = vpop.f32.mrf.mxu0
      %v1479 = vadd.f32 %v377, %v1478
      %1480 = vmatmul.f32.gmra.mxu0 %v873
      %v1481 = vpop.f32.mrf.mxu0
      %v1482 = vadd.f32 %v377, %v1481
      %1483 = vmatmul.f32.gmra.mxu0 %v876
      %v1484 = vpop.f32.mrf.mxu0
      %v1485 = vadd.f32 %v377, %v1484
      %1486 = vmatmul.f32.gmra.mxu0 %v879
      %v1487 = vpop.f32.mrf.mxu0
      %v1488 = vadd.f32 %v377, %v1487
      %1489 = vmatmul.f32.gmra.mxu0 %v882
      %v1490 = vpop.f32.mrf.mxu0
      %v1491 = vadd.f32 %v377, %v1490
      %1492 = vmatmul.f32.gmra.mxu0 %v885
      %v1493 = vpop.f32.mrf.mxu0
      %v1494 = vadd.f32 %v377, %v1493
      %1495 = vmatmul.f32.gmra.mxu0 %v888
      %v1496 = vpop.f32.mrf.mxu0
      %v1497 = vadd.f32 %v377, %v1496
      %1498 = vmatmul.f32.gmra.mxu0 %v891
      %v1499 = vpop.f32.mrf.mxu0
      %v1500 = vadd.f32 %v377, %v1499
      %1501 = vmatmul.f32.gmra.mxu0 %v894
      %v1502 = vpop.f32.mrf.mxu0
      %v1503 = vadd.f32 %v377, %v1502
      %1504 = vmatmul.f32.gmra.mxu0 %v897
      %v1505 = vpop.f32.mrf.mxu0
      %v1506 = vadd.f32 %v377, %v1505
      %1507 = vmatmul.f32.gmra.mxu0 %v900
      %v1508 = vpop.f32.mrf.mxu0
      %v1509 = vadd.f32 %v377, %v1508
      %1510 = vmatmul.f32.gmra.mxu0 %v903
      %v1511 = vpop.f32.mrf.mxu0
      %v1512 = vadd.f32 %v377, %v1511
      %1513 = vmatmul.f32.gmra.mxu0 %v906
      %v1514 = vpop.f32.mrf.mxu0
      %v1515 = vadd.f32 %v377, %v1514
      %1516 = vmatmul.f32.gmra.mxu0 %v909
      %v1517 = vpop.f32.mrf.mxu0
      %v1518 = vadd.f32 %v377, %v1517
      %1519 = vmatmul.f32.gmra.mxu0 %v912
      %v1520 = vpop.f32.mrf.mxu0
      %v1521 = vadd.f32 %v377, %v1520
      %1522 = vmatmul.f32.gmra.mxu0 %v915
      %v1523 = vpop.f32.mrf.mxu0
      %v1524 = vadd.f32 %v377, %v1523
      %1525 = vmatmul.f32.gmra.mxu0 %v918
      %v1526 = vpop.f32.mrf.mxu0
      %v1527 = vadd.f32 %v377, %v1526
      %1528 = vmatmul.f32.gmra.mxu0 %v921
      %v1529 = vpop.f32.mrf.mxu0
      %v1530 = vadd.f32 %v377, %v1529
      %1531 = vmatmul.f32.gmra.mxu0 %v924
      %v1532 = vpop.f32.mrf.mxu0
      %v1533 = vadd.f32 %v377, %v1532
      %1534 = vmatmul.f32.gmra.mxu0 %v927
      %v1535 = vpop.f32.mrf.mxu0
      %v1536 = vadd.f32 %v377, %v1535
      %1537 = vmatmul.f32.gmra.mxu0 %v930
      %v1538 = vpop.f32.mrf.mxu0
      %v1539 = vadd.f32 %v377, %v1538
      %1540 = vmatmul.f32.gmra.mxu0 %v933
      %v1541 = vpop.f32.mrf.mxu0
      %v1542 = vadd.f32 %v377, %v1541
      %1543 = vmatmul.f32.gmra.mxu0 %v936
      %v1544 = vpop.f32.mrf.mxu0
      %v1545 = vadd.f32 %v377, %v1544
      %1546 = vmatmul.f32.gmra.mxu0 %v939
      %v1547 = vpop.f32.mrf.mxu0
      %v1548 = vadd.f32 %v377, %v1547
      %1549 = vmatmul.f32.gmra.mxu0 %v942
      %v1550 = vpop.f32.mrf.mxu0
      %v1551 = vadd.f32 %v377, %v1550
      %1552 = vmatmul.f32.gmra.mxu0 %v945
      %v1553 = vpop.f32.mrf.mxu0
      %v1554 = vadd.f32 %v377, %v1553
      %1555 = vmatmul.f32.gmra.mxu0 %v948
      %v1556 = vpop.f32.mrf.mxu0
      %v1557 = vadd.f32 %v377, %v1556
      %1558 = vmatmul.f32.gmra.mxu0 %v951
      %v1559 = vpop.f32.mrf.mxu0
      %v1560 = vadd.f32 %v377, %v1559
      %1561 = vmatmul.f32.gmra.mxu0 %v954
      %v1562 = vpop.f32.mrf.mxu0
      %v1563 = vadd.f32 %v377, %v1562
      %1564 = vmatmul.f32.gmra.mxu0 %v957
      %v1565 = vpop.f32.mrf.mxu0
      %v1566 = vadd.f32 %v377, %v1565
      %1567 = vmatmul.f32.gmra.mxu0 %v960
      %v1568 = vpop.f32.mrf.mxu0
      %v1569 = vadd.f32 %v377, %v1568
      %1570 = vmatmul.f32.gmra.mxu0 %v963
      %v1571 = vpop.f32.mrf.mxu0
      %v1572 = vadd.f32 %v377, %v1571
      %1573 = vmatmul.f32.gmra.mxu0 %v966
      %v1574 = vpop.f32.mrf.mxu0
      %v1575 = vadd.f32 %v377, %v1574
      %1576 = vdwg.mxu0
      %v1577 = vmax.f32 %v990, 0.0
      %v1578 = vmax.f32 %v993, 0.0
      %v1579 = vmax.f32 %v996, 0.0
      %v1580 = vmax.f32 %v999, 0.0
      %v1581 = vmax.f32 %v1002, 0.0
      %v1582 = vmax.f32 %v1005, 0.0
      %v1583 = vmax.f32 %v1008, 0.0
      %v1584 = vmax.f32 %v1011, 0.0
      %v1585 = vmax.f32 %v1014, 0.0
      %v1586 = vmax.f32 %v1017, 0.0
      %v1587 = vmax.f32 %v1020, 0.0
      %v1588 = vmax.f32 %v1023, 0.0
      %v1589 = vmax.f32 %v1026, 0.0
      %v1590 = vmax.f32 %v1029, 0.0
      %v1591 = vmax.f32 %v1032, 0.0
      %v1592 = vmax.f32 %v1035, 0.0
      %v1593 = vmax.f32 %v1038, 0.0
      %v1594 = vmax.f32 %v1041, 0.0
      %v1595 = vmax.f32 %v1044, 0.0
      %v1596 = vmax.f32 %v1047, 0.0
      %v1597 = vmax.f32 %v1050, 0.0
      %v1598 = vmax.f32 %v1053, 0.0
      %v1599 = vmax.f32 %v1056, 0.0
      %v1600 = vmax.f32 %v1059, 0.0
      %v1601 = vmax.f32 %v1062, 0.0
      %v1602 = vmax.f32 %v1065, 0.0
      %v1603 = vmax.f32 %v1068, 0.0
      %v1604 = vmax.f32 %v1071, 0.0
      %v1605 = vmax.f32 %v1074, 0.0
      %v1606 = vmax.f32 %v1077, 0.0
      %v1607 = vmax.f32 %v1080, 0.0
      %v1608 = vmax.f32 %v1083, 0.0
      %v1609 = vmax.f32 %v1086, 0.0
      %v1610 = vmax.f32 %v1089, 0.0
      %v1611 = vmax.f32 %v1092, 0.0
      %v1612 = vmax.f32 %v1095, 0.0
      %v1613 = vmax.f32 %v1098, 0.0
      %v1614 = vmax.f32 %v1101, 0.0
      %v1615 = vmax.f32 %v1104, 0.0
      %v1616 = vmax.f32 %v1107, 0.0
      %v1617 = vmax.f32 %v1110, 0.0
      %v1618 = vmax.f32 %v1113, 0.0
      %v1619 = vmax.f32 %v1116, 0.0
      %v1620 = vmax.f32 %v1119, 0.0
      %v1621 = vmax.f32 %v1122, 0.0
      %v1622 = vmax.f32 %v1125, 0.0
      %v1623 = vmax.f32 %v1128, 0.0
      %v1624 = vmax.f32 %v1131, 0.0
      %v1625 = vmax.f32 %v1134, 0.0
      %v1626 = vmax.f32 %v1137, 0.0
      %v1627 = vmax.f32 %v1140, 0.0
      %v1628 = vmax.f32 %v1143, 0.0
      %v1629 = vmax.f32 %v1146, 0.0
      %v1630 = vmax.f32 %v1149, 0.0
      %v1631 = vmax.f32 %v1152, 0.0
      %v1632 = vmax.f32 %v1155, 0.0
      %v1633 = vmax.f32 %v1158, 0.0
      %v1634 = vmax.f32 %v1161, 0.0
      %v1635 = vmax.f32 %v1164, 0.0
      %v1636 = vmax.f32 %v1167, 0.0
      %v1637 = vmax.f32 %v1170, 0.0
      %v1638 = vmax.f32 %v1173, 0.0
      %v1639 = vmax.f32 %v1176, 0.0
      %v1640 = vmax.f32 %v1179, 0.0
      %v1641 = vmax.f32 %v1182, 0.0
      %v1642 = vmax.f32 %v1185, 0.0
      %v1643 = vmax.f32 %v1188, 0.0
      %v1644 = vmax.f32 %v1191, 0.0
      %v1645 = vmax.f32 %v1194, 0.0
      %v1646 = vmax.f32 %v1197, 0.0
      %v1647 = vmax.f32 %v1200, 0.0
      %v1648 = vmax.f32 %v1203, 0.0
      %v1649 = vmax.f32 %v1206, 0.0
      %v1650 = vmax.f32 %v1209, 0.0
      %v1651 = vmax.f32 %v1212, 0.0
      %v1652 = vmax.f32 %v1215, 0.0
      %v1653 = vmax.f32 %v1218, 0.0
      %v1654 = vmax.f32 %v1221, 0.0
      %v1655 = vmax.f32 %v1224, 0.0
      %v1656 = vmax.f32 %v1227, 0.0
      %v1657 = vmax.f32 %v1230, 0.0
      %v1658 = vmax.f32 %v1233, 0.0
      %v1659 = vmax.f32 %v1236, 0.0
      %v1660 = vmax.f32 %v1239, 0.0
      %v1661 = vmax.f32 %v1242, 0.0
      %v1662 = vmax.f32 %v1245, 0.0
      %v1663 = vmax.f32 %v1248, 0.0
      %v1664 = vmax.f32 %v1251, 0.0
      %v1665 = vmax.f32 %v1254, 0.0
      %v1666 = vmax.f32 %v1257, 0.0
      %v1667 = vmax.f32 %v1260, 0.0
      %v1668 = vmax.f32 %v1263, 0.0
      %v1669 = vmax.f32 %v1266, 0.0
      %v1670 = vmax.f32 %v1269, 0.0
      %v1671 = vmax.f32 %v1272, 0.0
      %v1672 = vmax.f32 %v1275, 0.0
      %v1673 = vmax.f32 %v1278, 0.0
      %v1674 = vmax.f32 %v1281, 0.0
      %v1675 = vmax.f32 %v1284, 0.0
      %v1676 = vmax.f32 %v1287, 0.0
      %v1677 = vmax.f32 %v1290, 0.0
      %v1678 = vmax.f32 %v1293, 0.0
      %v1679 = vmax.f32 %v1296, 0.0
      %v1680 = vmax.f32 %v1299, 0.0
      %v1681 = vmax.f32 %v1302, 0.0
      %v1682 = vmax.f32 %v1305, 0.0
      %v1683 = vmax.f32 %v1308, 0.0
      %v1684 = vmax.f32 %v1311, 0.0
      %v1685 = vmax.f32 %v1314, 0.0
      %v1686 = vmax.f32 %v1317, 0.0
      %v1687 = vmax.f32 %v1320, 0.0
      %v1688 = vmax.f32 %v1323, 0.0
      %v1689 = vmax.f32 %v1326, 0.0
      %v1690 = vmax.f32 %v1329, 0.0
      %v1691 = vmax.f32 %v1332, 0.0
      %v1692 = vmax.f32 %v1335, 0.0
      %v1693 = vmax.f32 %v1338, 0.0
      %v1694 = vmax.f32 %v1341, 0.0
      %v1695 = vmax.f32 %v1344, 0.0
      %v1696 = vmax.f32 %v1347, 0.0
      %v1697 = vmax.f32 %v1350, 0.0
      %v1698 = vmax.f32 %v1353, 0.0
      %v1699 = vmax.f32 %v1356, 0.0
      %v1700 = vmax.f32 %v1359, 0.0
      %v1701 = vmax.f32 %v1362, 0.0
      %v1702 = vmax.f32 %v1365, 0.0
      %v1703 = vmax.f32 %v1368, 0.0
      %v1704 = vmax.f32 %v1371, 0.0
      %v1705 = vmax.f32 %v1374, 0.0
      %v1706 = vmax.f32 %v1377, 0.0
      %v1707 = vmax.f32 %v1380, 0.0
      %v1708 = vmax.f32 %v1383, 0.0
      %v1709 = vmax.f32 %v1386, 0.0
      %v1710 = vmax.f32 %v1389, 0.0
      %v1711 = vmax.f32 %v1392, 0.0
      %v1712 = vmax.f32 %v1395, 0.0
      %v1713 = vmax.f32 %v1398, 0.0
      %v1714 = vmax.f32 %v1401, 0.0
      %v1715 = vmax.f32 %v1404, 0.0
      %v1716 = vmax.f32 %v1407, 0.0
      %v1717 = vmax.f32 %v1410, 0.0
      %v1718 = vmax.f32 %v1413, 0.0
      %v1719 = vmax.f32 %v1416, 0.0
      %v1720 = vmax.f32 %v1419, 0.0
      %v1721 = vmax.f32 %v1422, 0.0
      %v1722 = vmax.f32 %v1425, 0.0
      %v1723 = vmax.f32 %v1428, 0.0
      %v1724 = vmax.f32 %v1431, 0.0
      %v1725 = vmax.f32 %v1434, 0.0
      %v1726 = vmax.f32 %v1437, 0.0
      %v1727 = vmax.f32 %v1440, 0.0
      %v1728 = vmax.f32 %v1443, 0.0
      %v1729 = vmax.f32 %v1446, 0.0
      %v1730 = vmax.f32 %v1449, 0.0
      %v1731 = vmax.f32 %v1452, 0.0
      %v1732 = vmax.f32 %v1455, 0.0
      %v1733 = vmax.f32 %v1458, 0.0
      %v1734 = vmax.f32 %v1461, 0.0
      %v1735 = vmax.f32 %v1464, 0.0
      %v1736 = vmax.f32 %v1467, 0.0
      %v1737 = vmax.f32 %v1470, 0.0
      %v1738 = vmax.f32 %v1473, 0.0
      %v1739 = vmax.f32 %v1476, 0.0
      %v1740 = vmax.f32 %v1479, 0.0
      %v1741 = vmax.f32 %v1482, 0.0
      %v1742 = vmax.f32 %v1485, 0.0
      %v1743 = vmax.f32 %v1488, 0.0
      %v1744 = vmax.f32 %v1491, 0.0
      %v1745 = vmax.f32 %v1494, 0.0
      %v1746 = vmax.f32 %v1497, 0.0
      %v1747 = vmax.f32 %v1500, 0.0
      %v1748 = vmax.f32 %v1503, 0.0
      %v1749 = vmax.f32 %v1506, 0.0
      %v1750 = vmax.f32 %v1509, 0.0
      %v1751 = vmax.f32 %v1512, 0.0
      %v1752 = vmax.f32 %v1515, 0.0
      %v1753 = vmax.f32 %v1518, 0.0
      %v1754 = vmax.f32 %v1521, 0.0
      %v1755 = vmax.f32 %v1524, 0.0
      %v1756 = vmax.f32 %v1527, 0.0
      %v1757 = vmax.f32 %v1530, 0.0
      %v1758 = vmax.f32 %v1533, 0.0
      %v1759 = vmax.f32 %v1536, 0.0
      %v1760 = vmax.f32 %v1539, 0.0
      %v1761 = vmax.f32 %v1542, 0.0
      %v1762 = vmax.f32 %v1545, 0.0
      %v1763 = vmax.f32 %v1548, 0.0
      %v1764 = vmax.f32 %v1551, 0.0
      %v1765 = vmax.f32 %v1554, 0.0
      %v1766 = vmax.f32 %v1557, 0.0
      %v1767 = vmax.f32 %v1560, 0.0
      %v1768 = vmax.f32 %v1563, 0.0
      %v1769 = vmax.f32 %v1566, 0.0
      %v1770 = vmax.f32 %v1569, 0.0
      %v1771 = vmax.f32 %v1572, 0.0
      %v1772 = vmax.f32 %v1575, 0.0
      %vm1773 = vcmask 130048
      %1774 = vst.msk [vmem:[%s172] sm:$0xff] %vm1773, %v1577
      %1775 = vst.msk [vmem:[%s172 + $0x8] sm:$0xff] %vm1773, %v1578
      %1776 = vst.msk [vmem:[%s172 + $0x10] sm:$0xff] %vm1773, %v1579
      %1777 = vst.msk [vmem:[%s172 + $0x18] sm:$0xff] %vm1773, %v1580
      %1778 = vst.msk [vmem:[%s172 + $0x20] sm:$0xff] %vm1773, %v1581
      %1779 = vst.msk [vmem:[%s172 + $0x28] sm:$0xff] %vm1773, %v1582
      %1780 = vst.msk [vmem:[%s172 + $0x30] sm:$0xff] %vm1773, %v1583
      %1781 = vst.msk [vmem:[%s172 + $0x38] sm:$0xff] %vm1773, %v1584
      %1782 = vst.msk [vmem:[%s172 + $0x40] sm:$0xff] %vm1773, %v1585
      %1783 = vst.msk [vmem:[%s172 + $0x48] sm:$0xff] %vm1773, %v1586
      %1784 = vst.msk [vmem:[%s172 + $0x50] sm:$0xff] %vm1773, %v1587
      %1785 = vst.msk [vmem:[%s172 + $0x58] sm:$0xff] %vm1773, %v1588
      %1786 = vst.msk [vmem:[%s172 + $0x60] sm:$0xff] %vm1773, %v1589
      %1787 = vst.msk [vmem:[%s172 + $0x68] sm:$0xff] %vm1773, %v1590
      %1788 = vst.msk [vmem:[%s172 + $0x70] sm:$0xff] %vm1773, %v1591
      %1789 = vst.msk [vmem:[%s172 + $0x78] sm:$0xff] %vm1773, %v1592
      %1790 = vst.msk [vmem:[%s172 + $0x80] sm:$0xff] %vm1773, %v1593
      %1791 = vst.msk [vmem:[%s172 + $0x88] sm:$0xff] %vm1773, %v1594
      %1792 = vst.msk [vmem:[%s172 + $0x90] sm:$0xff] %vm1773, %v1595
      %1793 = vst.msk [vmem:[%s172 + $0x98] sm:$0xff] %vm1773, %v1596
      %1794 = vst.msk [vmem:[%s172 + $0xa0] sm:$0xff] %vm1773, %v1597
      %1795 = vst.msk [vmem:[%s172 + $0xa8] sm:$0xff] %vm1773, %v1598
      %1796 = vst.msk [vmem:[%s172 + $0xb0] sm:$0xff] %vm1773, %v1599
      %1797 = vst.msk [vmem:[%s172 + $0xb8] sm:$0xff] %vm1773, %v1600
      %1798 = vst.msk [vmem:[%s172 + $0xc0] sm:$0xff] %vm1773, %v1601
      %1799 = vst.msk [vmem:[%s172 + $0xc8] sm:$0xff] %vm1773, %v1602
      %1800 = vst.msk [vmem:[%s172 + $0xd0] sm:$0xff] %vm1773, %v1603
      %1801 = vst.msk [vmem:[%s172 + $0xd8] sm:$0xff] %vm1773, %v1604
      %1802 = vst.msk [vmem:[%s172 + $0xe0] sm:$0xff] %vm1773, %v1605
      %1803 = vst.msk [vmem:[%s172 + $0xe8] sm:$0xff] %vm1773, %v1606
      %1804 = vst.msk [vmem:[%s172 + $0xf0] sm:$0xff] %vm1773, %v1607
      %1805 = vst.msk [vmem:[%s172 + $0xf8] sm:$0xff] %vm1773, %v1608
      %1806 = vst.msk [vmem:[%s172 + $0x100] sm:$0xff] %vm1773, %v1609
      %1807 = vst.msk [vmem:[%s172 + $0x108] sm:$0xff] %vm1773, %v1610
      %1808 = vst.msk [vmem:[%s172 + $0x110] sm:$0xff] %vm1773, %v1611
      %1809 = vst.msk [vmem:[%s172 + $0x118] sm:$0xff] %vm1773, %v1612
      %1810 = vst.msk [vmem:[%s172 + $0x120] sm:$0xff] %vm1773, %v1613
      %1811 = vst.msk [vmem:[%s172 + $0x128] sm:$0xff] %vm1773, %v1614
      %1812 = vst.msk [vmem:[%s172 + $0x130] sm:$0xff] %vm1773, %v1615
      %1813 = vst.msk [vmem:[%s172 + $0x138] sm:$0xff] %vm1773, %v1616
      %1814 = vst.msk [vmem:[%s172 + $0x140] sm:$0xff] %vm1773, %v1617
      %1815 = vst.msk [vmem:[%s172 + $0x148] sm:$0xff] %vm1773, %v1618
      %1816 = vst.msk [vmem:[%s172 + $0x150] sm:$0xff] %vm1773, %v1619
      %1817 = vst.msk [vmem:[%s172 + $0x158] sm:$0xff] %vm1773, %v1620
      %1818 = vst.msk [vmem:[%s172 + $0x160] sm:$0xff] %vm1773, %v1621
      %1819 = vst.msk [vmem:[%s172 + $0x168] sm:$0xff] %vm1773, %v1622
      %1820 = vst.msk [vmem:[%s172 + $0x170] sm:$0xff] %vm1773, %v1623
      %1821 = vst.msk [vmem:[%s172 + $0x178] sm:$0xff] %vm1773, %v1624
      %1822 = vst.msk [vmem:[%s172 + $0x180] sm:$0xff] %vm1773, %v1625
      %1823 = vst.msk [vmem:[%s172 + $0x188] sm:$0xff] %vm1773, %v1626
      %1824 = vst.msk [vmem:[%s172 + $0x190] sm:$0xff] %vm1773, %v1627
      %1825 = vst.msk [vmem:[%s172 + $0x198] sm:$0xff] %vm1773, %v1628
      %1826 = vst.msk [vmem:[%s172 + $0x1a0] sm:$0xff] %vm1773, %v1629
      %1827 = vst.msk [vmem:[%s172 + $0x1a8] sm:$0xff] %vm1773, %v1630
      %1828 = vst.msk [vmem:[%s172 + $0x1b0] sm:$0xff] %vm1773, %v1631
      %1829 = vst.msk [vmem:[%s172 + $0x1b8] sm:$0xff] %vm1773, %v1632
      %1830 = vst.msk [vmem:[%s172 + $0x1c0] sm:$0xff] %vm1773, %v1633
      %1831 = vst.msk [vmem:[%s172 + $0x1c8] sm:$0xff] %vm1773, %v1634
      %1832 = vst.msk [vmem:[%s172 + $0x1d0] sm:$0xff] %vm1773, %v1635
      %1833 = vst.msk [vmem:[%s172 + $0x1d8] sm:$0xff] %vm1773, %v1636
      %1834 = vst.msk [vmem:[%s172 + $0x1e0] sm:$0xff] %vm1773, %v1637
      %1835 = vst.msk [vmem:[%s172 + $0x1e8] sm:$0xff] %vm1773, %v1638
      %1836 = vst.msk [vmem:[%s172 + $0x1f0] sm:$0xff] %vm1773, %v1639
      %1837 = vst.msk [vmem:[%s172 + $0x1f8] sm:$0xff] %vm1773, %v1640
      %1838 = vst.msk [vmem:[%s172 + $0x200] sm:$0xff] %vm1773, %v1641
      %1839 = vst.msk [vmem:[%s172 + $0x208] sm:$0xff] %vm1773, %v1642
      %1840 = vst.msk [vmem:[%s172 + $0x210] sm:$0xff] %vm1773, %v1643
      %1841 = vst.msk [vmem:[%s172 + $0x218] sm:$0xff] %vm1773, %v1644
      %1842 = vst.msk [vmem:[%s172 + $0x220] sm:$0xff] %vm1773, %v1645
      %1843 = vst.msk [vmem:[%s172 + $0x228] sm:$0xff] %vm1773, %v1646
      %1844 = vst.msk [vmem:[%s172 + $0x230] sm:$0xff] %vm1773, %v1647
      %1845 = vst.msk [vmem:[%s172 + $0x238] sm:$0xff] %vm1773, %v1648
      %1846 = vst.msk [vmem:[%s172 + $0x240] sm:$0xff] %vm1773, %v1649
      %1847 = vst.msk [vmem:[%s172 + $0x248] sm:$0xff] %vm1773, %v1650
      %1848 = vst.msk [vmem:[%s172 + $0x250] sm:$0xff] %vm1773, %v1651
      %1849 = vst.msk [vmem:[%s172 + $0x258] sm:$0xff] %vm1773, %v1652
      %1850 = vst.msk [vmem:[%s172 + $0x260] sm:$0xff] %vm1773, %v1653
      %1851 = vst.msk [vmem:[%s172 + $0x268] sm:$0xff] %vm1773, %v1654
      %1852 = vst.msk [vmem:[%s172 + $0x270] sm:$0xff] %vm1773, %v1655
      %1853 = vst.msk [vmem:[%s172 + $0x278] sm:$0xff] %vm1773, %v1656
      %1854 = vst.msk [vmem:[%s172 + $0x280] sm:$0xff] %vm1773, %v1657
      %1855 = vst.msk [vmem:[%s172 + $0x288] sm:$0xff] %vm1773, %v1658
      %1856 = vst.msk [vmem:[%s172 + $0x290] sm:$0xff] %vm1773, %v1659
      %1857 = vst.msk [vmem:[%s172 + $0x298] sm:$0xff] %vm1773, %v1660
      %1858 = vst.msk [vmem:[%s172 + $0x2a0] sm:$0xff] %vm1773, %v1661
      %1859 = vst.msk [vmem:[%s172 + $0x2a8] sm:$0xff] %vm1773, %v1662
      %1860 = vst.msk [vmem:[%s172 + $0x2b0] sm:$0xff] %vm1773, %v1663
      %1861 = vst.msk [vmem:[%s172 + $0x2b8] sm:$0xff] %vm1773, %v1664
      %1862 = vst.msk [vmem:[%s172 + $0x2c0] sm:$0xff] %vm1773, %v1665
      %1863 = vst.msk [vmem:[%s172 + $0x2c8] sm:$0xff] %vm1773, %v1666
      %1864 = vst.msk [vmem:[%s172 + $0x2d0] sm:$0xff] %vm1773, %v1667
      %1865 = vst.msk [vmem:[%s172 + $0x2d8] sm:$0xff] %vm1773, %v1668
      %1866 = vst.msk [vmem:[%s172 + $0x2e0] sm:$0xff] %vm1773, %v1669
      %1867 = vst.msk [vmem:[%s172 + $0x2e8] sm:$0xff] %vm1773, %v1670
      %1868 = vst.msk [vmem:[%s172 + $0x2f0] sm:$0xff] %vm1773, %v1671
      %1869 = vst.msk [vmem:[%s172 + $0x2f8] sm:$0xff] %vm1773, %v1672
      %1870 = vst.msk [vmem:[%s172 + $0x300] sm:$0xff] %vm1773, %v1673
      %1871 = vst.msk [vmem:[%s172 + $0x308] sm:$0xff] %vm1773, %v1674
      %1872 = vst.msk [vmem:[%s172 + $0x310] sm:$0xff] %vm1773, %v1675
      %1873 = vst.msk [vmem:[%s172 + $0x318] sm:$0xff] %vm1773, %v1676
      %1874 = vst.msk [vmem:[%s172 + $0x320] sm:$0xff] %vm1773, %v1677
      %1875 = vst.msk [vmem:[%s172 + $0x328] sm:$0xff] %vm1773, %v1678
      %1876 = vst.msk [vmem:[%s172 + $0x330] sm:$0xff] %vm1773, %v1679
      %1877 = vst.msk [vmem:[%s172 + $0x338] sm:$0xff] %vm1773, %v1680
      %1878 = vst.msk [vmem:[%s172 + $0x340] sm:$0xff] %vm1773, %v1681
      %1879 = vst.msk [vmem:[%s172 + $0x348] sm:$0xff] %vm1773, %v1682
      %1880 = vst.msk [vmem:[%s172 + $0x350] sm:$0xff] %vm1773, %v1683
      %1881 = vst.msk [vmem:[%s172 + $0x358] sm:$0xff] %vm1773, %v1684
      %1882 = vst.msk [vmem:[%s172 + $0x360] sm:$0xff] %vm1773, %v1685
      %1883 = vst.msk [vmem:[%s172 + $0x368] sm:$0xff] %vm1773, %v1686
      %1884 = vst.msk [vmem:[%s172 + $0x370] sm:$0xff] %vm1773, %v1687
      %1885 = vst.msk [vmem:[%s172 + $0x378] sm:$0xff] %vm1773, %v1688
      %1886 = vst.msk [vmem:[%s172 + $0x380] sm:$0xff] %vm1773, %v1689
      %1887 = vst.msk [vmem:[%s172 + $0x388] sm:$0xff] %vm1773, %v1690
      %1888 = vst.msk [vmem:[%s172 + $0x390] sm:$0xff] %vm1773, %v1691
      %1889 = vst.msk [vmem:[%s172 + $0x398] sm:$0xff] %vm1773, %v1692
      %1890 = vst.msk [vmem:[%s172 + $0x3a0] sm:$0xff] %vm1773, %v1693
      %1891 = vst.msk [vmem:[%s172 + $0x3a8] sm:$0xff] %vm1773, %v1694
      %1892 = vst.msk [vmem:[%s172 + $0x3b0] sm:$0xff] %vm1773, %v1695
      %1893 = vst.msk [vmem:[%s172 + $0x3b8] sm:$0xff] %vm1773, %v1696
      %1894 = vst.msk [vmem:[%s172 + $0x3c0] sm:$0xff] %vm1773, %v1697
      %1895 = vst.msk [vmem:[%s172 + $0x3c8] sm:$0xff] %vm1773, %v1698
      %1896 = vst.msk [vmem:[%s172 + $0x3d0] sm:$0xff] %vm1773, %v1699
      %1897 = vst.msk [vmem:[%s172 + $0x3d8] sm:$0xff] %vm1773, %v1700
      %1898 = vst.msk [vmem:[%s172 + $0x3e0] sm:$0xff] %vm1773, %v1701
      %1899 = vst.msk [vmem:[%s172 + $0x3e8] sm:$0xff] %vm1773, %v1702
      %1900 = vst.msk [vmem:[%s172 + $0x3f0] sm:$0xff] %vm1773, %v1703
      %1901 = vst.msk [vmem:[%s172 + $0x3f8] sm:$0xff] %vm1773, %v1704
      %1902 = vst.msk [vmem:[%s172 + $0x400] sm:$0xff] %vm1773, %v1705
      %1903 = vst.msk [vmem:[%s172 + $0x408] sm:$0xff] %vm1773, %v1706
      %1904 = vst.msk [vmem:[%s172 + $0x410] sm:$0xff] %vm1773, %v1707
      %1905 = vst.msk [vmem:[%s172 + $0x418] sm:$0xff] %vm1773, %v1708
      %1906 = vst.msk [vmem:[%s172 + $0x420] sm:$0xff] %vm1773, %v1709
      %1907 = vst.msk [vmem:[%s172 + $0x428] sm:$0xff] %vm1773, %v1710
      %1908 = vst.msk [vmem:[%s172 + $0x430] sm:$0xff] %vm1773, %v1711
      %1909 = vst.msk [vmem:[%s172 + $0x438] sm:$0xff] %vm1773, %v1712
      %1910 = vst.msk [vmem:[%s172 + $0x440] sm:$0xff] %vm1773, %v1713
      %1911 = vst.msk [vmem:[%s172 + $0x448] sm:$0xff] %vm1773, %v1714
      %1912 = vst.msk [vmem:[%s172 + $0x450] sm:$0xff] %vm1773, %v1715
      %1913 = vst.msk [vmem:[%s172 + $0x458] sm:$0xff] %vm1773, %v1716
      %1914 = vst.msk [vmem:[%s172 + $0x460] sm:$0xff] %vm1773, %v1717
      %1915 = vst.msk [vmem:[%s172 + $0x468] sm:$0xff] %vm1773, %v1718
      %1916 = vst.msk [vmem:[%s172 + $0x470] sm:$0xff] %vm1773, %v1719
      %1917 = vst.msk [vmem:[%s172 + $0x478] sm:$0xff] %vm1773, %v1720
      %1918 = vst.msk [vmem:[%s172 + $0x480] sm:$0xff] %vm1773, %v1721
      %1919 = vst.msk [vmem:[%s172 + $0x488] sm:$0xff] %vm1773, %v1722
      %1920 = vst.msk [vmem:[%s172 + $0x490] sm:$0xff] %vm1773, %v1723
      %1921 = vst.msk [vmem:[%s172 + $0x498] sm:$0xff] %vm1773, %v1724
      %1922 = vst.msk [vmem:[%s172 + $0x4a0] sm:$0xff] %vm1773, %v1725
      %1923 = vst.msk [vmem:[%s172 + $0x4a8] sm:$0xff] %vm1773, %v1726
      %1924 = vst.msk [vmem:[%s172 + $0x4b0] sm:$0xff] %vm1773, %v1727
      %1925 = vst.msk [vmem:[%s172 + $0x4b8] sm:$0xff] %vm1773, %v1728
      %1926 = vst.msk [vmem:[%s172 + $0x4c0] sm:$0xff] %vm1773, %v1729
      %1927 = vst.msk [vmem:[%s172 + $0x4c8] sm:$0xff] %vm1773, %v1730
      %1928 = vst.msk [vmem:[%s172 + $0x4d0] sm:$0xff] %vm1773, %v1731
      %1929 = vst.msk [vmem:[%s172 + $0x4d8] sm:$0xff] %vm1773, %v1732
      %1930 = vst.msk [vmem:[%s172 + $0x4e0] sm:$0xff] %vm1773, %v1733
      %1931 = vst.msk [vmem:[%s172 + $0x4e8] sm:$0xff] %vm1773, %v1734
      %1932 = vst.msk [vmem:[%s172 + $0x4f0] sm:$0xff] %vm1773, %v1735
      %1933 = vst.msk [vmem:[%s172 + $0x4f8] sm:$0xff] %vm1773, %v1736
      %1934 = vst.msk [vmem:[%s172 + $0x500] sm:$0xff] %vm1773, %v1737
      %1935 = vst.msk [vmem:[%s172 + $0x508] sm:$0xff] %vm1773, %v1738
      %1936 = vst.msk [vmem:[%s172 + $0x510] sm:$0xff] %vm1773, %v1739
      %1937 = vst.msk [vmem:[%s172 + $0x518] sm:$0xff] %vm1773, %v1740
      %1938 = vst.msk [vmem:[%s172 + $0x520] sm:$0xff] %vm1773, %v1741
      %1939 = vst.msk [vmem:[%s172 + $0x528] sm:$0xff] %vm1773, %v1742
      %1940 = vst.msk [vmem:[%s172 + $0x530] sm:$0xff] %vm1773, %v1743
      %1941 = vst.msk [vmem:[%s172 + $0x538] sm:$0xff] %vm1773, %v1744
      %1942 = vst.msk [vmem:[%s172 + $0x540] sm:$0xff] %vm1773, %v1745
      %1943 = vst.msk [vmem:[%s172 + $0x548] sm:$0xff] %vm1773, %v1746
      %1944 = vst.msk [vmem:[%s172 + $0x550] sm:$0xff] %vm1773, %v1747
      %1945 = vst.msk [vmem:[%s172 + $0x558] sm:$0xff] %vm1773, %v1748
      %1946 = vst.msk [vmem:[%s172 + $0x560] sm:$0xff] %vm1773, %v1749
      %1947 = vst.msk [vmem:[%s172 + $0x568] sm:$0xff] %vm1773, %v1750
      %1948 = vst.msk [vmem:[%s172 + $0x570] sm:$0xff] %vm1773, %v1751
      %1949 = vst.msk [vmem:[%s172 + $0x578] sm:$0xff] %vm1773, %v1752
      %1950 = vst.msk [vmem:[%s172 + $0x580] sm:$0xff] %vm1773, %v1753
      %1951 = vst.msk [vmem:[%s172 + $0x588] sm:$0xff] %vm1773, %v1754
      %1952 = vst.msk [vmem:[%s172 + $0x590] sm:$0xff] %vm1773, %v1755
      %1953 = vst.msk [vmem:[%s172 + $0x598] sm:$0xff] %vm1773, %v1756
      %1954 = vst.msk [vmem:[%s172 + $0x5a0] sm:$0xff] %vm1773, %v1757
      %1955 = vst.msk [vmem:[%s172 + $0x5a8] sm:$0xff] %vm1773, %v1758
      %1956 = vst.msk [vmem:[%s172 + $0x5b0] sm:$0xff] %vm1773, %v1759
      %1957 = vst.msk [vmem:[%s172 + $0x5b8] sm:$0xff] %vm1773, %v1760
      %1958 = vst.msk [vmem:[%s172 + $0x5c0] sm:$0xff] %vm1773, %v1761
      %1959 = vst.msk [vmem:[%s172 + $0x5c8] sm:$0xff] %vm1773, %v1762
      %1960 = vst.msk [vmem:[%s172 + $0x5d0] sm:$0xff] %vm1773, %v1763
      %1961 = vst.msk [vmem:[%s172 + $0x5d8] sm:$0xff] %vm1773, %v1764
      %1962 = vst.msk [vmem:[%s172 + $0x5e0] sm:$0xff] %vm1773, %v1765
      %1963 = vst.msk [vmem:[%s172 + $0x5e8] sm:$0xff] %vm1773, %v1766
      %1964 = vst.msk [vmem:[%s172 + $0x5f0] sm:$0xff] %vm1773, %v1767
      %1965 = vst.msk [vmem:[%s172 + $0x5f8] sm:$0xff] %vm1773, %v1768
      %1966 = vst.msk [vmem:[%s172 + $0x600] sm:$0xff] %vm1773, %v1769
      %1967 = vst.msk [vmem:[%s172 + $0x608] sm:$0xff] %vm1773, %v1770
      %1968 = vst.msk [vmem:[%s172 + $0x610] sm:$0xff] %vm1773, %v1771
      %1969 = vst.msk [vmem:[%s172 + $0x618] sm:$0xff] %vm1773, %v1772
      %s1970 = smul.u32 196, %s14
      %p1971 = scmp.lt.s32.totalorder %s1970, 391
      %s1972 = scalar_select %p1971, %s1970, 391
      %s1973 = smul.addr %s1972, 8
      %s1974 = scalar_lea.vmem %s3, %s1973
      // Predicated region
      $region33: #{rollout_encoder_forward.3} parent=31 // pred_check
        %p1975 = pneg %p100
      $region34: #{rollout_encoder_forward.3} parent=31 // pred_check_branch
        %1977 = sbr.rel (%p1975) target = $region36
      $region35: #{rollout_encoder_forward.3} parent=31 // pred_region
        %s1978 = smul.u32 196, %s14
      $region36: #{rollout_encoder_forward.3} parent=31 // pred_fallthru
        _
    $region32: #{rollout_encoder_forward.3} parent=5 // pred_fallthru
      _
    %p1979 = scmp.le.s32.totalorder 2, %s9
    // Predicated region
    $region37: #{rollout_encoder_forward.3} parent=5 // pred_check
      %p1980 = pneg %p1979
    $region38: #{rollout_encoder_forward.3} parent=5 // pred_check_branch
      %1982 = sbr.rel (%p1980) target = $region40
    $region39: #{rollout_encoder_forward.3} parent=5 // pred_region
      %s1983 = ssub.s32 %s9, 2
      // Predicated region
      $region41: #{rollout_encoder_forward.3} parent=39 // pred_check
        %p1984 = pneg %p106
      $region42: #{rollout_encoder_forward.3} parent=39 // pred_check_branch
        %1986 = sbr.rel (%p1984) target = $region44
      $region43: #{rollout_encoder_forward.3} parent=39 // pred_region
        %s1987 = smul.u32 196, %s15
        %p1988 = scmp.lt.s32.totalorder %s1987, 391
        %s1989 = scalar_select %p1988, %s1987, 391
        %s1990 = smul.addr %s1989, 8
        %s1991 = scalar_lea.vmem %s3, %s1990
      $region44: #{rollout_encoder_forward.3} parent=39 // pred_fallthru
        _
    $region40: #{rollout_encoder_forward.3} parent=5 // pred_fallthru
      _
  $region6: #{rollout_encoder_forward.3} parent=0 // loop_footer
    %s13 = sadd.s32 1, %s9
  $region7: #{rollout_encoder_forward.3} parent=0 // loop_footer_branch
    %8 = sbr.rel target = $region3
  $region8: #{rollout_encoder_forward.3} parent=0 // loop_exit
    _

// kernel: rollout_encoder_forward.4
$region0: #{rollout_encoder_forward.4}
  #allocation0 [shape = 'u32[]', space=smem, size = 0x4, offset = 0x4, fixed_abs, tag = 'smem constant byte address 0x4 - core index']
  #allocation1 [shape = 'u32[72,128]{1,0:T(1,128)}', space=vmem, size = 0x9000, scoped, tag = 'internal scratch']
  %s0 = inlined_call_operand.vmem [shape: f32[576,144], index: 0, kind: input, shape index: {}]
  %s1 = inlined_call_operand.vmem [shape: f32[144,16], index: 1, kind: input, shape index: {}]
  %s2 = inlined_call_operand.vmem [shape: f32[1,16], index: 2, kind: input, shape index: {}]
  %s3 = inlined_call_operand.vmem [shape: f32[576,16], index: 3, kind: output, shape index: {}]
  %s4 = sld [smem:[#allocation0]]
  $region22: #{rollout_encoder_forward.4} parent=0
    _
  %s6 = ssub.s32 1, %s4
  %s7 = scalar_select 0, %s6, %s4
  // Predicated region
  $region2: #{rollout_encoder_forward.4} parent=0 // pred_check
    _
  $region3: #{rollout_encoder_forward.4} parent=0 // pred_check_branch
    %9 = sbr.rel (0) target = $region5
  $region4: #{rollout_encoder_forward.4} parent=0 // pred_region
    _
  $region5: #{rollout_encoder_forward.4} parent=0 // pred_fallthru
    _
  // Predicated region
  $region6: #{rollout_encoder_forward.4} parent=0 // pred_check
    _
  $region7: #{rollout_encoder_forward.4} parent=0 // pred_check_branch
    %11 = sbr.rel (0) target = $region9
  $region8: #{rollout_encoder_forward.4} parent=0 // pred_region
    _
  $region9: #{rollout_encoder_forward.4} parent=0 // pred_fallthru
    _
  // Predicated region
  $region10: #{rollout_encoder_forward.4} parent=0 // pred_check
    _
  $region11: #{rollout_encoder_forward.4} parent=0 // pred_check_branch
    %13 = sbr.rel (0) target = $region13
  $region12: #{rollout_encoder_forward.4} parent=0 // pred_region
    _
  $region13: #{rollout_encoder_forward.4} parent=0 // pred_fallthru
    _
  %v14 = vld [vmem:[%s0] sm:$0xff]
  %v15 = vld [vmem:[%s0 + $0x8] sm:$0xff]
  %v16 = vld [vmem:[%s0 + $0x10] sm:$0xff]
  %v17 = vld [vmem:[%s0 + $0x18] sm:$0xff]
  %v18 = vld [vmem:[%s0 + $0x20] sm:$0xff]
  %v19 = vld [vmem:[%s0 + $0x28] sm:$0xff]
  %v20 = vld [vmem:[%s0 + $0x30] sm:$0xff]
  %v21 = vld [vmem:[%s0 + $0x38] sm:$0xff]
  %v22 = vld [vmem:[%s0 + $0x40] sm:$0xff]
  %v23 = vld [vmem:[%s0 + $0x48] sm:$0xff]
  %v24 = vld [vmem:[%s0 + $0x50] sm:$0xff]
  %v25 = vld [vmem:[%s0 + $0x58] sm:$0xff]
  %v26 = vld [vmem:[%s0 + $0x60] sm:$0xff]
  %v27 = vld [vmem:[%s0 + $0x68] sm:$0xff]
  %v28 = vld [vmem:[%s0 + $0x70] sm:$0xff]
  %v29 = vld [vmem:[%s0 + $0x78] sm:$0xff]
  %v30 = vld [vmem:[%s0 + $0x80] sm:$0xff]
  %v31 = vld [vmem:[%s0 + $0x88] sm:$0xff]
  %v32 = vld [vmem:[%s0 + $0x90] sm:$0xff]
  %v33 = vld [vmem:[%s0 + $0x98] sm:$0xff]
  %v34 = vld [vmem:[%s0 + $0xa0] sm:$0xff]
  %v35 = vld [vmem:[%s0 + $0xa8] sm:$0xff]
  %v36 = vld [vmem:[%s0 + $0xb0] sm:$0xff]
  %v37 = vld [vmem:[%s0 + $0xb8] sm:$0xff]
  %v38 = vld [vmem:[%s0 + $0xc0] sm:$0xff]
  %v39 = vld [vmem:[%s0 + $0xc8] sm:$0xff]
  %v40 = vld [vmem:[%s0 + $0xd0] sm:$0xff]
  %v41 = vld [vmem:[%s0 + $0xd8] sm:$0xff]
  %v42 = vld [vmem:[%s0 + $0xe0] sm:$0xff]
  %v43 = vld [vmem:[%s0 + $0xe8] sm:$0xff]
  %v44 = vld [vmem:[%s0 + $0xf0] sm:$0xff]
  %v45 = vld [vmem:[%s0 + $0xf8] sm:$0xff]
  %v46 = vld [vmem:[%s0 + $0x100] sm:$0xff]
  %v47 = vld [vmem:[%s0 + $0x108] sm:$0xff]
  %v48 = vld [vmem:[%s0 + $0x110] sm:$0xff]
  %v49 = vld [vmem:[%s0 + $0x118] sm:$0xff]
  %v50 = vld [vmem:[%s0 + $0x120] sm:$0xff]
  %v51 = vld [vmem:[%s0 + $0x128] sm:$0xff]
  %v52 = vld [vmem:[%s0 + $0x130] sm:$0xff]
  %v53 = vld [vmem:[%s0 + $0x138] sm:$0xff]
  %v54 = vld [vmem:[%s0 + $0x140] sm:$0xff]
  %v55 = vld [vmem:[%s0 + $0x148] sm:$0xff]
  %v56 = vld [vmem:[%s0 + $0x150] sm:$0xff]
  %v57 = vld [vmem:[%s0 + $0x158] sm:$0xff]
  %v58 = vld [vmem:[%s0 + $0x160] sm:$0xff]
  %v59 = vld [vmem:[%s0 + $0x168] sm:$0xff]
  %v60 = vld [vmem:[%s0 + $0x170] sm:$0xff]
  %v61 = vld [vmem:[%s0 + $0x178] sm:$0xff]
  %v62 = vld [vmem:[%s0 + $0x180] sm:$0xff]
  %v63 = vld [vmem:[%s0 + $0x188] sm:$0xff]
  %v64 = vld [vmem:[%s0 + $0x190] sm:$0xff]
  %v65 = vld [vmem:[%s0 + $0x198] sm:$0xff]
  %v66 = vld [vmem:[%s0 + $0x1a0] sm:$0xff]
  %v67 = vld [vmem:[%s0 + $0x1a8] sm:$0xff]
  %v68 = vld [vmem:[%s0 + $0x1b0] sm:$0xff]
  %v69 = vld [vmem:[%s0 + $0x1b8] sm:$0xff]
  %v70 = vld [vmem:[%s0 + $0x1c0] sm:$0xff]
  %v71 = vld [vmem:[%s0 + $0x1c8] sm:$0xff]
  %v72 = vld [vmem:[%s0 + $0x1d0] sm:$0xff]
  %v73 = vld [vmem:[%s0 + $0x1d8] sm:$0xff]
  %v74 = vld [vmem:[%s0 + $0x1e0] sm:$0xff]
  %v75 = vld [vmem:[%s0 + $0x1e8] sm:$0xff]
  %v76 = vld [vmem:[%s0 + $0x1f0] sm:$0xff]
  %v77 = vld [vmem:[%s0 + $0x1f8] sm:$0xff]
  %v78 = vld [vmem:[%s0 + $0x200] sm:$0xff]
  %v79 = vld [vmem:[%s0 + $0x208] sm:$0xff]
  %v80 = vld [vmem:[%s0 + $0x210] sm:$0xff]
  %v81 = vld [vmem:[%s0 + $0x218] sm:$0xff]
  %v82 = vld [vmem:[%s0 + $0x220] sm:$0xff]
  %v83 = vld [vmem:[%s0 + $0x228] sm:$0xff]
  %v84 = vld [vmem:[%s0 + $0x230] sm:$0xff]
  %v85 = vld [vmem:[%s0 + $0x238] sm:$0xff]
  %v86 = vld [vmem:[%s0 + $0x240] sm:$0xff]
  %v87 = vld [vmem:[%s0 + $0x248] sm:$0xff]
  %v88 = vld [vmem:[%s0 + $0x250] sm:$0xff]
  %v89 = vld [vmem:[%s0 + $0x258] sm:$0xff]
  %v90 = vld [vmem:[%s0 + $0x260] sm:$0xff]
  %v91 = vld [vmem:[%s0 + $0x268] sm:$0xff]
  %v92 = vld [vmem:[%s0 + $0x270] sm:$0xff]
  %v93 = vld [vmem:[%s0 + $0x278] sm:$0xff]
  %v94 = vld [vmem:[%s0 + $0x280] sm:$0xff]
  %v95 = vld [vmem:[%s0 + $0x288] sm:$0xff]
  %v96 = vld [vmem:[%s0 + $0x290] sm:$0xff]
  %v97 = vld [vmem:[%s0 + $0x298] sm:$0xff]
  %v98 = vld [vmem:[%s0 + $0x2a0] sm:$0xff]
  %v99 = vld [vmem:[%s0 + $0x2a8] sm:$0xff]
  %v100 = vld [vmem:[%s0 + $0x2b0] sm:$0xff]
  %v101 = vld [vmem:[%s0 + $0x2b8] sm:$0xff]
  %v102 = vld [vmem:[%s0 + $0x2c0] sm:$0xff]
  %v103 = vld [vmem:[%s0 + $0x2c8] sm:$0xff]
  %v104 = vld [vmem:[%s0 + $0x2d0] sm:$0xff]
  %v105 = vld [vmem:[%s0 + $0x2d8] sm:$0xff]
  %v106 = vld [vmem:[%s0 + $0x2e0] sm:$0xff]
  %v107 = vld [vmem:[%s0 + $0x2e8] sm:$0xff]
  %v108 = vld [vmem:[%s0 + $0x2f0] sm:$0xff]
  %v109 = vld [vmem:[%s0 + $0x2f8] sm:$0xff]
  %v110 = vld [vmem:[%s0 + $0x300] sm:$0xff]
  %v111 = vld [vmem:[%s0 + $0x308] sm:$0xff]
  %v112 = vld [vmem:[%s0 + $0x310] sm:$0xff]
  %v113 = vld [vmem:[%s0 + $0x318] sm:$0xff]
  %v114 = vld [vmem:[%s0 + $0x320] sm:$0xff]
  %v115 = vld [vmem:[%s0 + $0x328] sm:$0xff]
  %v116 = vld [vmem:[%s0 + $0x330] sm:$0xff]
  %v117 = vld [vmem:[%s0 + $0x338] sm:$0xff]
  %v118 = vld [vmem:[%s0 + $0x340] sm:$0xff]
  %v119 = vld [vmem:[%s0 + $0x348] sm:$0xff]
  %v120 = vld [vmem:[%s0 + $0x350] sm:$0xff]
  %v121 = vld [vmem:[%s0 + $0x358] sm:$0xff]
  %v122 = vld [vmem:[%s0 + $0x360] sm:$0xff]
  %v123 = vld [vmem:[%s0 + $0x368] sm:$0xff]
  %v124 = vld [vmem:[%s0 + $0x370] sm:$0xff]
  %v125 = vld [vmem:[%s0 + $0x378] sm:$0xff]
  %v126 = vld [vmem:[%s0 + $0x380] sm:$0xff]
  %v127 = vld [vmem:[%s0 + $0x388] sm:$0xff]
  %v128 = vld [vmem:[%s0 + $0x390] sm:$0xff]
  %v129 = vld [vmem:[%s0 + $0x398] sm:$0xff]
  %v130 = vld [vmem:[%s0 + $0x3a0] sm:$0xff]
  %v131 = vld [vmem:[%s0 + $0x3a8] sm:$0xff]
  %v132 = vld [vmem:[%s0 + $0x3b0] sm:$0xff]
  %v133 = vld [vmem:[%s0 + $0x3b8] sm:$0xff]
  %v134 = vld [vmem:[%s0 + $0x3c0] sm:$0xff]
  %v135 = vld [vmem:[%s0 + $0x3c8] sm:$0xff]
  %v136 = vld [vmem:[%s0 + $0x3d0] sm:$0xff]
  %v137 = vld [vmem:[%s0 + $0x3d8] sm:$0xff]
  %v138 = vld [vmem:[%s0 + $0x3e0] sm:$0xff]
  %v139 = vld [vmem:[%s0 + $0x3e8] sm:$0xff]
  %v140 = vld [vmem:[%s0 + $0x3f0] sm:$0xff]
  %v141 = vld [vmem:[%s0 + $0x3f8] sm:$0xff]
  %v142 = vld [vmem:[%s0 + $0x400] sm:$0xff]
  %v143 = vld [vmem:[%s0 + $0x408] sm:$0xff]
  %v144 = vld [vmem:[%s0 + $0x410] sm:$0xff]
  %v145 = vld [vmem:[%s0 + $0x418] sm:$0xff]
  %v146 = vld [vmem:[%s0 + $0x420] sm:$0xff]
  %v147 = vld [vmem:[%s0 + $0x428] sm:$0xff]
  %v148 = vld [vmem:[%s0 + $0x430] sm:$0xff]
  %v149 = vld [vmem:[%s0 + $0x438] sm:$0xff]
  %v150 = vld [vmem:[%s0 + $0x440] sm:$0xff]
  %v151 = vld [vmem:[%s0 + $0x448] sm:$0xff]
  %v152 = vld [vmem:[%s0 + $0x450] sm:$0xff]
  %v153 = vld [vmem:[%s0 + $0x458] sm:$0xff]
  %v154 = vld [vmem:[%s0 + $0x460] sm:$0xff]
  %v155 = vld [vmem:[%s0 + $0x468] sm:$0xff]
  %v156 = vld [vmem:[%s0 + $0x470] sm:$0xff]
  %v157 = vld [vmem:[%s0 + $0x478] sm:$0xff]
  %v158 = vld [vmem:[%s1] sm:$0xff]
  %v159 = vld [vmem:[%s1 + $0x8] sm:$0xff]
  %v160 = vld [vmem:[%s1 + $0x10] sm:$0xff]
  %v161 = vld [vmem:[%s1 + $0x18] sm:$0xff]
  %v162 = vld [vmem:[%s1 + $0x20] sm:$0xff]
  %v163 = vld [vmem:[%s1 + $0x28] sm:$0xff]
  %v164 = vld [vmem:[%s1 + $0x30] sm:$0xff]
  %v165 = vld [vmem:[%s1 + $0x38] sm:$0xff]
  %v166 = vld [vmem:[%s1 + $0x40] sm:$0xff]
  %v167 = vld [vmem:[%s1 + $0x48] sm:$0xff]
  %v168 = vld [vmem:[%s1 + $0x50] sm:$0xff]
  %v169 = vld [vmem:[%s1 + $0x58] sm:$0xff]
  %v170 = vld [vmem:[%s1 + $0x60] sm:$0xff]
  %v171 = vld [vmem:[%s1 + $0x68] sm:$0xff]
  %v172 = vld [vmem:[%s1 + $0x70] sm:$0xff]
  %v173 = vld [vmem:[%s1 + $0x78] sm:$0xff]
  %v174 = vld [vmem:[%s1 + $0x80] sm:$0xff]
  %v175 = vld [vmem:[%s1 + $0x88] sm:$0xff]
  %v176 = vld [vmem:[%s2] sm:$0x1]
  %v178 = vperm.slane %v176, 0
  %vm180 = vcmask 130048
  %v182 = vsel %vm180, %v15, 0
  %v185 = vsel %vm180, %v17, 0
  %v188 = vsel %vm180, %v19, 0
  %v191 = vsel %vm180, %v21, 0
  %v194 = vsel %vm180, %v23, 0
  %v197 = vsel %vm180, %v25, 0
  %v200 = vsel %vm180, %v27, 0
  %v203 = vsel %vm180, %v29, 0
  %v206 = vsel %vm180, %v31, 0
  %v209 = vsel %vm180, %v33, 0
  %v212 = vsel %vm180, %v35, 0
  %v215 = vsel %vm180, %v37, 0
  %v218 = vsel %vm180, %v39, 0
  %v221 = vsel %vm180, %v41, 0
  %v224 = vsel %vm180, %v43, 0
  %v227 = vsel %vm180, %v45, 0
  %v230 = vsel %vm180, %v47, 0
  %v233 = vsel %vm180, %v49, 0
  %v236 = vsel %vm180, %v51, 0
  %v239 = vsel %vm180, %v53, 0
  %v242 = vsel %vm180, %v55, 0
  %v245 = vsel %vm180, %v57, 0
  %v248 = vsel %vm180, %v59, 0
  %v251 = vsel %vm180, %v61, 0
  %v254 = vsel %vm180, %v63, 0
  %v257 = vsel %vm180, %v65, 0
  %v260 = vsel %vm180, %v67, 0
  %v263 = vsel %vm180, %v69, 0
  %v266 = vsel %vm180, %v71, 0
  %v269 = vsel %vm180, %v73, 0
  %v272 = vsel %vm180, %v75, 0
  %v275 = vsel %vm180, %v77, 0
  %v278 = vsel %vm180, %v79, 0
  %v281 = vsel %vm180, %v81, 0
  %v284 = vsel %vm180, %v83, 0
  %v287 = vsel %vm180, %v85, 0
  %v290 = vsel %vm180, %v87, 0
  %v293 = vsel %vm180, %v89, 0
  %v296 = vsel %vm180, %v91, 0
  %v299 = vsel %vm180, %v93, 0
  %v302 = vsel %vm180, %v95, 0
  %v305 = vsel %vm180, %v97, 0
  %v308 = vsel %vm180, %v99, 0
  %v311 = vsel %vm180, %v101, 0
  %v314 = vsel %vm180, %v103, 0
  %v317 = vsel %vm180, %v105, 0
  %v320 = vsel %vm180, %v107, 0
  %v323 = vsel %vm180, %v109, 0
  %v326 = vsel %vm180, %v111, 0
  %v329 = vsel %vm180, %v113, 0
  %v332 = vsel %vm180, %v115, 0
  %v335 = vsel %vm180, %v117, 0
  %v338 = vsel %vm180, %v119, 0
  %v341 = vsel %vm180, %v121, 0
  %v344 = vsel %vm180, %v123, 0
  %v347 = vsel %vm180, %v125, 0
  %v350 = vsel %vm180, %v127, 0
  %v353 = vsel %vm180, %v129, 0
  %v356 = vsel %vm180, %v131, 0
  %v359 = vsel %vm180, %v133, 0
  %v362 = vsel %vm180, %v135, 0
  %v365 = vsel %vm180, %v137, 0
  %v368 = vsel %vm180, %v139, 0
  %v371 = vsel %vm180, %v141, 0
  %v374 = vsel %vm180, %v143, 0
  %v377 = vsel %vm180, %v145, 0
  %v380 = vsel %vm180, %v147, 0
  %v383 = vsel %vm180, %v149, 0
  %v386 = vsel %vm180, %v151, 0
  %v389 = vsel %vm180, %v153, 0
  %v392 = vsel %vm180, %v155, 0
  %v395 = vsel %vm180, %v157, 0
  %397 = vmatpush.msra.mxu0 %v173
  %398 = vmatpush.msra.mxu0 %v172
  %399 = vmatpush.msra.mxu0 %v171
  %400 = vmatpush.msra.mxu0 %v170
  %401 = vmatpush.msra.mxu0 %v169
  %402 = vmatpush.msra.mxu0 %v168
  %403 = vmatpush.msra.mxu0 %v167
  %404 = vmatpush.msra.mxu0 %v166
  %405 = vmatpush.msra.mxu0 %v165
  %406 = vmatpush.msra.mxu0 %v164
  %407 = vmatpush.msra.mxu0 %v163
  %408 = vmatpush.msra.mxu0 %v162
  %409 = vmatpush.msra.mxu0 %v161
  %410 = vmatpush.msra.mxu0 %v160
  %411 = vmatpush.msra.mxu0 %v159
  %412 = vmatpush.msra.mxu0 %v158
  %413 = vmatmul.f32.gmra.mxu0 %v14
  %v414 = vpop.f32.mrf.mxu0
  %v415 = vadd.f32 %v178, %v414
  %416 = vmatmul.f32.gmra.mxu0 %v16
  %v417 = vpop.f32.mrf.mxu0
  %v418 = vadd.f32 %v178, %v417
  %419 = vmatmul.f32.gmra.mxu0 %v18
  %v420 = vpop.f32.mrf.mxu0
  %v421 = vadd.f32 %v178, %v420
  %422 = vmatmul.f32.gmra.mxu0 %v20
  %v423 = vpop.f32.mrf.mxu0
  %v424 = vadd.f32 %v178, %v423
  %425 = vmatmul.f32.gmra.mxu0 %v22
  %v426 = vpop.f32.mrf.mxu0
  %v427 = vadd.f32 %v178, %v426
  %428 = vmatmul.f32.gmra.mxu0 %v24
  %v429 = vpop.f32.mrf.mxu0
  %v430 = vadd.f32 %v178, %v429
  %431 = vmatmul.f32.gmra.mxu0 %v26
  %v432 = vpop.f32.mrf.mxu0
  %v433 = vadd.f32 %v178, %v432
  %434 = vmatmul.f32.gmra.mxu0 %v28
  %v435 = vpop.f32.mrf.mxu0
  %v436 = vadd.f32 %v178, %v435
  %437 = vmatmul.f32.gmra.mxu0 %v30
  %v438 = vpop.f32.mrf.mxu0
  %v439 = vadd.f32 %v178, %v438
  %440 = vmatmul.f32.gmra.mxu0 %v32
  %v441 = vpop.f32.mrf.mxu0
  %v442 = vadd.f32 %v178, %v441
  %443 = vmatmul.f32.gmra.mxu0 %v34
  %v444 = vpop.f32.mrf.mxu0
  %v445 = vadd.f32 %v178, %v444
  %446 = vmatmul.f32.gmra.mxu0 %v36
  %v447 = vpop.f32.mrf.mxu0
  %v448 = vadd.f32 %v178, %v447
  %449 = vmatmul.f32.gmra.mxu0 %v38
  %v450 = vpop.f32.mrf.mxu0
  %v451 = vadd.f32 %v178, %v450
  %452 = vmatmul.f32.gmra.mxu0 %v40
  %v453 = vpop.f32.mrf.mxu0
  %v454 = vadd.f32 %v178, %v453
  %455 = vmatmul.f32.gmra.mxu0 %v42
  %v456 = vpop.f32.mrf.mxu0
  %v457 = vadd.f32 %v178, %v456
  %458 = vmatmul.f32.gmra.mxu0 %v44
  %v459 = vpop.f32.mrf.mxu0
  %v460 = vadd.f32 %v178, %v459
  %461 = vmatmul.f32.gmra.mxu0 %v46
  %v462 = vpop.f32.mrf.mxu0
  %v463 = vadd.f32 %v178, %v462
  %464 = vmatmul.f32.gmra.mxu0 %v48
  %v465 = vpop.f32.mrf.mxu0
  %v466 = vadd.f32 %v178, %v465
  %467 = vmatmul.f32.gmra.mxu0 %v50
  %v468 = vpop.f32.mrf.mxu0
  %v469 = vadd.f32 %v178, %v468
  %470 = vmatmul.f32.gmra.mxu0 %v52
  %v471 = vpop.f32.mrf.mxu0
  %v472 = vadd.f32 %v178, %v471
  %473 = vmatmul.f32.gmra.mxu0 %v54
  %v474 = vpop.f32.mrf.mxu0
  %v475 = vadd.f32 %v178, %v474
  %476 = vmatmul.f32.gmra.mxu0 %v56
  %v477 = vpop.f32.mrf.mxu0
  %v478 = vadd.f32 %v178, %v477
  %479 = vmatmul.f32.gmra.mxu0 %v58
  %v480 = vpop.f32.mrf.mxu0
  %v481 = vadd.f32 %v178, %v480
  %482 = vmatmul.f32.gmra.mxu0 %v60
  %v483 = vpop.f32.mrf.mxu0
  %v484 = vadd.f32 %v178, %v483
  %485 = vmatmul.f32.gmra.mxu0 %v62
  %v486 = vpop.f32.mrf.mxu0
  %v487 = vadd.f32 %v178, %v486
  %488 = vmatmul.f32.gmra.mxu0 %v64
  %v489 = vpop.f32.mrf.mxu0
  %v490 = vadd.f32 %v178, %v489
  %491 = vmatmul.f32.gmra.mxu0 %v66
  %v492 = vpop.f32.mrf.mxu0
  %v493 = vadd.f32 %v178, %v492
  %494 = vmatmul.f32.gmra.mxu0 %v68
  %v495 = vpop.f32.mrf.mxu0
  %v496 = vadd.f32 %v178, %v495
  %497 = vmatmul.f32.gmra.mxu0 %v70
  %v498 = vpop.f32.mrf.mxu0
  %v499 = vadd.f32 %v178, %v498
  %500 = vmatmul.f32.gmra.mxu0 %v72
  %v501 = vpop.f32.mrf.mxu0
  %v502 = vadd.f32 %v178, %v501
  %503 = vmatmul.f32.gmra.mxu0 %v74
  %v504 = vpop.f32.mrf.mxu0
  %v505 = vadd.f32 %v178, %v504
  %506 = vmatmul.f32.gmra.mxu0 %v76
  %v507 = vpop.f32.mrf.mxu0
  %v508 = vadd.f32 %v178, %v507
  %509 = vmatmul.f32.gmra.mxu0 %v78
  %v510 = vpop.f32.mrf.mxu0
  %v511 = vadd.f32 %v178, %v510
  %512 = vmatmul.f32.gmra.mxu0 %v80
  %v513 = vpop.f32.mrf.mxu0
  %v514 = vadd.f32 %v178, %v513
  %515 = vmatmul.f32.gmra.mxu0 %v82
  %v516 = vpop.f32.mrf.mxu0
  %v517 = vadd.f32 %v178, %v516
  %518 = vmatmul.f32.gmra.mxu0 %v84
  %v519 = vpop.f32.mrf.mxu0
  %v520 = vadd.f32 %v178, %v519
  %521 = vmatmul.f32.gmra.mxu0 %v86
  %v522 = vpop.f32.mrf.mxu0
  %v523 = vadd.f32 %v178, %v522
  %524 = vmatmul.f32.gmra.mxu0 %v88
  %v525 = vpop.f32.mrf.mxu0
  %v526 = vadd.f32 %v178, %v525
  %527 = vmatmul.f32.gmra.mxu0 %v90
  %v528 = vpop.f32.mrf.mxu0
  %v529 = vadd.f32 %v178, %v528
  %530 = vmatmul.f32.gmra.mxu0 %v92
  %v531 = vpop.f32.mrf.mxu0
  %v532 = vadd.f32 %v178, %v531
  %533 = vmatmul.f32.gmra.mxu0 %v94
  %v534 = vpop.f32.mrf.mxu0
  %v535 = vadd.f32 %v178, %v534
  %536 = vmatmul.f32.gmra.mxu0 %v96
  %v537 = vpop.f32.mrf.mxu0
  %v538 = vadd.f32 %v178, %v537
  %539 = vmatmul.f32.gmra.mxu0 %v98
  %v540 = vpop.f32.mrf.mxu0
  %v541 = vadd.f32 %v178, %v540
  %542 = vmatmul.f32.gmra.mxu0 %v100
  %v543 = vpop.f32.mrf.mxu0
  %v544 = vadd.f32 %v178, %v543
  %545 = vmatmul.f32.gmra.mxu0 %v102
  %v546 = vpop.f32.mrf.mxu0
  %v547 = vadd.f32 %v178, %v546
  %548 = vmatmul.f32.gmra.mxu0 %v104
  %v549 = vpop.f32.mrf.mxu0
  %v550 = vadd.f32 %v178, %v549
  %551 = vmatmul.f32.gmra.mxu0 %v106
  %v552 = vpop.f32.mrf.mxu0
  %v553 = vadd.f32 %v178, %v552
  %554 = vmatmul.f32.gmra.mxu0 %v108
  %v555 = vpop.f32.mrf.mxu0
  %v556 = vadd.f32 %v178, %v555
  %557 = vmatmul.f32.gmra.mxu0 %v110
  %v558 = vpop.f32.mrf.mxu0
  %v559 = vadd.f32 %v178, %v558
  %560 = vmatmul.f32.gmra.mxu0 %v112
  %v561 = vpop.f32.mrf.mxu0
  %v562 = vadd.f32 %v178, %v561
  %563 = vmatmul.f32.gmra.mxu0 %v114
  %v564 = vpop.f32.mrf.mxu0
  %v565 = vadd.f32 %v178, %v564
  %566 = vmatmul.f32.gmra.mxu0 %v116
  %v567 = vpop.f32.mrf.mxu0
  %v568 = vadd.f32 %v178, %v567
  %569 = vmatmul.f32.gmra.mxu0 %v118
  %v570 = vpop.f32.mrf.mxu0
  %v571 = vadd.f32 %v178, %v570
  %572 = vmatmul.f32.gmra.mxu0 %v120
  %v573 = vpop.f32.mrf.mxu0
  %v574 = vadd.f32 %v178, %v573
  %575 = vmatmul.f32.gmra.mxu0 %v122
  %v576 = vpop.f32.mrf.mxu0
  %v577 = vadd.f32 %v178, %v576
  %578 = vmatmul.f32.gmra.mxu0 %v124
  %v579 = vpop.f32.mrf.mxu0
  %v580 = vadd.f32 %v178, %v579
  %581 = vmatmul.f32.gmra.mxu0 %v126
  %v582 = vpop.f32.mrf.mxu0
  %v583 = vadd.f32 %v178, %v582
  %584 = vmatmul.f32.gmra.mxu0 %v128
  %v585 = vpop.f32.mrf.mxu0
  %v586 = vadd.f32 %v178, %v585
  %587 = vmatmul.f32.gmra.mxu0 %v130
  %v588 = vpop.f32.mrf.mxu0
  %v589 = vadd.f32 %v178, %v588
  %590 = vmatmul.f32.gmra.mxu0 %v132
  %v591 = vpop.f32.mrf.mxu0
  %v592 = vadd.f32 %v178, %v591
  %593 = vmatmul.f32.gmra.mxu0 %v134
  %v594 = vpop.f32.mrf.mxu0
  %v595 = vadd.f32 %v178, %v594
  %596 = vmatmul.f32.gmra.mxu0 %v136
  %v597 = vpop.f32.mrf.mxu0
  %v598 = vadd.f32 %v178, %v597
  %599 = vmatmul.f32.gmra.mxu0 %v138
  %v600 = vpop.f32.mrf.mxu0
  %v601 = vadd.f32 %v178, %v600
  %602 = vmatmul.f32.gmra.mxu0 %v140
  %v603 = vpop.f32.mrf.mxu0
  %v604 = vadd.f32 %v178, %v603
  %605 = vmatmul.f32.gmra.mxu0 %v142
  %v606 = vpop.f32.mrf.mxu0
  %v607 = vadd.f32 %v178, %v606
  %608 = vmatmul.f32.gmra.mxu0 %v144
  %v609 = vpop.f32.mrf.mxu0
  %v610 = vadd.f32 %v178, %v609
  %611 = vmatmul.f32.gmra.mxu0 %v146
  %v612 = vpop.f32.mrf.mxu0
  %v613 = vadd.f32 %v178, %v612
  %614 = vmatmul.f32.gmra.mxu0 %v148
  %v615 = vpop.f32.mrf.mxu0
  %v616 = vadd.f32 %v178, %v615
  %617 = vmatmul.f32.gmra.mxu0 %v150
  %v618 = vpop.f32.mrf.mxu0
  %v619 = vadd.f32 %v178, %v618
  %620 = vmatmul.f32.gmra.mxu0 %v152
  %v621 = vpop.f32.mrf.mxu0
  %v622 = vadd.f32 %v178, %v621
  %623 = vmatmul.f32.gmra.mxu0 %v154
  %v624 = vpop.f32.mrf.mxu0
  %v625 = vadd.f32 %v178, %v624
  %626 = vmatmul.f32.gmra.mxu0 %v156
  %v627 = vpop.f32.mrf.mxu0
  %v628 = vadd.f32 %v178, %v627
  %629 = vdwg.mxu0
  %630 = vmatpush.msra.mxu0 0.0
  %631 = vmatpush.msra.mxu0 0.0
  %632 = vmatpush.msra.mxu0 0.0
  %633 = vmatpush.msra.mxu0 0.0
  %634 = vmatpush.msra.mxu0 0.0
  %635 = vmatpush.msra.mxu0 0.0
  %636 = vmatpush.msra.mxu0 0.0
  %637 = vmatpush.msra.mxu0 0.0
  %638 = vmatpush.msra.mxu0 0.0
  %639 = vmatpush.msra.mxu0 0.0
  %640 = vmatpush.msra.mxu0 0.0
  %641 = vmatpush.msra.mxu0 0.0
  %642 = vmatpush.msra.mxu0 0.0
  %643 = vmatpush.msra.mxu0 0.0
  %644 = vmatpush.msra.mxu0 %v175
  %645 = vmatpush.msra.mxu0 %v174
  %646 = vmatmul.f32.gmra.mxu0 %v182
  %v647 = vpop.f32.mrf.mxu0
  %v648 = vadd.f32 %v415, %v647
  %649 = vmatmul.f32.gmra.mxu0 %v185
  %v650 = vpop.f32.mrf.mxu0
  %v651 = vadd.f32 %v418, %v650
  %652 = vmatmul.f32.gmra.mxu0 %v188
  %v653 = vpop.f32.mrf.mxu0
  %v654 = vadd.f32 %v421, %v653
  %655 = vmatmul.f32.gmra.mxu0 %v191
  %v656 = vpop.f32.mrf.mxu0
  %v657 = vadd.f32 %v424, %v656
  %658 = vmatmul.f32.gmra.mxu0 %v194
  %v659 = vpop.f32.mrf.mxu0
  %v660 = vadd.f32 %v427, %v659
  %661 = vmatmul.f32.gmra.mxu0 %v197
  %v662 = vpop.f32.mrf.mxu0
  %v663 = vadd.f32 %v430, %v662
  %664 = vmatmul.f32.gmra.mxu0 %v200
  %v665 = vpop.f32.mrf.mxu0
  %v666 = vadd.f32 %v433, %v665
  %667 = vmatmul.f32.gmra.mxu0 %v203
  %v668 = vpop.f32.mrf.mxu0
  %v669 = vadd.f32 %v436, %v668
  %670 = vmatmul.f32.gmra.mxu0 %v206
  %v671 = vpop.f32.mrf.mxu0
  %v672 = vadd.f32 %v439, %v671
  %673 = vmatmul.f32.gmra.mxu0 %v209
  %v674 = vpop.f32.mrf.mxu0
  %v675 = vadd.f32 %v442, %v674
  %676 = vmatmul.f32.gmra.mxu0 %v212
  %v677 = vpop.f32.mrf.mxu0
  %v678 = vadd.f32 %v445, %v677
  %679 = vmatmul.f32.gmra.mxu0 %v215
  %v680 = vpop.f32.mrf.mxu0
  %v681 = vadd.f32 %v448, %v680
  %682 = vmatmul.f32.gmra.mxu0 %v218
  %v683 = vpop.f32.mrf.mxu0
  %v684 = vadd.f32 %v451, %v683
  %685 = vmatmul.f32.gmra.mxu0 %v221
  %v686 = vpop.f32.mrf.mxu0
  %v687 = vadd.f32 %v454, %v686
  %688 = vmatmul.f32.gmra.mxu0 %v224
  %v689 = vpop.f32.mrf.mxu0
  %v690 = vadd.f32 %v457, %v689
  %691 = vmatmul.f32.gmra.mxu0 %v227
  %v692 = vpop.f32.mrf.mxu0
  %v693 = vadd.f32 %v460, %v692
  %694 = vmatmul.f32.gmra.mxu0 %v230
  %v695 = vpop.f32.mrf.mxu0
  %v696 = vadd.f32 %v463, %v695
  %697 = vmatmul.f32.gmra.mxu0 %v233
  %v698 = vpop.f32.mrf.mxu0
  %v699 = vadd.f32 %v466, %v698
  %700 = vmatmul.f32.gmra.mxu0 %v236
  %v701 = vpop.f32.mrf.mxu0
  %v702 = vadd.f32 %v469, %v701
  %703 = vmatmul.f32.gmra.mxu0 %v239
  %v704 = vpop.f32.mrf.mxu0
  %v705 = vadd.f32 %v472, %v704
  %706 = vmatmul.f32.gmra.mxu0 %v242
  %v707 = vpop.f32.mrf.mxu0
  %v708 = vadd.f32 %v475, %v707
  %709 = vmatmul.f32.gmra.mxu0 %v245
  %v710 = vpop.f32.mrf.mxu0
  %v711 = vadd.f32 %v478, %v710
  %712 = vmatmul.f32.gmra.mxu0 %v248
  %v713 = vpop.f32.mrf.mxu0
  %v714 = vadd.f32 %v481, %v713
  %715 = vmatmul.f32.gmra.mxu0 %v251
  %v716 = vpop.f32.mrf.mxu0
  %v717 = vadd.f32 %v484, %v716
  %718 = vmatmul.f32.gmra.mxu0 %v254
  %v719 = vpop.f32.mrf.mxu0
  %v720 = vadd.f32 %v487, %v719
  %721 = vmatmul.f32.gmra.mxu0 %v257
  %v722 = vpop.f32.mrf.mxu0
  %v723 = vadd.f32 %v490, %v722
  %724 = vmatmul.f32.gmra.mxu0 %v260
  %v725 = vpop.f32.mrf.mxu0
  %v726 = vadd.f32 %v493, %v725
  %727 = vmatmul.f32.gmra.mxu0 %v263
  %v728 = vpop.f32.mrf.mxu0
  %v729 = vadd.f32 %v496, %v728
  %730 = vmatmul.f32.gmra.mxu0 %v266
  %v731 = vpop.f32.mrf.mxu0
  %v732 = vadd.f32 %v499, %v731
  %733 = vmatmul.f32.gmra.mxu0 %v269
  %v734 = vpop.f32.mrf.mxu0
  %v735 = vadd.f32 %v502, %v734
  %736 = vmatmul.f32.gmra.mxu0 %v272
  %v737 = vpop.f32.mrf.mxu0
  %v738 = vadd.f32 %v505, %v737
  %739 = vmatmul.f32.gmra.mxu0 %v275
  %v740 = vpop.f32.mrf.mxu0
  %v741 = vadd.f32 %v508, %v740
  %742 = vmatmul.f32.gmra.mxu0 %v278
  %v743 = vpop.f32.mrf.mxu0
  %v744 = vadd.f32 %v511, %v743
  %745 = vmatmul.f32.gmra.mxu0 %v281
  %v746 = vpop.f32.mrf.mxu0
  %v747 = vadd.f32 %v514, %v746
  %748 = vmatmul.f32.gmra.mxu0 %v284
  %v749 = vpop.f32.mrf.mxu0
  %v750 = vadd.f32 %v517, %v749
  %751 = vmatmul.f32.gmra.mxu0 %v287
  %v752 = vpop.f32.mrf.mxu0
  %v753 = vadd.f32 %v520, %v752
  %754 = vmatmul.f32.gmra.mxu0 %v290
  %v755 = vpop.f32.mrf.mxu0
  %v756 = vadd.f32 %v523, %v755
  %757 = vmatmul.f32.gmra.mxu0 %v293
  %v758 = vpop.f32.mrf.mxu0
  %v759 = vadd.f32 %v526, %v758
  %760 = vmatmul.f32.gmra.mxu0 %v296
  %v761 = vpop.f32.mrf.mxu0
  %v762 = vadd.f32 %v529, %v761
  %763 = vmatmul.f32.gmra.mxu0 %v299
  %v764 = vpop.f32.mrf.mxu0
  %v765 = vadd.f32 %v532, %v764
  %766 = vmatmul.f32.gmra.mxu0 %v302
  %v767 = vpop.f32.mrf.mxu0
  %v768 = vadd.f32 %v535, %v767
  %769 = vmatmul.f32.gmra.mxu0 %v305
  %v770 = vpop.f32.mrf.mxu0
  %v771 = vadd.f32 %v538, %v770
  %772 = vmatmul.f32.gmra.mxu0 %v308
  %v773 = vpop.f32.mrf.mxu0
  %v774 = vadd.f32 %v541, %v773
  %775 = vmatmul.f32.gmra.mxu0 %v311
  %v776 = vpop.f32.mrf.mxu0
  %v777 = vadd.f32 %v544, %v776
  %778 = vmatmul.f32.gmra.mxu0 %v314
  %v779 = vpop.f32.mrf.mxu0
  %v780 = vadd.f32 %v547, %v779
  %781 = vmatmul.f32.gmra.mxu0 %v317
  %v782 = vpop.f32.mrf.mxu0
  %v783 = vadd.f32 %v550, %v782
  %784 = vmatmul.f32.gmra.mxu0 %v320
  %v785 = vpop.f32.mrf.mxu0
  %v786 = vadd.f32 %v553, %v785
  %787 = vmatmul.f32.gmra.mxu0 %v323
  %v788 = vpop.f32.mrf.mxu0
  %v789 = vadd.f32 %v556, %v788
  %790 = vmatmul.f32.gmra.mxu0 %v326
  %v791 = vpop.f32.mrf.mxu0
  %v792 = vadd.f32 %v559, %v791
  %793 = vmatmul.f32.gmra.mxu0 %v329
  %v794 = vpop.f32.mrf.mxu0
  %v795 = vadd.f32 %v562, %v794
  %796 = vmatmul.f32.gmra.mxu0 %v332
  %v797 = vpop.f32.mrf.mxu0
  %v798 = vadd.f32 %v565, %v797
  %799 = vmatmul.f32.gmra.mxu0 %v335
  %v800 = vpop.f32.mrf.mxu0
  %v801 = vadd.f32 %v568, %v800
  %802 = vmatmul.f32.gmra.mxu0 %v338
  %v803 = vpop.f32.mrf.mxu0
  %v804 = vadd.f32 %v571, %v803
  %805 = vmatmul.f32.gmra.mxu0 %v341
  %v806 = vpop.f32.mrf.mxu0
  %v807 = vadd.f32 %v574, %v806
  %808 = vmatmul.f32.gmra.mxu0 %v344
  %v809 = vpop.f32.mrf.mxu0
  %v810 = vadd.f32 %v577, %v809
  %811 = vmatmul.f32.gmra.mxu0 %v347
  %v812 = vpop.f32.mrf.mxu0
  %v813 = vadd.f32 %v580, %v812
  %814 = vmatmul.f32.gmra.mxu0 %v350
  %v815 = vpop.f32.mrf.mxu0
  %v816 = vadd.f32 %v583, %v815
  %817 = vmatmul.f32.gmra.mxu0 %v353
  %v818 = vpop.f32.mrf.mxu0
  %v819 = vadd.f32 %v586, %v818
  %820 = vmatmul.f32.gmra.mxu0 %v356
  %v821 = vpop.f32.mrf.mxu0
  %v822 = vadd.f32 %v589, %v821
  %823 = vmatmul.f32.gmra.mxu0 %v359
  %v824 = vpop.f32.mrf.mxu0
  %v825 = vadd.f32 %v592, %v824
  %826 = vmatmul.f32.gmra.mxu0 %v362
  %v827 = vpop.f32.mrf.mxu0
  %v828 = vadd.f32 %v595, %v827
  %829 = vmatmul.f32.gmra.mxu0 %v365
  %v830 = vpop.f32.mrf.mxu0
  %v831 = vadd.f32 %v598, %v830
  %832 = vmatmul.f32.gmra.mxu0 %v368
  %v833 = vpop.f32.mrf.mxu0
  %v834 = vadd.f32 %v601, %v833
  %835 = vmatmul.f32.gmra.mxu0 %v371
  %v836 = vpop.f32.mrf.mxu0
  %v837 = vadd.f32 %v604, %v836
  %838 = vmatmul.f32.gmra.mxu0 %v374
  %v839 = vpop.f32.mrf.mxu0
  %v840 = vadd.f32 %v607, %v839
  %841 = vmatmul.f32.gmra.mxu0 %v377
  %v842 = vpop.f32.mrf.mxu0
  %v843 = vadd.f32 %v610, %v842
  %844 = vmatmul.f32.gmra.mxu0 %v380
  %v845 = vpop.f32.mrf.mxu0
  %v846 = vadd.f32 %v613, %v845
  %847 = vmatmul.f32.gmra.mxu0 %v383
  %v848 = vpop.f32.mrf.mxu0
  %v849 = vadd.f32 %v616, %v848
  %850 = vmatmul.f32.gmra.mxu0 %v386
  %v851 = vpop.f32.mrf.mxu0
  %v852 = vadd.f32 %v619, %v851
  %853 = vmatmul.f32.gmra.mxu0 %v389
  %v854 = vpop.f32.mrf.mxu0
  %v855 = vadd.f32 %v622, %v854
  %856 = vmatmul.f32.gmra.mxu0 %v392
  %v857 = vpop.f32.mrf.mxu0
  %v858 = vadd.f32 %v625, %v857
  %859 = vmatmul.f32.gmra.mxu0 %v395
  %v860 = vpop.f32.mrf.mxu0
  %v861 = vadd.f32 %v628, %v860
  %862 = vdwg.mxu0
  %v863 = vmax.f32 %v648, 0.0
  %v864 = vmax.f32 %v651, 0.0
  %v865 = vmax.f32 %v654, 0.0
  %v866 = vmax.f32 %v657, 0.0
  %v867 = vmax.f32 %v660, 0.0
  %v868 = vmax.f32 %v663, 0.0
  %v869 = vmax.f32 %v666, 0.0
  %v870 = vmax.f32 %v669, 0.0
  %v871 = vmax.f32 %v672, 0.0
  %v872 = vmax.f32 %v675, 0.0
  %v873 = vmax.f32 %v678, 0.0
  %v874 = vmax.f32 %v681, 0.0
  %v875 = vmax.f32 %v684, 0.0
  %v876 = vmax.f32 %v687, 0.0
  %v877 = vmax.f32 %v690, 0.0
  %v878 = vmax.f32 %v693, 0.0
  %v879 = vmax.f32 %v696, 0.0
  %v880 = vmax.f32 %v699, 0.0
  %v881 = vmax.f32 %v702, 0.0
  %v882 = vmax.f32 %v705, 0.0
  %v883 = vmax.f32 %v708, 0.0
  %v884 = vmax.f32 %v711, 0.0
  %v885 = vmax.f32 %v714, 0.0
  %v886 = vmax.f32 %v717, 0.0
  %v887 = vmax.f32 %v720, 0.0
  %v888 = vmax.f32 %v723, 0.0
  %v889 = vmax.f32 %v726, 0.0
  %v890 = vmax.f32 %v729, 0.0
  %v891 = vmax.f32 %v732, 0.0
  %v892 = vmax.f32 %v735, 0.0
  %v893 = vmax.f32 %v738, 0.0
  %v894 = vmax.f32 %v741, 0.0
  %v895 = vmax.f32 %v744, 0.0
  %v896 = vmax.f32 %v747, 0.0
  %v897 = vmax.f32 %v750, 0.0
  %v898 = vmax.f32 %v753, 0.0
  %v899 = vmax.f32 %v756, 0.0
  %v900 = vmax.f32 %v759, 0.0
  %v901 = vmax.f32 %v762, 0.0
  %v902 = vmax.f32 %v765, 0.0
  %v903 = vmax.f32 %v768, 0.0
  %v904 = vmax.f32 %v771, 0.0
  %v905 = vmax.f32 %v774, 0.0
  %v906 = vmax.f32 %v777, 0.0
  %v907 = vmax.f32 %v780, 0.0
  %v908 = vmax.f32 %v783, 0.0
  %v909 = vmax.f32 %v786, 0.0
  %v910 = vmax.f32 %v789, 0.0
  %v911 = vmax.f32 %v792, 0.0
  %v912 = vmax.f32 %v795, 0.0
  %v913 = vmax.f32 %v798, 0.0
  %v914 = vmax.f32 %v801, 0.0
  %v915 = vmax.f32 %v804, 0.0
  %v916 = vmax.f32 %v807, 0.0
  %v917 = vmax.f32 %v810, 0.0
  %v918 = vmax.f32 %v813, 0.0
  %v919 = vmax.f32 %v816, 0.0
  %v920 = vmax.f32 %v819, 0.0
  %v921 = vmax.f32 %v822, 0.0
  %v922 = vmax.f32 %v825, 0.0
  %v923 = vmax.f32 %v828, 0.0
  %v924 = vmax.f32 %v831, 0.0
  %v925 = vmax.f32 %v834, 0.0
  %v926 = vmax.f32 %v837, 0.0
  %v927 = vmax.f32 %v840, 0.0
  %v928 = vmax.f32 %v843, 0.0
  %v929 = vmax.f32 %v846, 0.0
  %v930 = vmax.f32 %v849, 0.0
  %v931 = vmax.f32 %v852, 0.0
  %v932 = vmax.f32 %v855, 0.0
  %v933 = vmax.f32 %v858, 0.0
  %v934 = vmax.f32 %v861, 0.0
  %935 = vst.msk [vmem:[%s3] sm:$0xff] %vm180, %v863
  %936 = vst.msk [vmem:[%s3 + $0x8] sm:$0xff] %vm180, %v864
  %937 = vst.msk [vmem:[%s3 + $0x10] sm:$0xff] %vm180, %v865
  %938 = vst.msk [vmem:[%s3 + $0x18] sm:$0xff] %vm180, %v866
  %939 = vst.msk [vmem:[%s3 + $0x20] sm:$0xff] %vm180, %v867
  %940 = vst.msk [vmem:[%s3 + $0x28] sm:$0xff] %vm180, %v868
  %941 = vst.msk [vmem:[%s3 + $0x30] sm:$0xff] %vm180, %v869
  %942 = vst.msk [vmem:[%s3 + $0x38] sm:$0xff] %vm180, %v870
  %943 = vst.msk [vmem:[%s3 + $0x40] sm:$0xff] %vm180, %v871
  %944 = vst.msk [vmem:[%s3 + $0x48] sm:$0xff] %vm180, %v872
  %945 = vst.msk [vmem:[%s3 + $0x50] sm:$0xff] %vm180, %v873
  %946 = vst.msk [vmem:[%s3 + $0x58] sm:$0xff] %vm180, %v874
  %947 = vst.msk [vmem:[%s3 + $0x60] sm:$0xff] %vm180, %v875
  %948 = vst.msk [vmem:[%s3 + $0x68] sm:$0xff] %vm180, %v876
  %949 = vst.msk [vmem:[%s3 + $0x70] sm:$0xff] %vm180, %v877
  %950 = vst.msk [vmem:[%s3 + $0x78] sm:$0xff] %vm180, %v878
  %951 = vst.msk [vmem:[%s3 + $0x80] sm:$0xff] %vm180, %v879
  %952 = vst.msk [vmem:[%s3 + $0x88] sm:$0xff] %vm180, %v880
  %953 = vst.msk [vmem:[%s3 + $0x90] sm:$0xff] %vm180, %v881
  %954 = vst.msk [vmem:[%s3 + $0x98] sm:$0xff] %vm180, %v882
  %955 = vst.msk [vmem:[%s3 + $0xa0] sm:$0xff] %vm180, %v883
  %956 = vst.msk [vmem:[%s3 + $0xa8] sm:$0xff] %vm180, %v884
  %957 = vst.msk [vmem:[%s3 + $0xb0] sm:$0xff] %vm180, %v885
  %958 = vst.msk [vmem:[%s3 + $0xb8] sm:$0xff] %vm180, %v886
  %959 = vst.msk [vmem:[%s3 + $0xc0] sm:$0xff] %vm180, %v887
  %960 = vst.msk [vmem:[%s3 + $0xc8] sm:$0xff] %vm180, %v888
  %961 = vst.msk [vmem:[%s3 + $0xd0] sm:$0xff] %vm180, %v889
  %962 = vst.msk [vmem:[%s3 + $0xd8] sm:$0xff] %vm180, %v890
  %963 = vst.msk [vmem:[%s3 + $0xe0] sm:$0xff] %vm180, %v891
  %964 = vst.msk [vmem:[%s3 + $0xe8] sm:$0xff] %vm180, %v892
  %965 = vst.msk [vmem:[%s3 + $0xf0] sm:$0xff] %vm180, %v893
  %966 = vst.msk [vmem:[%s3 + $0xf8] sm:$0xff] %vm180, %v894
  %967 = vst.msk [vmem:[%s3 + $0x100] sm:$0xff] %vm180, %v895
  %968 = vst.msk [vmem:[%s3 + $0x108] sm:$0xff] %vm180, %v896
  %969 = vst.msk [vmem:[%s3 + $0x110] sm:$0xff] %vm180, %v897
  %970 = vst.msk [vmem:[%s3 + $0x118] sm:$0xff] %vm180, %v898
  %971 = vst.msk [vmem:[%s3 + $0x120] sm:$0xff] %vm180, %v899
  %972 = vst.msk [vmem:[%s3 + $0x128] sm:$0xff] %vm180, %v900
  %973 = vst.msk [vmem:[%s3 + $0x130] sm:$0xff] %vm180, %v901
  %974 = vst.msk [vmem:[%s3 + $0x138] sm:$0xff] %vm180, %v902
  %975 = vst.msk [vmem:[%s3 + $0x140] sm:$0xff] %vm180, %v903
  %976 = vst.msk [vmem:[%s3 + $0x148] sm:$0xff] %vm180, %v904
  %977 = vst.msk [vmem:[%s3 + $0x150] sm:$0xff] %vm180, %v905
  %978 = vst.msk [vmem:[%s3 + $0x158] sm:$0xff] %vm180, %v906
  %979 = vst.msk [vmem:[%s3 + $0x160] sm:$0xff] %vm180, %v907
  %980 = vst.msk [vmem:[%s3 + $0x168] sm:$0xff] %vm180, %v908
  %981 = vst.msk [vmem:[%s3 + $0x170] sm:$0xff] %vm180, %v909
  %982 = vst.msk [vmem:[%s3 + $0x178] sm:$0xff] %vm180, %v910
  %983 = vst.msk [vmem:[%s3 + $0x180] sm:$0xff] %vm180, %v911
  %984 = vst.msk [vmem:[%s3 + $0x188] sm:$0xff] %vm180, %v912
  %985 = vst.msk [vmem:[%s3 + $0x190] sm:$0xff] %vm180, %v913
  %986 = vst.msk [vmem:[%s3 + $0x198] sm:$0xff] %vm180, %v914
  %987 = vst.msk [vmem:[%s3 + $0x1a0] sm:$0xff] %vm180, %v915
  %988 = vst.msk [vmem:[%s3 + $0x1a8] sm:$0xff] %vm180, %v916
  %989 = vst.msk [vmem:[%s3 + $0x1b0] sm:$0xff] %vm180, %v917
  %990 = vst.msk [vmem:[%s3 + $0x1b8] sm:$0xff] %vm180, %v918
  %991 = vst.msk [vmem:[%s3 + $0x1c0] sm:$0xff] %vm180, %v919
  %992 = vst.msk [vmem:[%s3 + $0x1c8] sm:$0xff] %vm180, %v920
  %993 = vst.msk [vmem:[%s3 + $0x1d0] sm:$0xff] %vm180, %v921
  %994 = vst.msk [vmem:[%s3 + $0x1d8] sm:$0xff] %vm180, %v922
  %995 = vst.msk [vmem:[%s3 + $0x1e0] sm:$0xff] %vm180, %v923
  %996 = vst.msk [vmem:[%s3 + $0x1e8] sm:$0xff] %vm180, %v924
  %997 = vst.msk [vmem:[%s3 + $0x1f0] sm:$0xff] %vm180, %v925
  %998 = vst.msk [vmem:[%s3 + $0x1f8] sm:$0xff] %vm180, %v926
  %999 = vst.msk [vmem:[%s3 + $0x200] sm:$0xff] %vm180, %v927
  %1000 = vst.msk [vmem:[%s3 + $0x208] sm:$0xff] %vm180, %v928
  %1001 = vst.msk [vmem:[%s3 + $0x210] sm:$0xff] %vm180, %v929
  %1002 = vst.msk [vmem:[%s3 + $0x218] sm:$0xff] %vm180, %v930
  %1003 = vst.msk [vmem:[%s3 + $0x220] sm:$0xff] %vm180, %v931
  %1004 = vst.msk [vmem:[%s3 + $0x228] sm:$0xff] %vm180, %v932
  %1005 = vst.msk [vmem:[%s3 + $0x230] sm:$0xff] %vm180, %v933
  %1006 = vst.msk [vmem:[%s3 + $0x238] sm:$0xff] %vm180, %v934
  // Predicated region
  $region14: #{rollout_encoder_forward.4} parent=0 // pred_check
    _
  $region15: #{rollout_encoder_forward.4} parent=0 // pred_check_branch
    %1008 = sbr.rel (0) target = $region17
  $region16: #{rollout_encoder_forward.4} parent=0 // pred_region
    _
  $region17: #{rollout_encoder_forward.4} parent=0 // pred_fallthru
    _
  // Predicated region
  $region18: #{rollout_encoder_forward.4} parent=0 // pred_check
    _
  $region19: #{rollout_encoder_forward.4} parent=0 // pred_check_branch
    %1010 = sbr.rel (0) target = $region21
  $region20: #{rollout_encoder_forward.4} parent=0 // pred_region
    _
  $region21: #{rollout_encoder_forward.4} parent=0 // pred_fallthru
    _

// kernel: rollout_encoder_forward.5
$region0: #{rollout_encoder_forward.5}
  #allocation0 [shape = 'u32[]', space=smem, size = 0x4, offset = 0x4, fixed_abs, tag = 'smem constant byte address 0x4 - core index']
  #allocation1 [shape = 'u32[72,128]{1,0:T(1,128)}', space=vmem, size = 0x9000, scoped, tag = 'internal scratch']
  %s0 = inlined_call_operand.vmem [shape: f32[16,576], index: 0, kind: input, shape index: {}]
  %s1 = inlined_call_operand.vmem [shape: f32[16,1], index: 1, kind: input, shape index: {}]
  %s2 = inlined_call_operand.vmem [shape: f32[576,96], index: 2, kind: input, shape index: {}]
  %s3 = inlined_call_operand.vmem [shape: f32[1,96], index: 3, kind: input, shape index: {}]
  %s4 = inlined_call_operand.vmem [shape: f32[32,96], index: 4, kind: input, shape index: {}]
  %s5 = inlined_call_operand.vmem [shape: f32[1,96], index: 5, kind: input, shape index: {}]
  %s6 = inlined_call_operand.vmem [shape: f32[1,96], index: 6, kind: input, shape index: {}]
  %s7 = inlined_call_operand.hbm [shape: f32[2,32], index: 7, kind: output, shape index: {}]
  %s8 = sld [smem:[#allocation0]]
  $region38: #{rollout_encoder_forward.5} parent=0
    _
  %s10 = ssub.s32 1, %s8
  %s11 = scalar_select 0, %s10, %s8
  $region1: #{rollout_encoder_forward.5} parent=0
    #allocation2 [shape = 'u8[1024]{0}', space=vmem, size = 0x400, scoped, tag = 'output window, operand 0, single buffered']
    #allocation3 [shape = 's32[1]{0}', space=sflag, size = 0x4, scoped, tag = 'scoped memory for rollout_encoder_forward.5']
    %12 = vsyncpa [#allocation3], 0
    // Predicated region
    $region2: #{rollout_encoder_forward.5} parent=1 // pred_check
      _
    $region3: #{rollout_encoder_forward.5} parent=1 // pred_check_branch
      %14 = sbr.rel (0) target = $region5
    $region4: #{rollout_encoder_forward.5} parent=1 // pred_region
      _
    $region5: #{rollout_encoder_forward.5} parent=1 // pred_fallthru
      _
    // Predicated region
    $region6: #{rollout_encoder_forward.5} parent=1 // pred_check
      _
    $region7: #{rollout_encoder_forward.5} parent=1 // pred_check_branch
      %16 = sbr.rel (0) target = $region9
    $region8: #{rollout_encoder_forward.5} parent=1 // pred_region
      _
    $region9: #{rollout_encoder_forward.5} parent=1 // pred_fallthru
      _
    // Predicated region
    $region10: #{rollout_encoder_forward.5} parent=1 // pred_check
      _
    $region11: #{rollout_encoder_forward.5} parent=1 // pred_check_branch
      %18 = sbr.rel (0) target = $region13
    $region12: #{rollout_encoder_forward.5} parent=1 // pred_region
      _
    $region13: #{rollout_encoder_forward.5} parent=1 // pred_fallthru
      _
    // Predicated region
    $region14: #{rollout_encoder_forward.5} parent=1 // pred_check
      _
    $region15: #{rollout_encoder_forward.5} parent=1 // pred_check_branch
      %20 = sbr.rel (0) target = $region17
    $region16: #{rollout_encoder_forward.5} parent=1 // pred_region
      _
    $region17: #{rollout_encoder_forward.5} parent=1 // pred_fallthru
      _
    // Predicated region
    $region18: #{rollout_encoder_forward.5} parent=1 // pred_check
      _
    $region19: #{rollout_encoder_forward.5} parent=1 // pred_check_branch
      %22 = sbr.rel (0) target = $region21
    $region20: #{rollout_encoder_forward.5} parent=1 // pred_region
      _
    $region21: #{rollout_encoder_forward.5} parent=1 // pred_fallthru
      _
    // Predicated region
    $region22: #{rollout_encoder_forward.5} parent=1 // pred_check
      _
    $region23: #{rollout_encoder_forward.5} parent=1 // pred_check_branch
      %24 = sbr.rel (0) target = $region25
    $region24: #{rollout_encoder_forward.5} parent=1 // pred_region
      _
    $region25: #{rollout_encoder_forward.5} parent=1 // pred_fallthru
      _
    // Predicated region
    $region26: #{rollout_encoder_forward.5} parent=1 // pred_check
      _
    $region27: #{rollout_encoder_forward.5} parent=1 // pred_check_branch
      %26 = sbr.rel (0) target = $region29
    $region28: #{rollout_encoder_forward.5} parent=1 // pred_region
      _
    $region29: #{rollout_encoder_forward.5} parent=1 // pred_fallthru
      _
    %v27 = vld [vmem:[%s0] sm:$0xff]
    %v28 = vld [vmem:[%s0 + $0x8] sm:$0xff]
    %v29 = vld [vmem:[%s0 + $0x10] sm:$0xff]
    %v30 = vld [vmem:[%s0 + $0x18] sm:$0xff]
    %v31 = vld [vmem:[%s0 + $0x20] sm:$0xff]
    %v32 = vld [vmem:[%s0 + $0x28] sm:$0xff]
    %v33 = vld [vmem:[%s0 + $0x30] sm:$0xff]
    %v34 = vld [vmem:[%s0 + $0x38] sm:$0xff]
    %v35 = vld [vmem:[%s0 + $0x40] sm:$0xff]
    %v36 = vld [vmem:[%s0 + $0x48] sm:$0xff]
    %v37 = vld [vmem:[%s2] sm:$0xff]
    %v38 = vld [vmem:[%s2 + $0x8] sm:$0xff]
    %v39 = vld [vmem:[%s2 + $0x10] sm:$0xff]
    %v40 = vld [vmem:[%s2 + $0x18] sm:$0xff]
    %v41 = vld [vmem:[%s2 + $0x20] sm:$0xff]
    %v42 = vld [vmem:[%s2 + $0x28] sm:$0xff]
    %v43 = vld [vmem:[%s2 + $0x30] sm:$0xff]
    %v44 = vld [vmem:[%s2 + $0x38] sm:$0xff]
    %v45 = vld [vmem:[%s2 + $0x40] sm:$0xff]
    %v46 = vld [vmem:[%s2 + $0x48] sm:$0xff]
    %v47 = vld [vmem:[%s2 + $0x50] sm:$0xff]
    %v48 = vld [vmem:[%s2 + $0x58] sm:$0xff]
    %v49 = vld [vmem:[%s2 + $0x60] sm:$0xff]
    %v50 = vld [vmem:[%s2 + $0x68] sm:$0xff]
    %v51 = vld [vmem:[%s2 + $0x70] sm:$0xff]
    %v52 = vld [vmem:[%s2 + $0x78] sm:$0xff]
    %v53 = vld [vmem:[%s2 + $0x80] sm:$0xff]
    %v54 = vld [vmem:[%s2 + $0x88] sm:$0xff]
    %v55 = vld [vmem:[%s2 + $0x90] sm:$0xff]
    %v56 = vld [vmem:[%s2 + $0x98] sm:$0xff]
    %v57 = vld [vmem:[%s2 + $0xa0] sm:$0xff]
    %v58 = vld [vmem:[%s2 + $0xa8] sm:$0xff]
    %v59 = vld [vmem:[%s2 + $0xb0] sm:$0xff]
    %v60 = vld [vmem:[%s2 + $0xb8] sm:$0xff]
    %v61 = vld [vmem:[%s2 + $0xc0] sm:$0xff]
    %v62 = vld [vmem:[%s2 + $0xc8] sm:$0xff]
    %v63 = vld [vmem:[%s2 + $0xd0] sm:$0xff]
    %v64 = vld [vmem:[%s2 + $0xd8] sm:$0xff]
    %v65 = vld [vmem:[%s2 + $0xe0] sm:$0xff]
    %v66 = vld [vmem:[%s2 + $0xe8] sm:$0xff]
    %v67 = vld [vmem:[%s2 + $0xf0] sm:$0xff]
    %v68 = vld [vmem:[%s2 + $0xf8] sm:$0xff]
    %v69 = vld [vmem:[%s2 + $0x100] sm:$0xff]
    %v70 = vld [vmem:[%s2 + $0x108] sm:$0xff]
    %v71 = vld [vmem:[%s2 + $0x110] sm:$0xff]
    %v72 = vld [vmem:[%s2 + $0x118] sm:$0xff]
    %v73 = vld [vmem:[%s2 + $0x120] sm:$0xff]
    %v74 = vld [vmem:[%s2 + $0x128] sm:$0xff]
    %v75 = vld [vmem:[%s2 + $0x130] sm:$0xff]
    %v76 = vld [vmem:[%s2 + $0x138] sm:$0xff]
    %v77 = vld [vmem:[%s2 + $0x140] sm:$0xff]
    %v78 = vld [vmem:[%s2 + $0x148] sm:$0xff]
    %v79 = vld [vmem:[%s2 + $0x150] sm:$0xff]
    %v80 = vld [vmem:[%s2 + $0x158] sm:$0xff]
    %v81 = vld [vmem:[%s2 + $0x160] sm:$0xff]
    %v82 = vld [vmem:[%s2 + $0x168] sm:$0xff]
    %v83 = vld [vmem:[%s2 + $0x170] sm:$0xff]
    %v84 = vld [vmem:[%s2 + $0x178] sm:$0xff]
    %v85 = vld [vmem:[%s2 + $0x180] sm:$0xff]
    %v86 = vld [vmem:[%s2 + $0x188] sm:$0xff]
    %v87 = vld [vmem:[%s2 + $0x190] sm:$0xff]
    %v88 = vld [vmem:[%s2 + $0x198] sm:$0xff]
    %v89 = vld [vmem:[%s2 + $0x1a0] sm:$0xff]
    %v90 = vld [vmem:[%s2 + $0x1a8] sm:$0xff]
    %v91 = vld [vmem:[%s2 + $0x1b0] sm:$0xff]
    %v92 = vld [vmem:[%s2 + $0x1b8] sm:$0xff]
    %v93 = vld [vmem:[%s2 + $0x1c0] sm:$0xff]
    %v94 = vld [vmem:[%s2 + $0x1c8] sm:$0xff]
    %v95 = vld [vmem:[%s2 + $0x1d0] sm:$0xff]
    %v96 = vld [vmem:[%s2 + $0x1d8] sm:$0xff]
    %v97 = vld [vmem:[%s2 + $0x1e0] sm:$0xff]
    %v98 = vld [vmem:[%s2 + $0x1e8] sm:$0xff]
    %v99 = vld [vmem:[%s2 + $0x1f0] sm:$0xff]
    %v100 = vld [vmem:[%s2 + $0x1f8] sm:$0xff]
    %v101 = vld [vmem:[%s2 + $0x200] sm:$0xff]
    %v102 = vld [vmem:[%s2 + $0x208] sm:$0xff]
    %v103 = vld [vmem:[%s2 + $0x210] sm:$0xff]
    %v104 = vld [vmem:[%s2 + $0x218] sm:$0xff]
    %v105 = vld [vmem:[%s2 + $0x220] sm:$0xff]
    %v106 = vld [vmem:[%s2 + $0x228] sm:$0xff]
    %v107 = vld [vmem:[%s2 + $0x230] sm:$0xff]
    %v108 = vld [vmem:[%s2 + $0x238] sm:$0xff]
    %v109 = vld [vmem:[%s1] sm:$0xff]
    %v110 = vld [vmem:[%s1 + $0x8] sm:$0xff]
    %v111 = vld [vmem:[%s3] sm:$0x1]
    %113 = vset.pattern.permute.xlu0 0
    %114 = vperm.xlu0 %113, %v109
    %v115 = vpop.permute.xlu0 %114
    %118 = vset.pattern.permute.xlu0 0
    %119 = vperm.xlu0 %118, %v110
    %v120 = vpop.permute.xlu0 %119
    %v123 = vperm.slane %v111, 0
    %v125 = vmul.f32 %v115, %v123
    %v126 = vmul.f32 %v120, %v123
    %vm127 = vcmask 523264
    %v129 = vsel %vm127, %v31, 0
    %v132 = vsel %vm127, %v36, 0
    %134 = vmatpush.msra.mxu0 %v52
    %135 = vmatpush.msra.mxu0 %v51
    %136 = vmatpush.msra.mxu0 %v50
    %137 = vmatpush.msra.mxu0 %v49
    %138 = vmatpush.msra.mxu0 %v48
    %139 = vmatpush.msra.mxu0 %v47
    %140 = vmatpush.msra.mxu0 %v46
    %141 = vmatpush.msra.mxu0 %v45
    %142 = vmatpush.msra.mxu0 %v44
    %143 = vmatpush.msra.mxu0 %v43
    %144 = vmatpush.msra.mxu0 %v42
    %145 = vmatpush.msra.mxu0 %v41
    %146 = vmatpush.msra.mxu0 %v40
    %147 = vmatpush.msra.mxu0 %v39
    %148 = vmatpush.msra.mxu0 %v38
    %149 = vmatpush.msra.mxu0 %v37
    %150 = vmatmul.f32.gmra.mxu0 %v27
    %v151 = vpop.f32.mrf.mxu0
    %v152 = vadd.f32 %v125, %v151
    %153 = vmatmul.f32.gmra.mxu0 %v32
    %v154 = vpop.f32.mrf.mxu0
    %v155 = vadd.f32 %v126, %v154
    %156 = vdwg.mxu0
    %157 = vmatpush.msra.mxu0 %v68
    %158 = vmatpush.msra.mxu0 %v67
    %159 = vmatpush.msra.mxu0 %v66
    %160 = vmatpush.msra.mxu0 %v65
    %161 = vmatpush.msra.mxu0 %v64
    %162 = vmatpush.msra.mxu0 %v63
    %163 = vmatpush.msra.mxu0 %v62
    %164 = vmatpush.msra.mxu0 %v61
    %165 = vmatpush.msra.mxu0 %v60
    %166 = vmatpush.msra.mxu0 %v59
    %167 = vmatpush.msra.mxu0 %v58
    %168 = vmatpush.msra.mxu0 %v57
    %169 = vmatpush.msra.mxu0 %v56
    %170 = vmatpush.msra.mxu0 %v55
    %171 = vmatpush.msra.mxu0 %v54
    %172 = vmatpush.msra.mxu0 %v53
    %173 = vmatmul.f32.gmra.mxu0 %v28
    %v174 = vpop.f32.mrf.mxu0
    %v175 = vadd.f32 %v152, %v174
    %176 = vmatmul.f32.gmra.mxu0 %v33
    %v177 = vpop.f32.mrf.mxu0
    %v178 = vadd.f32 %v155, %v177
    %179 = vdwg.mxu0
    %180 = vmatpush.msra.mxu0 %v84
    %181 = vmatpush.msra.mxu0 %v83
    %182 = vmatpush.msra.mxu0 %v82
    %183 = vmatpush.msra.mxu0 %v81
    %184 = vmatpush.msra.mxu0 %v80
    %185 = vmatpush.msra.mxu0 %v79
    %186 = vmatpush.msra.mxu0 %v78
    %187 = vmatpush.msra.mxu0 %v77
    %188 = vmatpush.msra.mxu0 %v76
    %189 = vmatpush.msra.mxu0 %v75
    %190 = vmatpush.msra.mxu0 %v74
    %191 = vmatpush.msra.mxu0 %v73
    %192 = vmatpush.msra.mxu0 %v72
    %193 = vmatpush.msra.mxu0 %v71
    %194 = vmatpush.msra.mxu0 %v70
    %195 = vmatpush.msra.mxu0 %v69
    %196 = vmatmul.f32.gmra.mxu0 %v29
    %v197 = vpop.f32.mrf.mxu0
    %v198 = vadd.f32 %v175, %v197
    %199 = vmatmul.f32.gmra.mxu0 %v34
    %v200 = vpop.f32.mrf.mxu0
    %v201 = vadd.f32 %v178, %v200
    %202 = vdwg.mxu0
    %203 = vmatpush.msra.mxu0 %v100
    %204 = vmatpush.msra.mxu0 %v99
    %205 = vmatpush.msra.mxu0 %v98
    %206 = vmatpush.msra.mxu0 %v97
    %207 = vmatpush.msra.mxu0 %v96
    %208 = vmatpush.msra.mxu0 %v95
    %209 = vmatpush.msra.mxu0 %v94
    %210 = vmatpush.msra.mxu0 %v93
    %211 = vmatpush.msra.mxu0 %v92
    %212 = vmatpush.msra.mxu0 %v91
    %213 = vmatpush.msra.mxu0 %v90
    %214 = vmatpush.msra.mxu0 %v89
    %215 = vmatpush.msra.mxu0 %v88
    %216 = vmatpush.msra.mxu0 %v87
    %217 = vmatpush.msra.mxu0 %v86
    %218 = vmatpush.msra.mxu0 %v85
    %219 = vmatmul.f32.gmra.mxu0 %v30
    %v220 = vpop.f32.mrf.mxu0
    %v221 = vadd.f32 %v198, %v220
    %222 = vmatmul.f32.gmra.mxu0 %v35
    %v223 = vpop.f32.mrf.mxu0
    %v224 = vadd.f32 %v201, %v223
    %225 = vdwg.mxu0
    %226 = vmatpush.msra.mxu0 0.0
    %227 = vmatpush.msra.mxu0 0.0
    %228 = vmatpush.msra.mxu0 0.0
    %229 = vmatpush.msra.mxu0 0.0
    %230 = vmatpush.msra.mxu0 0.0
    %231 = vmatpush.msra.mxu0 0.0
    %232 = vmatpush.msra.mxu0 0.0
    %233 = vmatpush.msra.mxu0 0.0
    %234 = vmatpush.msra.mxu0 %v108
    %235 = vmatpush.msra.mxu0 %v107
    %236 = vmatpush.msra.mxu0 %v106
    %237 = vmatpush.msra.mxu0 %v105
    %238 = vmatpush.msra.mxu0 %v104
    %239 = vmatpush.msra.mxu0 %v103
    %240 = vmatpush.msra.mxu0 %v102
    %241 = vmatpush.msra.mxu0 %v101
    %242 = vmatmul.f32.gmra.mxu0 %v129
    %v243 = vpop.f32.mrf.mxu0
    %v244 = vadd.f32 %v221, %v243
    %245 = vmatmul.f32.gmra.mxu0 %v132
    %v246 = vpop.f32.mrf.mxu0
    %v247 = vadd.f32 %v224, %v246
    %248 = vdwg.mxu0
    %v249 = vld [vmem:[%s5] sm:$0x1]
    %v251 = vperm.slane %v249, 0
    %v253 = vadd.f32 %v244, %v251
    %v254 = vadd.f32 %v247, %v251
    %v255 = vld [vmem:[%s4] sm:$0xff]
    %v256 = vld [vmem:[%s4 + $0x8] sm:$0xff]
    %v257 = vld [vmem:[%s4 + $0x10] sm:$0xff]
    %v258 = vld [vmem:[%s4 + $0x18] sm:$0xff]
    %v259 = vld [vmem:[%s6] sm:$0x1]
    %v261 = vperm.slane %v259, 0
    %vm263 = vcmask 261120
    %v265 = vsel %vm263, 0.0, 0
    %267 = vmatpush.msra.mxu0 0.0
    %268 = vmatpush.msra.mxu0 0.0
    %269 = vmatpush.msra.mxu0 0.0
    %270 = vmatpush.msra.mxu0 0.0
    %271 = vmatpush.msra.mxu0 0.0
    %272 = vmatpush.msra.mxu0 0.0
    %273 = vmatpush.msra.mxu0 0.0
    %274 = vmatpush.msra.mxu0 0.0
    %275 = vmatpush.msra.mxu0 0.0
    %276 = vmatpush.msra.mxu0 0.0
    %277 = vmatpush.msra.mxu0 0.0
    %278 = vmatpush.msra.mxu0 0.0
    %279 = vmatpush.msra.mxu0 %v258
    %280 = vmatpush.msra.mxu0 %v257
    %281 = vmatpush.msra.mxu0 %v256
    %282 = vmatpush.msra.mxu0 %v255
    %283 = vmatmul.f32.gmra.mxu0 %v265
    %v284 = vpop.f32.mrf.mxu0
    %v285 = vadd.f32 %v261, %v284
    %286 = vdwg.mxu0
    %v287 = vadd.f32 %v253, %v285
    %v288 = vxor.u32 %v287, 2147483648
    %v289 = vmul.f32 %v288, 1.442695
    %v290 = vpow.pop %v289
    %v291 = vadd.f32 %v290, 1.0
    %v292 = vrcp.pop %v291
    %v293 = vmul.f32 %v291, %v292
    %v294 = vsub.f32 1.0, %v293
    %v295 = vmul.f32 %v292, %v294
    %v296 = vadd.f32 %v292, %v295
    %vm297 = vweird.f32 %v291
    %vm298 = vweird.f32 %v292
    %vm299 = vmor %vm297, %vm298
    %v300 = vsel %vm299, %v292, %v296
    %v301 = vand.u32 2147483647, %v291
    %vm302 = vcmp.eq.f32.partialorder %v301, 8.507059e+37
    %v303 = vand.u32 %v291, 2147483648
    %v304 = vor.u32 1.1754944e-38, %v303
    %v305 = vsel %vm302, %v304, %v300
    %v306 = vmul.f32 1.0, %v305
    %308 = vrot.lane.b32.xlu0 %v285, 64
    %v309 = vpop.permute.xlu0 %308
    %v311 = vmul.f32 %v306, %v309
    %313 = vrot.lane.b32.xlu0 %v311, 64
    %v314 = vpop.permute.xlu0 %313
    %v316 = vadd.f32 %v253, %v314
    %v317 = vtanh.pop %v316
    %v318 = vsub.f32 1.0, %v306
    %320 = vrot.lane.b32.xlu0 %v317, 96
    %v321 = vpop.permute.xlu0 %320
    %v323 = vmul.f32 %v318, %v321
    %v324 = vmul.f32 %v306, 0.0
    %v325 = vadd.f32 %v323, %v324
    %327 = vrot.lane.b32.xlu0 %v325, 96
    %v328 = vpop.permute.xlu0 %327
    %v329 = vsel %vm263, %v328, 0
    %331 = vmatpush.msra.mxu0 0.0
    %332 = vmatpush.msra.mxu0 0.0
    %333 = vmatpush.msra.mxu0 0.0
    %334 = vmatpush.msra.mxu0 0.0
    %335 = vmatpush.msra.mxu0 0.0
    %336 = vmatpush.msra.mxu0 0.0
    %337 = vmatpush.msra.mxu0 0.0
    %338 = vmatpush.msra.mxu0 0.0
    %339 = vmatpush.msra.mxu0 0.0
    %340 = vmatpush.msra.mxu0 0.0
    %341 = vmatpush.msra.mxu0 0.0
    %342 = vmatpush.msra.mxu0 0.0
    %343 = vmatpush.msra.mxu0 %v258
    %344 = vmatpush.msra.mxu0 %v257
    %345 = vmatpush.msra.mxu0 %v256
    %346 = vmatpush.msra.mxu0 %v255
    %347 = vmatmul.f32.gmra.mxu0 %v329
    %v348 = vpop.f32.mrf.mxu0
    %v349 = vadd.f32 %v261, %v348
    %350 = vdwg.mxu0
    %v352 = vrot.slane %v349, 6
    %v354 = vadd.f32 %v253, %v352
    %v355 = vxor.u32 %v354, 2147483648
    %v356 = vmul.f32 %v355, 1.442695
    %v357 = vpow.pop %v356
    %v358 = vadd.f32 %v357, 1.0
    %v359 = vrcp.pop %v358
    %v360 = vmul.f32 %v358, %v359
    %v361 = vsub.f32 1.0, %v360
    %v362 = vmul.f32 %v359, %v361
    %v363 = vadd.f32 %v359, %v362
    %vm364 = vweird.f32 %v358
    %vm365 = vweird.f32 %v359
    %vm366 = vmor %vm364, %vm365
    %v367 = vsel %vm366, %v359, %v363
    %v368 = vand.u32 2147483647, %v358
    %vm369 = vcmp.eq.f32.partialorder %v368, 8.507059e+37
    %v370 = vand.u32 %v358, 2147483648
    %v371 = vor.u32 1.1754944e-38, %v370
    %v372 = vsel %vm369, %v371, %v367
    %v373 = vmul.f32 1.0, %v372
    %374 = vrot.lane.b32.xlu0 %v352, 64
    %v375 = vpop.permute.xlu0 %374
    %v377 = vmul.f32 %v373, %v375
    %379 = vrot.lane.b32.xlu0 %v377, 64
    %v380 = vpop.permute.xlu0 %379
    %v382 = vadd.f32 %v253, %v380
    %v383 = vtanh.pop %v382
    %v384 = vsub.f32 1.0, %v373
    %386 = vrot.lane.b32.xlu0 %v383, 96
    %v387 = vpop.permute.xlu0 %386
    %v389 = vmul.f32 %v384, %v387
    %v390 = vrot.slane %v325, 6
    %v392 = vmul.f32 %v373, %v390
    %v393 = vadd.f32 %v389, %v392
    %v395 = vrot.slane %v393, 2
    %396 = vrot.lane.b32.xlu0 %v395, 96
    %v397 = vpop.permute.xlu0 %396
    %v398 = vsel %vm263, %v397, 0
    %400 = vmatpush.msra.mxu0 0.0
    %401 = vmatpush.msra.mxu0 0.0
    %402 = vmatpush.msra.mxu0 0.0
    %403 = vmatpush.msra.mxu0 0.0
    %404 = vmatpush.msra.mxu0 0.0
    %405 = vmatpush.msra.mxu0 0.0
    %406 = vmatpush.msra.mxu0 0.0
    %407 = vmatpush.msra.mxu0 0.0
    %408 = vmatpush.msra.mxu0 0.0
    %409 = vmatpush.msra.mxu0 0.0
    %410 = vmatpush.msra.mxu0 0.0
    %411 = vmatpush.msra.mxu0 0.0
    %412 = vmatpush.msra.mxu0 %v258
    %413 = vmatpush.msra.mxu0 %v257
    %414 = vmatpush.msra.mxu0 %v256
    %415 = vmatpush.msra.mxu0 %v255
    %416 = vmatmul.f32.gmra.mxu0 %v398
    %v417 = vpop.f32.mrf.mxu0
    %v418 = vadd.f32 %v261, %v417
    %419 = vdwg.mxu0
    %v421 = vrot.slane %v418, 4
    %v423 = vadd.f32 %v253, %v421
    %v424 = vxor.u32 %v423, 2147483648
    %v425 = vmul.f32 %v424, 1.442695
    %v426 = vpow.pop %v425
    %v427 = vadd.f32 %v426, 1.0
    %v428 = vrcp.pop %v427
    %v429 = vmul.f32 %v427, %v428
    %v430 = vsub.f32 1.0, %v429
    %v431 = vmul.f32 %v428, %v430
    %v432 = vadd.f32 %v428, %v431
    %vm433 = vweird.f32 %v427
    %vm434 = vweird.f32 %v428
    %vm435 = vmor %vm433, %vm434
    %v436 = vsel %vm435, %v428, %v432
    %v437 = vand.u32 2147483647, %v427
    %vm438 = vcmp.eq.f32.partialorder %v437, 8.507059e+37
    %v439 = vand.u32 %v427, 2147483648
    %v440 = vor.u32 1.1754944e-38, %v439
    %v441 = vsel %vm438, %v440, %v436
    %v442 = vmul.f32 1.0, %v441
    %443 = vrot.lane.b32.xlu0 %v421, 64
    %v444 = vpop.permute.xlu0 %443
    %v446 = vmul.f32 %v442, %v444
    %448 = vrot.lane.b32.xlu0 %v446, 64
    %v449 = vpop.permute.xlu0 %448
    %v451 = vadd.f32 %v253, %v449
    %v452 = vtanh.pop %v451
    %v453 = vsub.f32 1.0, %v442
    %455 = vrot.lane.b32.xlu0 %v452, 96
    %v456 = vpop.permute.xlu0 %455
    %v458 = vmul.f32 %v453, %v456
    %v459 = vrot.slane %v393, 6
    %v461 = vmul.f32 %v442, %v459
    %v462 = vadd.f32 %v458, %v461
    %v464 = vrot.slane %v462, 4
    %465 = vrot.lane.b32.xlu0 %v464, 96
    %v466 = vpop.permute.xlu0 %465
    %v467 = vsel %vm263, %v466, 0
    %469 = vmatpush.msra.mxu0 0.0
    %470 = vmatpush.msra.mxu0 0.0
    %471 = vmatpush.msra.mxu0 0.0
    %472 = vmatpush.msra.mxu0 0.0
    %473 = vmatpush.msra.mxu0 0.0
    %474 = vmatpush.msra.mxu0 0.0
    %475 = vmatpush.msra.mxu0 0.0
    %476 = vmatpush.msra.mxu0 0.0
    %477 = vmatpush.msra.mxu0 0.0
    %478 = vmatpush.msra.mxu0 0.0
    %479 = vmatpush.msra.mxu0 0.0
    %480 = vmatpush.msra.mxu0 0.0
    %481 = vmatpush.msra.mxu0 %v258
    %482 = vmatpush.msra.mxu0 %v257
    %483 = vmatpush.msra.mxu0 %v256
    %484 = vmatpush.msra.mxu0 %v255
    %485 = vmatmul.f32.gmra.mxu0 %v467
    %v486 = vpop.f32.mrf.mxu0
    %v487 = vadd.f32 %v261, %v486
    %488 = vdwg.mxu0
    %v490 = vrot.slane %v487, 2
    %v492 = vadd.f32 %v253, %v490
    %v493 = vxor.u32 %v492, 2147483648
    %v494 = vmul.f32 %v493, 1.442695
    %v495 = vpow.pop %v494
    %v496 = vadd.f32 %v495, 1.0
    %v497 = vrcp.pop %v496
    %v498 = vmul.f32 %v496, %v497
    %v499 = vsub.f32 1.0, %v498
    %v500 = vmul.f32 %v497, %v499
    %v501 = vadd.f32 %v497, %v500
    %vm502 = vweird.f32 %v496
    %vm503 = vweird.f32 %v497
    %vm504 = vmor %vm502, %vm503
    %v505 = vsel %vm504, %v497, %v501
    %v506 = vand.u32 2147483647, %v496
    %vm507 = vcmp.eq.f32.partialorder %v506, 8.507059e+37
    %v508 = vand.u32 %v496, 2147483648
    %v509 = vor.u32 1.1754944e-38, %v508
    %v510 = vsel %vm507, %v509, %v505
    %v511 = vmul.f32 1.0, %v510
    %512 = vrot.lane.b32.xlu0 %v490, 64
    %v513 = vpop.permute.xlu0 %512
    %v515 = vmul.f32 %v511, %v513
    %517 = vrot.lane.b32.xlu0 %v515, 64
    %v518 = vpop.permute.xlu0 %517
    %v520 = vadd.f32 %v253, %v518
    %v521 = vtanh.pop %v520
    %v522 = vsub.f32 1.0, %v511
    %524 = vrot.lane.b32.xlu0 %v521, 96
    %v525 = vpop.permute.xlu0 %524
    %v527 = vmul.f32 %v522, %v525
    %v528 = vrot.slane %v462, 6
    %v530 = vmul.f32 %v511, %v528
    %v531 = vadd.f32 %v527, %v530
    %v533 = vrot.slane %v531, 6
    %534 = vrot.lane.b32.xlu0 %v533, 96
    %v535 = vpop.permute.xlu0 %534
    %v536 = vsel %vm263, %v535, 0
    %538 = vmatpush.msra.mxu0 0.0
    %539 = vmatpush.msra.mxu0 0.0
    %540 = vmatpush.msra.mxu0 0.0
    %541 = vmatpush.msra.mxu0 0.0
    %542 = vmatpush.msra.mxu0 0.0
    %543 = vmatpush.msra.mxu0 0.0
    %544 = vmatpush.msra.mxu0 0.0
    %545 = vmatpush.msra.mxu0 0.0
    %546 = vmatpush.msra.mxu0 0.0
    %547 = vmatpush.msra.mxu0 0.0
    %548 = vmatpush.msra.mxu0 0.0
    %549 = vmatpush.msra.mxu0 0.0
    %550 = vmatpush.msra.mxu0 %v258
    %551 = vmatpush.msra.mxu0 %v257
    %552 = vmatpush.msra.mxu0 %v256
    %553 = vmatpush.msra.mxu0 %v255
    %554 = vmatmul.f32.gmra.mxu0 %v536
    %v555 = vpop.f32.mrf.mxu0
    %v556 = vadd.f32 %v261, %v555
    %557 = vdwg.mxu0
    %v558 = vadd.f32 %v254, %v556
    %v559 = vxor.u32 %v558, 2147483648
    %v560 = vmul.f32 %v559, 1.442695
    %v561 = vpow.pop %v560
    %v562 = vadd.f32 %v561, 1.0
    %v563 = vrcp.pop %v562
    %v564 = vmul.f32 %v562, %v563
    %v565 = vsub.f32 1.0, %v564
    %v566 = vmul.f32 %v563, %v565
    %v567 = vadd.f32 %v563, %v566
    %vm568 = vweird.f32 %v562
    %vm569 = vweird.f32 %v563
    %vm570 = vmor %vm568, %vm569
    %v571 = vsel %vm570, %v563, %v567
    %v572 = vand.u32 2147483647, %v562
    %vm573 = vcmp.eq.f32.partialorder %v572, 8.507059e+37
    %v574 = vand.u32 %v562, 2147483648
    %v575 = vor.u32 1.1754944e-38, %v574
    %v576 = vsel %vm573, %v575, %v571
    %v577 = vmul.f32 1.0, %v576
    %579 = vrot.lane.b32.xlu0 %v556, 64
    %v580 = vpop.permute.xlu0 %579
    %v582 = vmul.f32 %v577, %v580
    %584 = vrot.lane.b32.xlu0 %v582, 64
    %v585 = vpop.permute.xlu0 %584
    %v587 = vadd.f32 %v254, %v585
    %v588 = vtanh.pop %v587
    %v589 = vsub.f32 1.0, %v577
    %591 = vrot.lane.b32.xlu0 %v588, 96
    %v592 = vpop.permute.xlu0 %591
    %v594 = vmul.f32 %v589, %v592
    %v596 = vmul.f32 %v577, %v533
    %v597 = vadd.f32 %v594, %v596
    %599 = vrot.lane.b32.xlu0 %v597, 96
    %v600 = vpop.permute.xlu0 %599
    %v601 = vsel %vm263, %v600, 0
    %603 = vmatpush.msra.mxu0 0.0
    %604 = vmatpush.msra.mxu0 0.0
    %605 = vmatpush.msra.mxu0 0.0
    %606 = vmatpush.msra.mxu0 0.0
    %607 = vmatpush.msra.mxu0 0.0
    %608 = vmatpush.msra.mxu0 0.0
    %609 = vmatpush.msra.mxu0 0.0
    %610 = vmatpush.msra.mxu0 0.0
    %611 = vmatpush.msra.mxu0 0.0
    %612 = vmatpush.msra.mxu0 0.0
    %613 = vmatpush.msra.mxu0 0.0
    %614 = vmatpush.msra.mxu0 0.0
    %615 = vmatpush.msra.mxu0 %v258
    %616 = vmatpush.msra.mxu0 %v257
    %617 = vmatpush.msra.mxu0 %v256
    %618 = vmatpush.msra.mxu0 %v255
    %619 = vmatmul.f32.gmra.mxu0 %v601
    %v620 = vpop.f32.mrf.mxu0
    %v621 = vadd.f32 %v261, %v620
    %622 = vdwg.mxu0
    %v624 = vrot.slane %v621, 6
    %v626 = vadd.f32 %v254, %v624
    %v627 = vxor.u32 %v626, 2147483648
    %v628 = vmul.f32 %v627, 1.442695
    %v629 = vpow.pop %v628
    %v630 = vadd.f32 %v629, 1.0
    %v631 = vrcp.pop %v630
    %v632 = vmul.f32 %v630, %v631
    %v633 = vsub.f32 1.0, %v632
    %v634 = vmul.f32 %v631, %v633
    %v635 = vadd.f32 %v631, %v634
    %vm636 = vweird.f32 %v630
    %vm637 = vweird.f32 %v631
    %vm638 = vmor %vm636, %vm637
    %v639 = vsel %vm638, %v631, %v635
    %v640 = vand.u32 2147483647, %v630
    %vm641 = vcmp.eq.f32.partialorder %v640, 8.507059e+37
    %v642 = vand.u32 %v630, 2147483648
    %v643 = vor.u32 1.1754944e-38, %v642
    %v644 = vsel %vm641, %v643, %v639
    %v645 = vmul.f32 1.0, %v644
    %646 = vrot.lane.b32.xlu0 %v624, 64
    %v647 = vpop.permute.xlu0 %646
    %v649 = vmul.f32 %v645, %v647
    %651 = vrot.lane.b32.xlu0 %v649, 64
    %v652 = vpop.permute.xlu0 %651
    %v654 = vadd.f32 %v254, %v652
    %v655 = vtanh.pop %v654
    %v656 = vsub.f32 1.0, %v645
    %658 = vrot.lane.b32.xlu0 %v655, 96
    %v659 = vpop.permute.xlu0 %658
    %v661 = vmul.f32 %v656, %v659
    %v662 = vrot.slane %v597, 6
    %v664 = vmul.f32 %v645, %v662
    %v665 = vadd.f32 %v661, %v664
    %v667 = vrot.slane %v665, 2
    %668 = vrot.lane.b32.xlu0 %v667, 96
    %v669 = vpop.permute.xlu0 %668
    %v670 = vsel %vm263, %v669, 0
    %672 = vmatpush.msra.mxu0 0.0
    %673 = vmatpush.msra.mxu0 0.0
    %674 = vmatpush.msra.mxu0 0.0
    %675 = vmatpush.msra.mxu0 0.0
    %676 = vmatpush.msra.mxu0 0.0
    %677 = vmatpush.msra.mxu0 0.0
    %678 = vmatpush.msra.mxu0 0.0
    %679 = vmatpush.msra.mxu0 0.0
    %680 = vmatpush.msra.mxu0 0.0
    %681 = vmatpush.msra.mxu0 0.0
    %682 = vmatpush.msra.mxu0 0.0
    %683 = vmatpush.msra.mxu0 0.0
    %684 = vmatpush.msra.mxu0 %v258
    %685 = vmatpush.msra.mxu0 %v257
    %686 = vmatpush.msra.mxu0 %v256
    %687 = vmatpush.msra.mxu0 %v255
    %688 = vmatmul.f32.gmra.mxu0 %v670
    %v689 = vpop.f32.mrf.mxu0
    %v690 = vadd.f32 %v261, %v689
    %691 = vdwg.mxu0
    %v693 = vrot.slane %v690, 4
    %v695 = vadd.f32 %v254, %v693
    %v696 = vxor.u32 %v695, 2147483648
    %v697 = vmul.f32 %v696, 1.442695
    %v698 = vpow.pop %v697
    %v699 = vadd.f32 %v698, 1.0
    %v700 = vrcp.pop %v699
    %v701 = vmul.f32 %v699, %v700
    %v702 = vsub.f32 1.0, %v701
    %v703 = vmul.f32 %v700, %v702
    %v704 = vadd.f32 %v700, %v703
    %vm705 = vweird.f32 %v699
    %vm706 = vweird.f32 %v700
    %vm707 = vmor %vm705, %vm706
    %v708 = vsel %vm707, %v700, %v704
    %v709 = vand.u32 2147483647, %v699
    %vm710 = vcmp.eq.f32.partialorder %v709, 8.507059e+37
    %v711 = vand.u32 %v699, 2147483648
    %v712 = vor.u32 1.1754944e-38, %v711
    %v713 = vsel %vm710, %v712, %v708
    %v714 = vmul.f32 1.0, %v713
    %715 = vrot.lane.b32.xlu0 %v693, 64
    %v716 = vpop.permute.xlu0 %715
    %v718 = vmul.f32 %v714, %v716
    %720 = vrot.lane.b32.xlu0 %v718, 64
    %v721 = vpop.permute.xlu0 %720
    %v723 = vadd.f32 %v254, %v721
    %v724 = vtanh.pop %v723
    %v725 = vsub.f32 1.0, %v714
    %727 = vrot.lane.b32.xlu0 %v724, 96
    %v728 = vpop.permute.xlu0 %727
    %v730 = vmul.f32 %v725, %v728
    %v731 = vrot.slane %v665, 6
    %v733 = vmul.f32 %v714, %v731
    %v734 = vadd.f32 %v730, %v733
    %v736 = vrot.slane %v734, 4
    %737 = vrot.lane.b32.xlu0 %v736, 96
    %v738 = vpop.permute.xlu0 %737
    %v739 = vsel %vm263, %v738, 0
    %741 = vmatpush.msra.mxu0 0.0
    %742 = vmatpush.msra.mxu0 0.0
    %743 = vmatpush.msra.mxu0 0.0
    %744 = vmatpush.msra.mxu0 0.0
    %745 = vmatpush.msra.mxu0 0.0
    %746 = vmatpush.msra.mxu0 0.0
    %747 = vmatpush.msra.mxu0 0.0
    %748 = vmatpush.msra.mxu0 0.0
    %749 = vmatpush.msra.mxu0 0.0
    %750 = vmatpush.msra.mxu0 0.0
    %751 = vmatpush.msra.mxu0 0.0
    %752 = vmatpush.msra.mxu0 0.0
    %753 = vmatpush.msra.mxu0 %v258
    %754 = vmatpush.msra.mxu0 %v257
    %755 = vmatpush.msra.mxu0 %v256
    %756 = vmatpush.msra.mxu0 %v255
    %757 = vmatmul.f32.gmra.mxu0 %v739
    %v758 = vpop.f32.mrf.mxu0
    %v759 = vadd.f32 %v261, %v758
    %760 = vdwg.mxu0
    %v762 = vrot.slane %v759, 2
    %v764 = vadd.f32 %v254, %v762
    %v765 = vxor.u32 %v764, 2147483648
    %v766 = vmul.f32 %v765, 1.442695
    %v767 = vpow.pop %v766
    %v768 = vadd.f32 %v767, 1.0
    %v769 = vrcp.pop %v768
    %v770 = vmul.f32 %v768, %v769
    %v771 = vsub.f32 1.0, %v770
    %v772 = vmul.f32 %v769, %v771
    %v773 = vadd.f32 %v769, %v772
    %vm774 = vweird.f32 %v768
    %vm775 = vweird.f32 %v769
    %vm776 = vmor %vm774, %vm775
    %v777 = vsel %vm776, %v769, %v773
    %v778 = vand.u32 2147483647, %v768
    %vm779 = vcmp.eq.f32.partialorder %v778, 8.507059e+37
    %v780 = vand.u32 %v768, 2147483648
    %v781 = vor.u32 1.1754944e-38, %v780
    %v782 = vsel %vm779, %v781, %v777
    %v783 = vmul.f32 1.0, %v782
    %784 = vrot.lane.b32.xlu0 %v762, 64
    %v785 = vpop.permute.xlu0 %784
    %v787 = vmul.f32 %v783, %v785
    %789 = vrot.lane.b32.xlu0 %v787, 64
    %v790 = vpop.permute.xlu0 %789
    %v792 = vadd.f32 %v254, %v790
    %v793 = vtanh.pop %v792
    %v794 = vsub.f32 1.0, %v783
    %796 = vrot.lane.b32.xlu0 %v793, 96
    %v797 = vpop.permute.xlu0 %796
    %v799 = vmul.f32 %v794, %v797
    %v800 = vrot.slane %v734, 6
    %v802 = vmul.f32 %v783, %v800
    %v803 = vadd.f32 %v799, %v802
    %805 = vrot.lane.b32.xlu0 %v803, 96
    %v806 = vpop.permute.xlu0 %805
    %vm808 = vcmask 261126
    %809 = vst.msk [vmem:[#allocation2 - $0x6] sm:$0xc0] %vm808, %v806
    // Predicated region
    $region30: #{rollout_encoder_forward.5} parent=1 // pred_check
      _
    $region31: #{rollout_encoder_forward.5} parent=1 // pred_check_branch
      %811 = sbr.rel (0) target = $region33
    $region32: #{rollout_encoder_forward.5} parent=1 // pred_region
      %813 = vsyncadd [#allocation3], 0
      %s815 = sshll.u32 [#allocation2], 4
      %s816 = int_to_ptr.vmem [resolvable:$true] %s815
      %s817 = sshll.u32 %s7, 4
      %s818 = int_to_ptr.hbm [resolvable:$true] %s817
      %820 = dma.vmem_to_hbm [thread:$0]  %s816, 32, %s818, [#allocation3]
    $region33: #{rollout_encoder_forward.5} parent=1 // pred_fallthru
      _
    // Predicated region
    $region34: #{rollout_encoder_forward.5} parent=1 // pred_check
      _
    $region35: #{rollout_encoder_forward.5} parent=1 // pred_check_branch
      %822 = sbr.rel (0) target = $region37
    $region36: #{rollout_encoder_forward.5} parent=1 // pred_region
      %824 = dma.done [#allocation3], 32
    $region37: #{rollout_encoder_forward.5} parent=1 // pred_fallthru
      _
    %825 = vsyncpa [#allocation3], 1

</llo_original>
